<compile_context>
chip_gen: v6e
topology: v6e:2x2x1
jax: 0.10.0
libtpu: 0.0.40
codegen_flags: <defaults>
</compile_context>

<pallas_src>
import functools
import math

import jax
import jax.numpy as jnp
from jax.experimental import pallas as pl
from jax.experimental.pallas import tpu as pltpu

D_MODEL = 32
NHEAD = 4
DIM_FF = 64
LN_EPS = 1e-5
NEG_INF = -1e9


# =========================== fused decoder-layer kernel ===========================

def _decoder_layer_kernel(tgt_ref, mem_ref, qpos_ref, pos_ref, sbias_ref, cbias_ref,
                          attn_w_ref, attn_b_ref, w1_ref, b1_ref, w2_ref, b2_ref, ln_ref,
                          o_ref, *, nhead, batch, d_model, has_qpos, has_pos):
    """Single invocation: tgt (T, B*D), mem (S, B*D); batch b lives in lanes [b*D,(b+1)*D)."""
    f32, bf16 = jnp.float32, jnp.bfloat16
    D = d_model
    Dh = D // nhead
    scale = 1.0 / math.sqrt(Dh)

    tgt = tgt_ref[...].astype(f32)                       # (T, B*D)
    mem = mem_ref[...].astype(f32)                       # (S, B*D)
    qpos = qpos_ref[...].astype(f32) if has_qpos else None
    pos = pos_ref[...].astype(f32) if has_pos else None
    sbias = sbias_ref[...]                               # (B, T, T) f32 additive
    cbias = cbias_ref[...]                               # (B, T, S) f32 additive

    sa_w = attn_w_ref[0]                                 # (D, 4D) bf16: [Wq|Wk|Wv|Wout]
    ca_w = attn_w_ref[1]
    sa_b = attn_b_ref[0]                                 # (1, 4D) f32: [bq|bk|bv|bout]
    ca_b = attn_b_ref[1]
    w1 = w1_ref[...]                                     # (D, F) bf16
    w2 = w2_ref[...]                                     # (F, D) bf16
    b1 = b1_ref[...]                                     # (1, F) f32
    b2 = b2_ref[...]                                     # (1, D) f32
    ln = ln_ref[...]                                     # (6, D) f32: g1,b1,g2,b2,g3,b3

    # Per-head column masks over the D feature lanes: keeps the PV matmul N=D dense
    # while staying per-head (v * mask_h zeroes the other heads' columns, so summing
    # head outputs assembles the (L, D) block with no concatenation).
    col = jax.lax.broadcasted_iota(jnp.int32, (1, D), 1)
    head_masks = [((col >= h * Dh) & (col < (h + 1) * Dh)).astype(f32)
                  for h in range(nhead)]

    def layernorm(x, g, b):
        mu = jnp.mean(x, axis=-1, keepdims=True)
        var = jnp.mean(jnp.square(x - mu), axis=-1, keepdims=True)
        return (x - mu) * jax.lax.rsqrt(var + LN_EPS) * g + b

    def mmul(x, w):
        # bf16 MXU operands, f32 accumulation.
        return jnp.dot(x.astype(bf16), w.astype(bf16), preferred_element_type=f32)

    def attend(q, k, v, bias):
        # q (Lq, D), k/v (Lk, D) f32; bias (Lq, Lk) f32 additive.
        acc = jnp.zeros((q.shape[0], D), f32)
        for h in range(nhead):                           # static unrolled head loop
            sl = slice(h * Dh, (h + 1) * Dh)
            s = jax.lax.dot_general(q[:, sl].astype(bf16), k[:, sl].astype(bf16),
                                    (((1,), (1,)), ((), ())),
                                    preferred_element_type=f32) * scale + bias
            m = jnp.max(s, axis=-1, keepdims=True)
            p = jnp.exp(s - m)
            p = p * pl.reciprocal(jnp.sum(p, axis=-1, keepdims=True), approx=True)
            acc = acc + jnp.dot(p.astype(bf16), (v * head_masks[h]).astype(bf16),
                                preferred_element_type=f32)
        return acc                                       # (Lq, D)

    for b in range(batch):                               # static unrolled batch loop
        cs = slice(b * D, (b + 1) * D)                   # this batch's lane block
        tgt_b = tgt[:, cs]
        mem_b = mem[:, cs]
        qk_in = (tgt_b + qpos[:, cs]) if has_qpos else tgt_b
        kmem = (mem_b + pos[:, cs]) if has_pos else mem_b

        # ---- self-attention + residual + norm1 (post-norm path) ----
        qk = mmul(qk_in, sa_w[:, :2 * D]) + sa_b[:, :2 * D]          # fused Q,K
        v = mmul(tgt_b, sa_w[:, 2 * D:3 * D]) + sa_b[:, 2 * D:3 * D]
        heads = attend(qk[:, :D], qk[:, D:2 * D], v, sbias[b])
        sa_out = mmul(heads, sa_w[:, 3 * D:]) + sa_b[:, 3 * D:]      # single dense out-proj
        t = layernorm(tgt_b + sa_out, ln[0:1], ln[1:2])

        # ---- cross-attention + residual + norm2 ----
        cq_in = (t + qpos[:, cs]) if has_qpos else t
        q = mmul(cq_in, ca_w[:, :D]) + ca_b[:, :D]
        k = mmul(kmem, ca_w[:, D:2 * D]) + ca_b[:, D:2 * D]
        cv = mmul(mem_b, ca_w[:, 2 * D:3 * D]) + ca_b[:, 2 * D:3 * D]
        heads = attend(q, k, cv, cbias[b])
        ca_out = mmul(heads, ca_w[:, 3 * D:]) + ca_b[:, 3 * D:]
        t = layernorm(t + ca_out, ln[2:3], ln[3:4])

        # ---- feed-forward + residual + norm3 ----
        hdn = jnp.maximum(mmul(t, w1) + b1, 0.0)
        ff = mmul(hdn, w2) + b2
        t = layernorm(t + ff, ln[4:5], ln[5:6])

        o_ref[:, cs] = t.astype(o_ref.dtype)


# =========================== wrapper ===========================

def _additive_bias(B, Lq, Lk, attn_mask, key_padding_mask):
    """Tiny (B, Lq, Lk) additive bias from torch-style masks (no per-head repeat)."""
    bias = jnp.zeros((B, Lq, Lk), jnp.float32)
    if attn_mask is not None:
        if attn_mask.dtype == jnp.bool_:
            am = jnp.where(attn_mask, NEG_INF, 0.0).astype(jnp.float32)
        else:
            am = attn_mask.astype(jnp.float32)
        bias = bias + jnp.broadcast_to(am, (Lq, Lk))[None, :, :]
    if key_padding_mask is not None:
        kpm = jnp.where(key_padding_mask, NEG_INF, 0.0).astype(jnp.float32)   # (B, Lk)
        bias = bias + kpm[:, None, :]
    return bias


def transformer_decoder_layer(params, tgt, memory, tgt_mask=None, memory_mask=None,
                              tgt_key_padding_mask=None, memory_key_padding_mask=None,
                              pos=None, query_pos=None, nhead=NHEAD):
    """Matches nn.TransformerDecoderLayer.forward_post (normalize_before=False).
    tgt: (T, B, D), memory: (S, B, D) (torch batch_first=False layout). Returns (T, B, D)."""
    T, B, D = tgt.shape
    S = memory.shape[0]
    F = params['w1'].shape[1]
    H = nhead
    Dh = D // H

    # (L, B, D) -> (L, B*D): order-preserving reshape (no transpose); batch b is the
    # contiguous lane block [b*D, (b+1)*D) inside the kernel.
    tgt2 = tgt.reshape(T, B * D)
    mem2 = memory.reshape(S, B * D)
    has_qpos = query_pos is not None
    has_pos = pos is not None
    qpos2 = query_pos.reshape(T, B * D) if has_qpos else jnp.zeros((1, 1), tgt.dtype)
    pos2 = pos.reshape(S, B * D) if has_pos else jnp.zeros((1, 1), tgt.dtype)

    sbias = _additive_bias(B, T, T, tgt_mask, tgt_key_padding_mask)
    cbias = _additive_bias(B, T, S, memory_mask, memory_key_padding_mask)

    args = (tgt2, mem2, qpos2, pos2, sbias, cbias,
            params['attn_w'], params['attn_b'],
            params['w1'], params['b1'], params['w2'], params['b2'], params['ln'])

    # Advisory cost estimate (helps XLA schedule around a very short custom call).
    sa_fl = 2 * T * D * 2 * D + 2 * T * D * D + H * 2 * T * T * Dh + H * 2 * T * T * D + 2 * T * D * D
    ca_fl = 2 * T * D * D + 2 * S * D * D * 2 + H * 2 * T * S * Dh + H * 2 * T * S * D + 2 * T * D * D
    ff_fl = 4 * T * D * F
    flops = B * (sa_fl + ca_fl + ff_fl)
    transcendentals = B * H * (T * T + T * S)
    bytes_accessed = (sum(int(a.size) * a.dtype.itemsize for a in args)
                      + T * B * D * tgt.dtype.itemsize)
    cost = pl.CostEstimate(flops=flops, transcendentals=transcendentals,
                           bytes_accessed=bytes_accessed)

    out2 = pl.pallas_call(
        functools.partial(_decoder_layer_kernel, nhead=H, batch=B, d_model=D,
                          has_qpos=has_qpos, has_pos=has_pos),
        out_shape=jax.ShapeDtypeStruct((T, B * D), tgt.dtype),
        cost_estimate=cost,
    )(*args)
    return out2.reshape(T, B, D)


# =========================== parameters (packed / pre-transposed at init) ===========================

def init_params(key, d_model=D_MODEL, nhead=NHEAD, dim_ff=DIM_FF):
    ks = iter(jax.random.split(key, 24))

    def w(shape, scale=0.02):
        return jax.random.normal(next(ks), shape, jnp.float32) * scale

    def attn_pack():
        # Packed, pre-transposed layout so the kernel computes x @ W directly:
        #   columns [0:D]=W_q, [D:2D]=W_k, [2D:3D]=W_v, [3D:4D]=W_out  (each torch W.T)
        W = jnp.concatenate([w((d_model, d_model)) for _ in range(4)], axis=1)   # (D, 4D)
        b = jnp.concatenate([w((1, d_model)) for _ in range(4)], axis=1)         # (1, 4D)
        return W, b

    sa_w, sa_b = attn_pack()
    ca_w, ca_b = attn_pack()
    ln = jnp.concatenate(
        [jnp.ones((1, d_model), jnp.float32), jnp.zeros((1, d_model), jnp.float32)] * 3,
        axis=0)                                                                   # (6, D)
    return {
        'attn_w': jnp.stack([sa_w, ca_w]).astype(jnp.bfloat16),    # (2, D, 4D) bf16 MXU operands
        'attn_b': jnp.stack([sa_b, ca_b]),                         # (2, 1, 4D) f32
        'w1': w((d_model, dim_ff)).astype(jnp.bfloat16),           # linear1 (pre-T)
        'b1': w((1, dim_ff)),
        'w2': w((dim_ff, d_model)).astype(jnp.bfloat16),           # linear2 (pre-T)
        'b2': w((1, d_model)),
        'ln': ln,                                                  # g1,b1,g2,b2,g3,b3 rows
    }


# =========================== pure-JAX reference (for validation) ===========================

def reference_decoder_layer(p, tgt, memory, tgt_mask=None, memory_mask=None,
                            tgt_key_padding_mask=None, memory_key_padding_mask=None,
                            pos=None, query_pos=None, nhead=NHEAD):
    T, B, D = tgt.shape
    S = memory.shape[0]
    Dh = D // nhead
    f32 = jnp.float32
    tgt_b = jnp.transpose(tgt, (1, 0, 2)).astype(f32)
    mem_b = jnp.transpose(memory, (1, 0, 2)).astype(f32)
    qpos_b = jnp.zeros_like(tgt_b) if query_pos is None else jnp.transpose(query_pos, (1, 0, 2)).astype(f32)
    pos_b = jnp.zeros_like(mem_b) if pos is None else jnp.transpose(pos, (1, 0, 2)).astype(f32)
    sbias = _additive_bias(B, T, T, tgt_mask, tgt_key_padding_mask)
    cbias = _additive_bias(B, T, S, memory_mask, memory_key_padding_mask)

    def unpack(i):
        W = p['attn_w'][i].astype(f32)
        bb = p['attn_b'][i].astype(f32)
        return (W[:, :D], W[:, D:2 * D], W[:, 2 * D:3 * D], W[:, 3 * D:],
                bb[:, :D], bb[:, D:2 * D], bb[:, 2 * D:3 * D], bb[:, 3 * D:])

    def mha(q_in, k_in, v_in, i, bias):
        Wq, Wk, Wv, Wo, bq, bk, bv, bo = unpack(i)
        Lq, Lk = q_in.shape[1], k_in.shape[1]
        q = (q_in @ Wq + bq).reshape(B, Lq, nhead, Dh).transpose(0, 2, 1, 3)
        k = (k_in @ Wk + bk).reshape(B, Lk, nhead, Dh).transpose(0, 2, 1, 3)
        v = (v_in @ Wv + bv).reshape(B, Lk, nhead, Dh).transpose(0, 2, 1, 3)
        s = jnp.einsum('bhqd,bhkd->bhqk', q, k) / math.sqrt(Dh) + bias[:, None]
        a = jax.nn.softmax(s, axis=-1)
        o = jnp.einsum('bhqk,bhkd->bhqd', a, v).transpose(0, 2, 1, 3).reshape(B, Lq, D)
        return o @ Wo + bo

    def lnorm(x, g, b):
        mu = x.mean(-1, keepdims=True)
        var = ((x - mu) ** 2).mean(-1, keepdims=True)
        return (x - mu) * jax.lax.rsqrt(var + LN_EPS) * g + b

    g = p['ln'].astype(f32)
    sa = mha(tgt_b + qpos_b, tgt_b + qpos_b, tgt_b, 0, sbias)
    t = lnorm(tgt_b + sa, g[0:1], g[1:2])
    ca = mha(t + qpos_b, mem_b + pos_b, mem_b, 1, cbias)
    t = lnorm(t + ca, g[2:3], g[3:4])
    ff = jnp.maximum(t @ p['w1'].astype(f32) + p['b1'], 0.0) @ p['w2'].astype(f32) + p['b2']
    t = lnorm(t + ff, g[4:5], g[5:6])
    return jnp.transpose(t, (1, 0, 2))


# =========================== main ===========================

if __name__ == "__main__":
    key = jax.random.PRNGKey(0)
    kp, kt, km, kpo, kq = jax.random.split(key, 5)
    params = init_params(kp)

    B, T, S = 2, 8, 16           # batch=2, decoder seq=8, memory (e.g. 4x4 feature map)=16
    tgt = jax.random.normal(kt, (T, B, D_MODEL), jnp.float32)
    memory = jax.random.normal(km, (S, B, D_MODEL), jnp.float32)
    pos = jax.random.normal(kpo, (S, B, D_MODEL), jnp.float32)
    query_pos = jax.random.normal(kq, (T, B, D_MODEL), jnp.float32)
    tgt_mask = jnp.triu(jnp.ones((T, T), bool), k=1)                        # causal self-attn mask
    memory_key_padding_mask = jnp.zeros((B, S), bool).at[1, -4:].set(True)  # pad tail of batch 1

    fwd = jax.jit(transformer_decoder_layer)
    out = fwd(params, tgt, memory, tgt_mask=tgt_mask,
              memory_key_padding_mask=memory_key_padding_mask,
              pos=pos, query_pos=query_pos)
    out = jax.block_until_ready(out)

    assert out.shape == (T, B, D_MODEL), out.shape
    assert bool(jnp.all(jnp.isfinite(out)))

    ref = reference_decoder_layer(params, tgt, memory, tgt_mask=tgt_mask,
                                  memory_key_padding_mask=memory_key_padding_mask,
                                  pos=pos, query_pos=query_pos)
    err = float(jnp.max(jnp.abs(out - ref)))
    assert err < 2e-2, f"max abs error vs reference: {err}"

    print("KERNEL_OK")
</pallas_src>

<mosaic_0001>
module attributes {stable_mosaic.version = 11 : i64} {
  func.func @_decoder_layer_kernel(%arg0: memref<8x64xf32, #tpu.memory_space<vmem>>, %arg1: memref<16x64xf32, #tpu.memory_space<vmem>>, %arg2: memref<8x64xf32, #tpu.memory_space<vmem>>, %arg3: memref<16x64xf32, #tpu.memory_space<vmem>>, %arg4: memref<2x8x8xf32, #tpu.memory_space<vmem>>, %arg5: memref<2x8x16xf32, #tpu.memory_space<vmem>>, %arg6: memref<2x32x128xbf16, #tpu.memory_space<vmem>>, %arg7: memref<2x1x128xf32, #tpu.memory_space<vmem>>, %arg8: memref<32x64xbf16, #tpu.memory_space<vmem>>, %arg9: memref<1x64xf32, #tpu.memory_space<vmem>>, %arg10: memref<64x32xbf16, #tpu.memory_space<vmem>>, %arg11: memref<1x32xf32, #tpu.memory_space<vmem>>, %arg12: memref<6x32xf32, #tpu.memory_space<vmem>>, %arg13: memref<8x64xf32, #tpu.memory_space<vmem>>) attributes {dimension_semantics = [], scalar_prefetch = 0 : i64, scratch_operands = 0 : i64, tpu.core_type = #tpu.core_type<tc>} {
    %c0 = arith.constant 0 : index
    %c0_0 = arith.constant 0 : index
    %0 = vector.load %arg0[%c0, %c0_0] : memref<8x64xf32, #tpu.memory_space<vmem>>, vector<8x64xf32>
    %c0_1 = arith.constant 0 : index
    %c0_2 = arith.constant 0 : index
    %1 = vector.load %arg1[%c0_1, %c0_2] : memref<16x64xf32, #tpu.memory_space<vmem>>, vector<16x64xf32>
    %c0_3 = arith.constant 0 : index
    %c0_4 = arith.constant 0 : index
    %2 = vector.load %arg2[%c0_3, %c0_4] : memref<8x64xf32, #tpu.memory_space<vmem>>, vector<8x64xf32>
    %c0_5 = arith.constant 0 : index
    %c0_6 = arith.constant 0 : index
    %3 = vector.load %arg3[%c0_5, %c0_6] : memref<16x64xf32, #tpu.memory_space<vmem>>, vector<16x64xf32>
    %c0_7 = arith.constant 0 : index
    %c0_8 = arith.constant 0 : index
    %c0_9 = arith.constant 0 : index
    %4 = vector.load %arg4[%c0_7, %c0_8, %c0_9] : memref<2x8x8xf32, #tpu.memory_space<vmem>>, vector<2x8x8xf32>
    %c0_10 = arith.constant 0 : index
    %c0_11 = arith.constant 0 : index
    %c0_12 = arith.constant 0 : index
    %5 = vector.load %arg5[%c0_10, %c0_11, %c0_12] : memref<2x8x16xf32, #tpu.memory_space<vmem>>, vector<2x8x16xf32>
    %c0_13 = arith.constant 0 : index
    %c0_14 = arith.constant 0 : index
    %c0_15 = arith.constant 0 : index
    %6 = vector.load %arg6[%c0_13, %c0_14, %c0_15] : memref<2x32x128xbf16, #tpu.memory_space<vmem>>, vector<1x32x128xbf16>
    %7 = vector.shape_cast %6 : vector<1x32x128xbf16> to vector<32x128xbf16>
    %c1 = arith.constant 1 : index
    %c0_16 = arith.constant 0 : index
    %c0_17 = arith.constant 0 : index
    %8 = vector.load %arg6[%c1, %c0_16, %c0_17] : memref<2x32x128xbf16, #tpu.memory_space<vmem>>, vector<1x32x128xbf16>
    %9 = vector.shape_cast %8 : vector<1x32x128xbf16> to vector<32x128xbf16>
    %c0_18 = arith.constant 0 : index
    %c0_19 = arith.constant 0 : index
    %c0_20 = arith.constant 0 : index
    %10 = vector.load %arg7[%c0_18, %c0_19, %c0_20] : memref<2x1x128xf32, #tpu.memory_space<vmem>>, vector<1x1x128xf32>
    %11 = vector.shape_cast %10 : vector<1x1x128xf32> to vector<1x128xf32>
    %c1_21 = arith.constant 1 : index
    %c0_22 = arith.constant 0 : index
    %c0_23 = arith.constant 0 : index
    %12 = vector.load %arg7[%c1_21, %c0_22, %c0_23] : memref<2x1x128xf32, #tpu.memory_space<vmem>>, vector<1x1x128xf32>
    %13 = vector.shape_cast %12 : vector<1x1x128xf32> to vector<1x128xf32>
    %c0_24 = arith.constant 0 : index
    %c0_25 = arith.constant 0 : index
    %14 = vector.load %arg8[%c0_24, %c0_25] : memref<32x64xbf16, #tpu.memory_space<vmem>>, vector<32x64xbf16>
    %c0_26 = arith.constant 0 : index
    %c0_27 = arith.constant 0 : index
    %15 = vector.load %arg10[%c0_26, %c0_27] : memref<64x32xbf16, #tpu.memory_space<vmem>>, vector<64x32xbf16>
    %c0_28 = arith.constant 0 : index
    %c0_29 = arith.constant 0 : index
    %16 = vector.load %arg9[%c0_28, %c0_29] : memref<1x64xf32, #tpu.memory_space<vmem>>, vector<1x64xf32>
    %c0_30 = arith.constant 0 : index
    %c0_31 = arith.constant 0 : index
    %17 = vector.load %arg11[%c0_30, %c0_31] : memref<1x32xf32, #tpu.memory_space<vmem>>, vector<1x32xf32>
    %c0_32 = arith.constant 0 : index
    %c0_33 = arith.constant 0 : index
    %18 = vector.load %arg12[%c0_32, %c0_33] : memref<6x32xf32, #tpu.memory_space<vmem>>, vector<6x32xf32>
    %19 = tpu.iota {dimensions = array<i32: 1>} : vector<1x32xi32>
    %c0_i32 = arith.constant 0 : i32
    %20 = vector.broadcast %c0_i32 : i32 to vector<1x32xi32>
    %21 = arith.cmpi sge, %19, %20 : vector<1x32xi32>
    %c8_i32 = arith.constant 8 : i32
    %22 = vector.broadcast %c8_i32 : i32 to vector<1x32xi32>
    %23 = arith.cmpi slt, %19, %22 : vector<1x32xi32>
    %24 = arith.andi %21, %23 : vector<1x32xi1>
    %25 = arith.extui %24 : vector<1x32xi1> to vector<1x32xi32>
    %26 = arith.sitofp %25 : vector<1x32xi32> to vector<1x32xf32>
    %c8_i32_34 = arith.constant 8 : i32
    %27 = vector.broadcast %c8_i32_34 : i32 to vector<1x32xi32>
    %28 = arith.cmpi sge, %19, %27 : vector<1x32xi32>
    %c16_i32 = arith.constant 16 : i32
    %29 = vector.broadcast %c16_i32 : i32 to vector<1x32xi32>
    %30 = arith.cmpi slt, %19, %29 : vector<1x32xi32>
    %31 = arith.andi %28, %30 : vector<1x32xi1>
    %32 = arith.extui %31 : vector<1x32xi1> to vector<1x32xi32>
    %33 = arith.sitofp %32 : vector<1x32xi32> to vector<1x32xf32>
    %c16_i32_35 = arith.constant 16 : i32
    %34 = vector.broadcast %c16_i32_35 : i32 to vector<1x32xi32>
    %35 = arith.cmpi sge, %19, %34 : vector<1x32xi32>
    %c24_i32 = arith.constant 24 : i32
    %36 = vector.broadcast %c24_i32 : i32 to vector<1x32xi32>
    %37 = arith.cmpi slt, %19, %36 : vector<1x32xi32>
    %38 = arith.andi %35, %37 : vector<1x32xi1>
    %39 = arith.extui %38 : vector<1x32xi1> to vector<1x32xi32>
    %40 = arith.sitofp %39 : vector<1x32xi32> to vector<1x32xf32>
    %c24_i32_36 = arith.constant 24 : i32
    %41 = vector.broadcast %c24_i32_36 : i32 to vector<1x32xi32>
    %42 = arith.cmpi sge, %19, %41 : vector<1x32xi32>
    %c32_i32 = arith.constant 32 : i32
    %43 = vector.broadcast %c32_i32 : i32 to vector<1x32xi32>
    %44 = arith.cmpi slt, %19, %43 : vector<1x32xi32>
    %45 = arith.andi %42, %44 : vector<1x32xi1>
    %46 = arith.extui %45 : vector<1x32xi1> to vector<1x32xi32>
    %47 = arith.sitofp %46 : vector<1x32xi32> to vector<1x32xf32>
    %48 = vector.extract_strided_slice %0 {offsets = [0, 0], sizes = [8, 32], strides = [1, 1]} : vector<8x64xf32> to vector<8x32xf32>
    %49 = vector.extract_strided_slice %1 {offsets = [0, 0], sizes = [16, 32], strides = [1, 1]} : vector<16x64xf32> to vector<16x32xf32>
    %50 = vector.extract_strided_slice %2 {offsets = [0, 0], sizes = [8, 32], strides = [1, 1]} : vector<8x64xf32> to vector<8x32xf32>
    %51 = arith.addf %48, %50 : vector<8x32xf32>
    %52 = vector.extract_strided_slice %3 {offsets = [0, 0], sizes = [16, 32], strides = [1, 1]} : vector<16x64xf32> to vector<16x32xf32>
    %53 = arith.addf %49, %52 : vector<16x32xf32>
    %54 = vector.extract_strided_slice %7 {offsets = [0, 0], sizes = [32, 64], strides = [1, 1]} : vector<32x128xbf16> to vector<32x64xbf16>
    %55 = arith.truncf %51 : vector<8x32xf32> to vector<8x32xbf16>
    %cst = arith.constant dense<0.000000e+00> : vector<8x64xf32>
    %56 = tpu.matmul %55, %54, %cst {dimension_numbers = #tpu.dot_dimension_numbers<[1], [0], [0], [1], [0, 0, 1, 1], [], []>} : vector<8x32xbf16>, vector<32x64xbf16>, vector<8x64xf32> -> vector<8x64xf32>
    %57 = vector.extract_strided_slice %11 {offsets = [0, 0], sizes = [1, 64], strides = [1, 1]} : vector<1x128xf32> to vector<1x64xf32>
    %58 = vector.broadcast %57 : vector<1x64xf32> to vector<8x64xf32>
    %59 = arith.addf %56, %58 : vector<8x64xf32>
    %60 = vector.extract_strided_slice %7 {offsets = [0, 64], sizes = [32, 32], strides = [1, 1]} : vector<32x128xbf16> to vector<32x32xbf16>
    %61 = arith.truncf %48 : vector<8x32xf32> to vector<8x32xbf16>
    %cst_37 = arith.constant dense<0.000000e+00> : vector<8x32xf32>
    %62 = tpu.matmul %61, %60, %cst_37 {dimension_numbers = #tpu.dot_dimension_numbers<[1], [0], [0], [1], [0, 0, 1, 1], [], []>} : vector<8x32xbf16>, vector<32x32xbf16>, vector<8x32xf32> -> vector<8x32xf32>
    %63 = vector.extract_strided_slice %11 {offsets = [0, 64], sizes = [1, 32], strides = [1, 1]} : vector<1x128xf32> to vector<1x32xf32>
    %64 = vector.broadcast %63 : vector<1x32xf32> to vector<8x32xf32>
    %65 = arith.addf %62, %64 : vector<8x32xf32>
    %66 = vector.extract_strided_slice %59 {offsets = [0, 0], sizes = [8, 32], strides = [1, 1]} : vector<8x64xf32> to vector<8x32xf32>
    %67 = vector.extract_strided_slice %59 {offsets = [0, 32], sizes = [8, 32], strides = [1, 1]} : vector<8x64xf32> to vector<8x32xf32>
    %68 = vector.extract_strided_slice %4 {offsets = [0, 0, 0], sizes = [1, 8, 8], strides = [1, 1, 1]} : vector<2x8x8xf32> to vector<1x8x8xf32>
    %69 = vector.shape_cast %68 : vector<1x8x8xf32> to vector<8x8xf32>
    %cst_38 = arith.constant 0.000000e+00 : f32
    %70 = vector.broadcast %cst_38 : f32 to vector<8x32xf32>
    %71 = vector.extract_strided_slice %66 {offsets = [0, 0], sizes = [8, 8], strides = [1, 1]} : vector<8x32xf32> to vector<8x8xf32>
    %72 = arith.truncf %71 : vector<8x8xf32> to vector<8x8xbf16>
    %73 = vector.extract_strided_slice %67 {offsets = [0, 0], sizes = [8, 8], strides = [1, 1]} : vector<8x32xf32> to vector<8x8xf32>
    %74 = arith.truncf %73 : vector<8x8xf32> to vector<8x8xbf16>
    %cst_39 = arith.constant dense<0.000000e+00> : vector<8x8xf32>
    %75 = tpu.matmul %72, %74, %cst_39 {dimension_numbers = #tpu.dot_dimension_numbers<[1], [1], [0], [0], [0, 0, 1, 0], [], []>} : vector<8x8xbf16>, vector<8x8xbf16>, vector<8x8xf32> -> vector<8x8xf32>
    %cst_40 = arith.constant 0.353553385 : f32
    %76 = vector.broadcast %cst_40 : f32 to vector<8x8xf32>
    %77 = arith.mulf %75, %76 : vector<8x8xf32>
    %78 = arith.addf %77, %69 : vector<8x8xf32>
    %cst_41 = arith.constant dense<0xFF800000> : vector<8xf32>
    %79 = vector.multi_reduction <maximumf>, %78, %cst_41 [1] : vector<8x8xf32> to vector<8xf32>
    %80 = vector.shape_cast %79 : vector<8xf32> to vector<8x1xf32>
    %81 = vector.broadcast %80 : vector<8x1xf32> to vector<8x8xf32>
    %82 = arith.subf %78, %81 : vector<8x8xf32>
    %83 = math.exp %82 : vector<8x8xf32>
    %cst_42 = arith.constant dense<0.000000e+00> : vector<8xf32>
    %84 = vector.multi_reduction <add>, %83, %cst_42 [1] : vector<8x8xf32> to vector<8xf32>
    %85 = vector.shape_cast %84 : vector<8xf32> to vector<8x1xf32>
    %86 = tpu.reciprocal %85 {approx = true} : vector<8x1xf32> -> vector<8x1xf32>
    %87 = vector.broadcast %86 : vector<8x1xf32> to vector<8x8xf32>
    %88 = arith.mulf %83, %87 : vector<8x8xf32>
    %89 = arith.truncf %88 : vector<8x8xf32> to vector<8x8xbf16>
    %90 = vector.broadcast %26 : vector<1x32xf32> to vector<8x32xf32>
    %91 = arith.mulf %65, %90 : vector<8x32xf32>
    %92 = arith.truncf %91 : vector<8x32xf32> to vector<8x32xbf16>
    %cst_43 = arith.constant dense<0.000000e+00> : vector<8x32xf32>
    %93 = tpu.matmul %89, %92, %cst_43 {dimension_numbers = #tpu.dot_dimension_numbers<[1], [0], [0], [1], [0, 0, 1, 1], [], []>} : vector<8x8xbf16>, vector<8x32xbf16>, vector<8x32xf32> -> vector<8x32xf32>
    %94 = arith.addf %70, %93 : vector<8x32xf32>
    %95 = vector.extract_strided_slice %66 {offsets = [0, 8], sizes = [8, 8], strides = [1, 1]} : vector<8x32xf32> to vector<8x8xf32>
    %96 = arith.truncf %95 : vector<8x8xf32> to vector<8x8xbf16>
    %97 = vector.extract_strided_slice %67 {offsets = [0, 8], sizes = [8, 8], strides = [1, 1]} : vector<8x32xf32> to vector<8x8xf32>
    %98 = arith.truncf %97 : vector<8x8xf32> to vector<8x8xbf16>
    %cst_44 = arith.constant dense<0.000000e+00> : vector<8x8xf32>
    %99 = tpu.matmul %96, %98, %cst_44 {dimension_numbers = #tpu.dot_dimension_numbers<[1], [1], [0], [0], [0, 0, 1, 0], [], []>} : vector<8x8xbf16>, vector<8x8xbf16>, vector<8x8xf32> -> vector<8x8xf32>
    %cst_45 = arith.constant 0.353553385 : f32
    %100 = vector.broadcast %cst_45 : f32 to vector<8x8xf32>
    %101 = arith.mulf %99, %100 : vector<8x8xf32>
    %102 = arith.addf %101, %69 : vector<8x8xf32>
    %cst_46 = arith.constant dense<0xFF800000> : vector<8xf32>
    %103 = vector.multi_reduction <maximumf>, %102, %cst_46 [1] : vector<8x8xf32> to vector<8xf32>
    %104 = vector.shape_cast %103 : vector<8xf32> to vector<8x1xf32>
    %105 = vector.broadcast %104 : vector<8x1xf32> to vector<8x8xf32>
    %106 = arith.subf %102, %105 : vector<8x8xf32>
    %107 = math.exp %106 : vector<8x8xf32>
    %cst_47 = arith.constant dense<0.000000e+00> : vector<8xf32>
    %108 = vector.multi_reduction <add>, %107, %cst_47 [1] : vector<8x8xf32> to vector<8xf32>
    %109 = vector.shape_cast %108 : vector<8xf32> to vector<8x1xf32>
    %110 = tpu.reciprocal %109 {approx = true} : vector<8x1xf32> -> vector<8x1xf32>
    %111 = vector.broadcast %110 : vector<8x1xf32> to vector<8x8xf32>
    %112 = arith.mulf %107, %111 : vector<8x8xf32>
    %113 = arith.truncf %112 : vector<8x8xf32> to vector<8x8xbf16>
    %114 = vector.broadcast %33 : vector<1x32xf32> to vector<8x32xf32>
    %115 = arith.mulf %65, %114 : vector<8x32xf32>
    %116 = arith.truncf %115 : vector<8x32xf32> to vector<8x32xbf16>
    %cst_48 = arith.constant dense<0.000000e+00> : vector<8x32xf32>
    %117 = tpu.matmul %113, %116, %cst_48 {dimension_numbers = #tpu.dot_dimension_numbers<[1], [0], [0], [1], [0, 0, 1, 1], [], []>} : vector<8x8xbf16>, vector<8x32xbf16>, vector<8x32xf32> -> vector<8x32xf32>
    %118 = arith.addf %94, %117 : vector<8x32xf32>
    %119 = vector.extract_strided_slice %66 {offsets = [0, 16], sizes = [8, 8], strides = [1, 1]} : vector<8x32xf32> to vector<8x8xf32>
    %120 = arith.truncf %119 : vector<8x8xf32> to vector<8x8xbf16>
    %121 = vector.extract_strided_slice %67 {offsets = [0, 16], sizes = [8, 8], strides = [1, 1]} : vector<8x32xf32> to vector<8x8xf32>
    %122 = arith.truncf %121 : vector<8x8xf32> to vector<8x8xbf16>
    %cst_49 = arith.constant dense<0.000000e+00> : vector<8x8xf32>
    %123 = tpu.matmul %120, %122, %cst_49 {dimension_numbers = #tpu.dot_dimension_numbers<[1], [1], [0], [0], [0, 0, 1, 0], [], []>} : vector<8x8xbf16>, vector<8x8xbf16>, vector<8x8xf32> -> vector<8x8xf32>
    %cst_50 = arith.constant 0.353553385 : f32
    %124 = vector.broadcast %cst_50 : f32 to vector<8x8xf32>
    %125 = arith.mulf %123, %124 : vector<8x8xf32>
    %126 = arith.addf %125, %69 : vector<8x8xf32>
    %cst_51 = arith.constant dense<0xFF800000> : vector<8xf32>
    %127 = vector.multi_reduction <maximumf>, %126, %cst_51 [1] : vector<8x8xf32> to vector<8xf32>
    %128 = vector.shape_cast %127 : vector<8xf32> to vector<8x1xf32>
    %129 = vector.broadcast %128 : vector<8x1xf32> to vector<8x8xf32>
    %130 = arith.subf %126, %129 : vector<8x8xf32>
    %131 = math.exp %130 : vector<8x8xf32>
    %cst_52 = arith.constant dense<0.000000e+00> : vector<8xf32>
    %132 = vector.multi_reduction <add>, %131, %cst_52 [1] : vector<8x8xf32> to vector<8xf32>
    %133 = vector.shape_cast %132 : vector<8xf32> to vector<8x1xf32>
    %134 = tpu.reciprocal %133 {approx = true} : vector<8x1xf32> -> vector<8x1xf32>
    %135 = vector.broadcast %134 : vector<8x1xf32> to vector<8x8xf32>
    %136 = arith.mulf %131, %135 : vector<8x8xf32>
    %137 = arith.truncf %136 : vector<8x8xf32> to vector<8x8xbf16>
    %138 = vector.broadcast %40 : vector<1x32xf32> to vector<8x32xf32>
    %139 = arith.mulf %65, %138 : vector<8x32xf32>
    %140 = arith.truncf %139 : vector<8x32xf32> to vector<8x32xbf16>
    %cst_53 = arith.constant dense<0.000000e+00> : vector<8x32xf32>
    %141 = tpu.matmul %137, %140, %cst_53 {dimension_numbers = #tpu.dot_dimension_numbers<[1], [0], [0], [1], [0, 0, 1, 1], [], []>} : vector<8x8xbf16>, vector<8x32xbf16>, vector<8x32xf32> -> vector<8x32xf32>
    %142 = arith.addf %118, %141 : vector<8x32xf32>
    %143 = vector.extract_strided_slice %66 {offsets = [0, 24], sizes = [8, 8], strides = [1, 1]} : vector<8x32xf32> to vector<8x8xf32>
    %144 = arith.truncf %143 : vector<8x8xf32> to vector<8x8xbf16>
    %145 = vector.extract_strided_slice %67 {offsets = [0, 24], sizes = [8, 8], strides = [1, 1]} : vector<8x32xf32> to vector<8x8xf32>
    %146 = arith.truncf %145 : vector<8x8xf32> to vector<8x8xbf16>
    %cst_54 = arith.constant dense<0.000000e+00> : vector<8x8xf32>
    %147 = tpu.matmul %144, %146, %cst_54 {dimension_numbers = #tpu.dot_dimension_numbers<[1], [1], [0], [0], [0, 0, 1, 0], [], []>} : vector<8x8xbf16>, vector<8x8xbf16>, vector<8x8xf32> -> vector<8x8xf32>
    %cst_55 = arith.constant 0.353553385 : f32
    %148 = vector.broadcast %cst_55 : f32 to vector<8x8xf32>
    %149 = arith.mulf %147, %148 : vector<8x8xf32>
    %150 = arith.addf %149, %69 : vector<8x8xf32>
    %cst_56 = arith.constant dense<0xFF800000> : vector<8xf32>
    %151 = vector.multi_reduction <maximumf>, %150, %cst_56 [1] : vector<8x8xf32> to vector<8xf32>
    %152 = vector.shape_cast %151 : vector<8xf32> to vector<8x1xf32>
    %153 = vector.broadcast %152 : vector<8x1xf32> to vector<8x8xf32>
    %154 = arith.subf %150, %153 : vector<8x8xf32>
    %155 = math.exp %154 : vector<8x8xf32>
    %cst_57 = arith.constant dense<0.000000e+00> : vector<8xf32>
    %156 = vector.multi_reduction <add>, %155, %cst_57 [1] : vector<8x8xf32> to vector<8xf32>
    %157 = vector.shape_cast %156 : vector<8xf32> to vector<8x1xf32>
    %158 = tpu.reciprocal %157 {approx = true} : vector<8x1xf32> -> vector<8x1xf32>
    %159 = vector.broadcast %158 : vector<8x1xf32> to vector<8x8xf32>
    %160 = arith.mulf %155, %159 : vector<8x8xf32>
    %161 = arith.truncf %160 : vector<8x8xf32> to vector<8x8xbf16>
    %162 = vector.broadcast %47 : vector<1x32xf32> to vector<8x32xf32>
    %163 = arith.mulf %65, %162 : vector<8x32xf32>
    %164 = arith.truncf %163 : vector<8x32xf32> to vector<8x32xbf16>
    %cst_58 = arith.constant dense<0.000000e+00> : vector<8x32xf32>
    %165 = tpu.matmul %161, %164, %cst_58 {dimension_numbers = #tpu.dot_dimension_numbers<[1], [0], [0], [1], [0, 0, 1, 1], [], []>} : vector<8x8xbf16>, vector<8x32xbf16>, vector<8x32xf32> -> vector<8x32xf32>
    %166 = arith.addf %142, %165 : vector<8x32xf32>
    %167 = vector.extract_strided_slice %7 {offsets = [0, 96], sizes = [32, 32], strides = [1, 1]} : vector<32x128xbf16> to vector<32x32xbf16>
    %168 = arith.truncf %166 : vector<8x32xf32> to vector<8x32xbf16>
    %cst_59 = arith.constant dense<0.000000e+00> : vector<8x32xf32>
    %169 = tpu.matmul %168, %167, %cst_59 {dimension_numbers = #tpu.dot_dimension_numbers<[1], [0], [0], [1], [0, 0, 1, 1], [], []>} : vector<8x32xbf16>, vector<32x32xbf16>, vector<8x32xf32> -> vector<8x32xf32>
    %170 = vector.extract_strided_slice %11 {offsets = [0, 96], sizes = [1, 32], strides = [1, 1]} : vector<1x128xf32> to vector<1x32xf32>
    %171 = vector.broadcast %170 : vector<1x32xf32> to vector<8x32xf32>
    %172 = arith.addf %169, %171 : vector<8x32xf32>
    %173 = arith.addf %48, %172 : vector<8x32xf32>
    %174 = vector.extract_strided_slice %18 {offsets = [0, 0], sizes = [1, 32], strides = [1, 1]} : vector<6x32xf32> to vector<1x32xf32>
    %175 = vector.extract_strided_slice %18 {offsets = [1, 0], sizes = [1, 32], strides = [1, 1]} : vector<6x32xf32> to vector<1x32xf32>
    %cst_60 = arith.constant dense<0.000000e+00> : vector<8xf32>
    %176 = vector.multi_reduction <add>, %173, %cst_60 [1] : vector<8x32xf32> to vector<8xf32>
    %177 = vector.shape_cast %176 : vector<8xf32> to vector<8x1xf32>
    %cst_61 = arith.constant 3.200000e+01 : f32
    %178 = vector.broadcast %cst_61 : f32 to vector<8x1xf32>
    %179 = arith.divf %177, %178 : vector<8x1xf32>
    %180 = vector.broadcast %179 : vector<8x1xf32> to vector<8x32xf32>
    %181 = arith.subf %173, %180 : vector<8x32xf32>
    %182 = arith.mulf %181, %181 : vector<8x32xf32>
    %cst_62 = arith.constant dense<0.000000e+00> : vector<8xf32>
    %183 = vector.multi_reduction <add>, %182, %cst_62 [1] : vector<8x32xf32> to vector<8xf32>
    %184 = vector.shape_cast %183 : vector<8xf32> to vector<8x1xf32>
    %cst_63 = arith.constant 3.200000e+01 : f32
    %185 = vector.broadcast %cst_63 : f32 to vector<8x1xf32>
    %186 = arith.divf %184, %185 : vector<8x1xf32>
    %187 = vector.broadcast %179 : vector<8x1xf32> to vector<8x32xf32>
    %188 = arith.subf %173, %187 : vector<8x32xf32>
    %cst_64 = arith.constant 9.99999974E-6 : f32
    %189 = vector.broadcast %cst_64 : f32 to vector<8x1xf32>
    %190 = arith.addf %186, %189 : vector<8x1xf32>
    %191 = math.rsqrt %190 : vector<8x1xf32>
    %192 = vector.broadcast %191 : vector<8x1xf32> to vector<8x32xf32>
    %193 = arith.mulf %188, %192 : vector<8x32xf32>
    %194 = vector.broadcast %174 : vector<1x32xf32> to vector<8x32xf32>
    %195 = arith.mulf %193, %194 : vector<8x32xf32>
    %196 = vector.broadcast %175 : vector<1x32xf32> to vector<8x32xf32>
    %197 = arith.addf %195, %196 : vector<8x32xf32>
    %198 = vector.extract_strided_slice %2 {offsets = [0, 0], sizes = [8, 32], strides = [1, 1]} : vector<8x64xf32> to vector<8x32xf32>
    %199 = arith.addf %197, %198 : vector<8x32xf32>
    %200 = vector.extract_strided_slice %9 {offsets = [0, 0], sizes = [32, 32], strides = [1, 1]} : vector<32x128xbf16> to vector<32x32xbf16>
    %201 = arith.truncf %199 : vector<8x32xf32> to vector<8x32xbf16>
    %cst_65 = arith.constant dense<0.000000e+00> : vector<8x32xf32>
    %202 = tpu.matmul %201, %200, %cst_65 {dimension_numbers = #tpu.dot_dimension_numbers<[1], [0], [0], [1], [0, 0, 1, 1], [], []>} : vector<8x32xbf16>, vector<32x32xbf16>, vector<8x32xf32> -> vector<8x32xf32>
    %203 = vector.extract_strided_slice %13 {offsets = [0, 0], sizes = [1, 32], strides = [1, 1]} : vector<1x128xf32> to vector<1x32xf32>
    %204 = vector.broadcast %203 : vector<1x32xf32> to vector<8x32xf32>
    %205 = arith.addf %202, %204 : vector<8x32xf32>
    %206 = vector.extract_strided_slice %9 {offsets = [0, 32], sizes = [32, 32], strides = [1, 1]} : vector<32x128xbf16> to vector<32x32xbf16>
    %207 = arith.truncf %53 : vector<16x32xf32> to vector<16x32xbf16>
    %cst_66 = arith.constant dense<0.000000e+00> : vector<16x32xf32>
    %208 = tpu.matmul %207, %206, %cst_66 {dimension_numbers = #tpu.dot_dimension_numbers<[1], [0], [0], [1], [0, 0, 1, 1], [], []>} : vector<16x32xbf16>, vector<32x32xbf16>, vector<16x32xf32> -> vector<16x32xf32>
    %209 = vector.extract_strided_slice %13 {offsets = [0, 32], sizes = [1, 32], strides = [1, 1]} : vector<1x128xf32> to vector<1x32xf32>
    %210 = vector.broadcast %209 : vector<1x32xf32> to vector<16x32xf32>
    %211 = arith.addf %208, %210 : vector<16x32xf32>
    %212 = vector.extract_strided_slice %9 {offsets = [0, 64], sizes = [32, 32], strides = [1, 1]} : vector<32x128xbf16> to vector<32x32xbf16>
    %213 = arith.truncf %49 : vector<16x32xf32> to vector<16x32xbf16>
    %cst_67 = arith.constant dense<0.000000e+00> : vector<16x32xf32>
    %214 = tpu.matmul %213, %212, %cst_67 {dimension_numbers = #tpu.dot_dimension_numbers<[1], [0], [0], [1], [0, 0, 1, 1], [], []>} : vector<16x32xbf16>, vector<32x32xbf16>, vector<16x32xf32> -> vector<16x32xf32>
    %215 = vector.extract_strided_slice %13 {offsets = [0, 64], sizes = [1, 32], strides = [1, 1]} : vector<1x128xf32> to vector<1x32xf32>
    %216 = vector.broadcast %215 : vector<1x32xf32> to vector<16x32xf32>
    %217 = arith.addf %214, %216 : vector<16x32xf32>
    %218 = vector.extract_strided_slice %5 {offsets = [0, 0, 0], sizes = [1, 8, 16], strides = [1, 1, 1]} : vector<2x8x16xf32> to vector<1x8x16xf32>
    %219 = vector.shape_cast %218 : vector<1x8x16xf32> to vector<8x16xf32>
    %cst_68 = arith.constant 0.000000e+00 : f32
    %220 = vector.broadcast %cst_68 : f32 to vector<8x32xf32>
    %221 = vector.extract_strided_slice %205 {offsets = [0, 0], sizes = [8, 8], strides = [1, 1]} : vector<8x32xf32> to vector<8x8xf32>
    %222 = arith.truncf %221 : vector<8x8xf32> to vector<8x8xbf16>
    %223 = vector.extract_strided_slice %211 {offsets = [0, 0], sizes = [16, 8], strides = [1, 1]} : vector<16x32xf32> to vector<16x8xf32>
    %224 = arith.truncf %223 : vector<16x8xf32> to vector<16x8xbf16>
    %cst_69 = arith.constant dense<0.000000e+00> : vector<8x16xf32>
    %225 = tpu.matmul %222, %224, %cst_69 {dimension_numbers = #tpu.dot_dimension_numbers<[1], [1], [0], [0], [0, 0, 1, 0], [], []>} : vector<8x8xbf16>, vector<16x8xbf16>, vector<8x16xf32> -> vector<8x16xf32>
    %cst_70 = arith.constant 0.353553385 : f32
    %226 = vector.broadcast %cst_70 : f32 to vector<8x16xf32>
    %227 = arith.mulf %225, %226 : vector<8x16xf32>
    %228 = arith.addf %227, %219 : vector<8x16xf32>
    %cst_71 = arith.constant dense<0xFF800000> : vector<8xf32>
    %229 = vector.multi_reduction <maximumf>, %228, %cst_71 [1] : vector<8x16xf32> to vector<8xf32>
    %230 = vector.shape_cast %229 : vector<8xf32> to vector<8x1xf32>
    %231 = vector.broadcast %230 : vector<8x1xf32> to vector<8x16xf32>
    %232 = arith.subf %228, %231 : vector<8x16xf32>
    %233 = math.exp %232 : vector<8x16xf32>
    %cst_72 = arith.constant dense<0.000000e+00> : vector<8xf32>
    %234 = vector.multi_reduction <add>, %233, %cst_72 [1] : vector<8x16xf32> to vector<8xf32>
    %235 = vector.shape_cast %234 : vector<8xf32> to vector<8x1xf32>
    %236 = tpu.reciprocal %235 {approx = true} : vector<8x1xf32> -> vector<8x1xf32>
    %237 = vector.broadcast %236 : vector<8x1xf32> to vector<8x16xf32>
    %238 = arith.mulf %233, %237 : vector<8x16xf32>
    %239 = arith.truncf %238 : vector<8x16xf32> to vector<8x16xbf16>
    %240 = vector.broadcast %26 : vector<1x32xf32> to vector<16x32xf32>
    %241 = arith.mulf %217, %240 : vector<16x32xf32>
    %242 = arith.truncf %241 : vector<16x32xf32> to vector<16x32xbf16>
    %cst_73 = arith.constant dense<0.000000e+00> : vector<8x32xf32>
    %243 = tpu.matmul %239, %242, %cst_73 {dimension_numbers = #tpu.dot_dimension_numbers<[1], [0], [0], [1], [0, 0, 1, 1], [], []>} : vector<8x16xbf16>, vector<16x32xbf16>, vector<8x32xf32> -> vector<8x32xf32>
    %244 = arith.addf %220, %243 : vector<8x32xf32>
    %245 = vector.extract_strided_slice %205 {offsets = [0, 8], sizes = [8, 8], strides = [1, 1]} : vector<8x32xf32> to vector<8x8xf32>
    %246 = arith.truncf %245 : vector<8x8xf32> to vector<8x8xbf16>
    %247 = vector.extract_strided_slice %211 {offsets = [0, 8], sizes = [16, 8], strides = [1, 1]} : vector<16x32xf32> to vector<16x8xf32>
    %248 = arith.truncf %247 : vector<16x8xf32> to vector<16x8xbf16>
    %cst_74 = arith.constant dense<0.000000e+00> : vector<8x16xf32>
    %249 = tpu.matmul %246, %248, %cst_74 {dimension_numbers = #tpu.dot_dimension_numbers<[1], [1], [0], [0], [0, 0, 1, 0], [], []>} : vector<8x8xbf16>, vector<16x8xbf16>, vector<8x16xf32> -> vector<8x16xf32>
    %cst_75 = arith.constant 0.353553385 : f32
    %250 = vector.broadcast %cst_75 : f32 to vector<8x16xf32>
    %251 = arith.mulf %249, %250 : vector<8x16xf32>
    %252 = arith.addf %251, %219 : vector<8x16xf32>
    %cst_76 = arith.constant dense<0xFF800000> : vector<8xf32>
    %253 = vector.multi_reduction <maximumf>, %252, %cst_76 [1] : vector<8x16xf32> to vector<8xf32>
    %254 = vector.shape_cast %253 : vector<8xf32> to vector<8x1xf32>
    %255 = vector.broadcast %254 : vector<8x1xf32> to vector<8x16xf32>
    %256 = arith.subf %252, %255 : vector<8x16xf32>
    %257 = math.exp %256 : vector<8x16xf32>
    %cst_77 = arith.constant dense<0.000000e+00> : vector<8xf32>
    %258 = vector.multi_reduction <add>, %257, %cst_77 [1] : vector<8x16xf32> to vector<8xf32>
    %259 = vector.shape_cast %258 : vector<8xf32> to vector<8x1xf32>
    %260 = tpu.reciprocal %259 {approx = true} : vector<8x1xf32> -> vector<8x1xf32>
    %261 = vector.broadcast %260 : vector<8x1xf32> to vector<8x16xf32>
    %262 = arith.mulf %257, %261 : vector<8x16xf32>
    %263 = arith.truncf %262 : vector<8x16xf32> to vector<8x16xbf16>
    %264 = vector.broadcast %33 : vector<1x32xf32> to vector<16x32xf32>
    %265 = arith.mulf %217, %264 : vector<16x32xf32>
    %266 = arith.truncf %265 : vector<16x32xf32> to vector<16x32xbf16>
    %cst_78 = arith.constant dense<0.000000e+00> : vector<8x32xf32>
    %267 = tpu.matmul %263, %266, %cst_78 {dimension_numbers = #tpu.dot_dimension_numbers<[1], [0], [0], [1], [0, 0, 1, 1], [], []>} : vector<8x16xbf16>, vector<16x32xbf16>, vector<8x32xf32> -> vector<8x32xf32>
    %268 = arith.addf %244, %267 : vector<8x32xf32>
    %269 = vector.extract_strided_slice %205 {offsets = [0, 16], sizes = [8, 8], strides = [1, 1]} : vector<8x32xf32> to vector<8x8xf32>
    %270 = arith.truncf %269 : vector<8x8xf32> to vector<8x8xbf16>
    %271 = vector.extract_strided_slice %211 {offsets = [0, 16], sizes = [16, 8], strides = [1, 1]} : vector<16x32xf32> to vector<16x8xf32>
    %272 = arith.truncf %271 : vector<16x8xf32> to vector<16x8xbf16>
    %cst_79 = arith.constant dense<0.000000e+00> : vector<8x16xf32>
    %273 = tpu.matmul %270, %272, %cst_79 {dimension_numbers = #tpu.dot_dimension_numbers<[1], [1], [0], [0], [0, 0, 1, 0], [], []>} : vector<8x8xbf16>, vector<16x8xbf16>, vector<8x16xf32> -> vector<8x16xf32>
    %cst_80 = arith.constant 0.353553385 : f32
    %274 = vector.broadcast %cst_80 : f32 to vector<8x16xf32>
    %275 = arith.mulf %273, %274 : vector<8x16xf32>
    %276 = arith.addf %275, %219 : vector<8x16xf32>
    %cst_81 = arith.constant dense<0xFF800000> : vector<8xf32>
    %277 = vector.multi_reduction <maximumf>, %276, %cst_81 [1] : vector<8x16xf32> to vector<8xf32>
    %278 = vector.shape_cast %277 : vector<8xf32> to vector<8x1xf32>
    %279 = vector.broadcast %278 : vector<8x1xf32> to vector<8x16xf32>
    %280 = arith.subf %276, %279 : vector<8x16xf32>
    %281 = math.exp %280 : vector<8x16xf32>
    %cst_82 = arith.constant dense<0.000000e+00> : vector<8xf32>
    %282 = vector.multi_reduction <add>, %281, %cst_82 [1] : vector<8x16xf32> to vector<8xf32>
    %283 = vector.shape_cast %282 : vector<8xf32> to vector<8x1xf32>
    %284 = tpu.reciprocal %283 {approx = true} : vector<8x1xf32> -> vector<8x1xf32>
    %285 = vector.broadcast %284 : vector<8x1xf32> to vector<8x16xf32>
    %286 = arith.mulf %281, %285 : vector<8x16xf32>
    %287 = arith.truncf %286 : vector<8x16xf32> to vector<8x16xbf16>
    %288 = vector.broadcast %40 : vector<1x32xf32> to vector<16x32xf32>
    %289 = arith.mulf %217, %288 : vector<16x32xf32>
    %290 = arith.truncf %289 : vector<16x32xf32> to vector<16x32xbf16>
    %cst_83 = arith.constant dense<0.000000e+00> : vector<8x32xf32>
    %291 = tpu.matmul %287, %290, %cst_83 {dimension_numbers = #tpu.dot_dimension_numbers<[1], [0], [0], [1], [0, 0, 1, 1], [], []>} : vector<8x16xbf16>, vector<16x32xbf16>, vector<8x32xf32> -> vector<8x32xf32>
    %292 = arith.addf %268, %291 : vector<8x32xf32>
    %293 = vector.extract_strided_slice %205 {offsets = [0, 24], sizes = [8, 8], strides = [1, 1]} : vector<8x32xf32> to vector<8x8xf32>
    %294 = arith.truncf %293 : vector<8x8xf32> to vector<8x8xbf16>
    %295 = vector.extract_strided_slice %211 {offsets = [0, 24], sizes = [16, 8], strides = [1, 1]} : vector<16x32xf32> to vector<16x8xf32>
    %296 = arith.truncf %295 : vector<16x8xf32> to vector<16x8xbf16>
    %cst_84 = arith.constant dense<0.000000e+00> : vector<8x16xf32>
    %297 = tpu.matmul %294, %296, %cst_84 {dimension_numbers = #tpu.dot_dimension_numbers<[1], [1], [0], [0], [0, 0, 1, 0], [], []>} : vector<8x8xbf16>, vector<16x8xbf16>, vector<8x16xf32> -> vector<8x16xf32>
    %cst_85 = arith.constant 0.353553385 : f32
    %298 = vector.broadcast %cst_85 : f32 to vector<8x16xf32>
    %299 = arith.mulf %297, %298 : vector<8x16xf32>
    %300 = arith.addf %299, %219 : vector<8x16xf32>
    %cst_86 = arith.constant dense<0xFF800000> : vector<8xf32>
    %301 = vector.multi_reduction <maximumf>, %300, %cst_86 [1] : vector<8x16xf32> to vector<8xf32>
    %302 = vector.shape_cast %301 : vector<8xf32> to vector<8x1xf32>
    %303 = vector.broadcast %302 : vector<8x1xf32> to vector<8x16xf32>
    %304 = arith.subf %300, %303 : vector<8x16xf32>
    %305 = math.exp %304 : vector<8x16xf32>
    %cst_87 = arith.constant dense<0.000000e+00> : vector<8xf32>
    %306 = vector.multi_reduction <add>, %305, %cst_87 [1] : vector<8x16xf32> to vector<8xf32>
    %307 = vector.shape_cast %306 : vector<8xf32> to vector<8x1xf32>
    %308 = tpu.reciprocal %307 {approx = true} : vector<8x1xf32> -> vector<8x1xf32>
    %309 = vector.broadcast %308 : vector<8x1xf32> to vector<8x16xf32>
    %310 = arith.mulf %305, %309 : vector<8x16xf32>
    %311 = arith.truncf %310 : vector<8x16xf32> to vector<8x16xbf16>
    %312 = vector.broadcast %47 : vector<1x32xf32> to vector<16x32xf32>
    %313 = arith.mulf %217, %312 : vector<16x32xf32>
    %314 = arith.truncf %313 : vector<16x32xf32> to vector<16x32xbf16>
    %cst_88 = arith.constant dense<0.000000e+00> : vector<8x32xf32>
    %315 = tpu.matmul %311, %314, %cst_88 {dimension_numbers = #tpu.dot_dimension_numbers<[1], [0], [0], [1], [0, 0, 1, 1], [], []>} : vector<8x16xbf16>, vector<16x32xbf16>, vector<8x32xf32> -> vector<8x32xf32>
    %316 = arith.addf %292, %315 : vector<8x32xf32>
    %317 = vector.extract_strided_slice %9 {offsets = [0, 96], sizes = [32, 32], strides = [1, 1]} : vector<32x128xbf16> to vector<32x32xbf16>
    %318 = arith.truncf %316 : vector<8x32xf32> to vector<8x32xbf16>
    %cst_89 = arith.constant dense<0.000000e+00> : vector<8x32xf32>
    %319 = tpu.matmul %318, %317, %cst_89 {dimension_numbers = #tpu.dot_dimension_numbers<[1], [0], [0], [1], [0, 0, 1, 1], [], []>} : vector<8x32xbf16>, vector<32x32xbf16>, vector<8x32xf32> -> vector<8x32xf32>
    %320 = vector.extract_strided_slice %13 {offsets = [0, 96], sizes = [1, 32], strides = [1, 1]} : vector<1x128xf32> to vector<1x32xf32>
    %321 = vector.broadcast %320 : vector<1x32xf32> to vector<8x32xf32>
    %322 = arith.addf %319, %321 : vector<8x32xf32>
    %323 = arith.addf %197, %322 : vector<8x32xf32>
    %324 = vector.extract_strided_slice %18 {offsets = [2, 0], sizes = [1, 32], strides = [1, 1]} : vector<6x32xf32> to vector<1x32xf32>
    %325 = vector.extract_strided_slice %18 {offsets = [3, 0], sizes = [1, 32], strides = [1, 1]} : vector<6x32xf32> to vector<1x32xf32>
    %cst_90 = arith.constant dense<0.000000e+00> : vector<8xf32>
    %326 = vector.multi_reduction <add>, %323, %cst_90 [1] : vector<8x32xf32> to vector<8xf32>
    %327 = vector.shape_cast %326 : vector<8xf32> to vector<8x1xf32>
    %cst_91 = arith.constant 3.200000e+01 : f32
    %328 = vector.broadcast %cst_91 : f32 to vector<8x1xf32>
    %329 = arith.divf %327, %328 : vector<8x1xf32>
    %330 = vector.broadcast %329 : vector<8x1xf32> to vector<8x32xf32>
    %331 = arith.subf %323, %330 : vector<8x32xf32>
    %332 = arith.mulf %331, %331 : vector<8x32xf32>
    %cst_92 = arith.constant dense<0.000000e+00> : vector<8xf32>
    %333 = vector.multi_reduction <add>, %332, %cst_92 [1] : vector<8x32xf32> to vector<8xf32>
    %334 = vector.shape_cast %333 : vector<8xf32> to vector<8x1xf32>
    %cst_93 = arith.constant 3.200000e+01 : f32
    %335 = vector.broadcast %cst_93 : f32 to vector<8x1xf32>
    %336 = arith.divf %334, %335 : vector<8x1xf32>
    %337 = vector.broadcast %329 : vector<8x1xf32> to vector<8x32xf32>
    %338 = arith.subf %323, %337 : vector<8x32xf32>
    %cst_94 = arith.constant 9.99999974E-6 : f32
    %339 = vector.broadcast %cst_94 : f32 to vector<8x1xf32>
    %340 = arith.addf %336, %339 : vector<8x1xf32>
    %341 = math.rsqrt %340 : vector<8x1xf32>
    %342 = vector.broadcast %341 : vector<8x1xf32> to vector<8x32xf32>
    %343 = arith.mulf %338, %342 : vector<8x32xf32>
    %344 = vector.broadcast %324 : vector<1x32xf32> to vector<8x32xf32>
    %345 = arith.mulf %343, %344 : vector<8x32xf32>
    %346 = vector.broadcast %325 : vector<1x32xf32> to vector<8x32xf32>
    %347 = arith.addf %345, %346 : vector<8x32xf32>
    %348 = arith.truncf %347 : vector<8x32xf32> to vector<8x32xbf16>
    %cst_95 = arith.constant dense<0.000000e+00> : vector<8x64xf32>
    %349 = tpu.matmul %348, %14, %cst_95 {dimension_numbers = #tpu.dot_dimension_numbers<[1], [0], [0], [1], [0, 0, 1, 1], [], []>} : vector<8x32xbf16>, vector<32x64xbf16>, vector<8x64xf32> -> vector<8x64xf32>
    %350 = vector.broadcast %16 : vector<1x64xf32> to vector<8x64xf32>
    %351 = arith.addf %349, %350 : vector<8x64xf32>
    %cst_96 = arith.constant 0.000000e+00 : f32
    %352 = vector.broadcast %cst_96 : f32 to vector<8x64xf32>
    %353 = arith.maximumf %351, %352 : vector<8x64xf32>
    %354 = arith.truncf %353 : vector<8x64xf32> to vector<8x64xbf16>
    %cst_97 = arith.constant dense<0.000000e+00> : vector<8x32xf32>
    %355 = tpu.matmul %354, %15, %cst_97 {dimension_numbers = #tpu.dot_dimension_numbers<[1], [0], [0], [1], [0, 0, 1, 1], [], []>} : vector<8x64xbf16>, vector<64x32xbf16>, vector<8x32xf32> -> vector<8x32xf32>
    %356 = vector.broadcast %17 : vector<1x32xf32> to vector<8x32xf32>
    %357 = arith.addf %355, %356 : vector<8x32xf32>
    %358 = arith.addf %347, %357 : vector<8x32xf32>
    %359 = vector.extract_strided_slice %18 {offsets = [4, 0], sizes = [1, 32], strides = [1, 1]} : vector<6x32xf32> to vector<1x32xf32>
    %360 = vector.extract_strided_slice %18 {offsets = [5, 0], sizes = [1, 32], strides = [1, 1]} : vector<6x32xf32> to vector<1x32xf32>
    %cst_98 = arith.constant dense<0.000000e+00> : vector<8xf32>
    %361 = vector.multi_reduction <add>, %358, %cst_98 [1] : vector<8x32xf32> to vector<8xf32>
    %362 = vector.shape_cast %361 : vector<8xf32> to vector<8x1xf32>
    %cst_99 = arith.constant 3.200000e+01 : f32
    %363 = vector.broadcast %cst_99 : f32 to vector<8x1xf32>
    %364 = arith.divf %362, %363 : vector<8x1xf32>
    %365 = vector.broadcast %364 : vector<8x1xf32> to vector<8x32xf32>
    %366 = arith.subf %358, %365 : vector<8x32xf32>
    %367 = arith.mulf %366, %366 : vector<8x32xf32>
    %cst_100 = arith.constant dense<0.000000e+00> : vector<8xf32>
    %368 = vector.multi_reduction <add>, %367, %cst_100 [1] : vector<8x32xf32> to vector<8xf32>
    %369 = vector.shape_cast %368 : vector<8xf32> to vector<8x1xf32>
    %cst_101 = arith.constant 3.200000e+01 : f32
    %370 = vector.broadcast %cst_101 : f32 to vector<8x1xf32>
    %371 = arith.divf %369, %370 : vector<8x1xf32>
    %372 = vector.broadcast %364 : vector<8x1xf32> to vector<8x32xf32>
    %373 = arith.subf %358, %372 : vector<8x32xf32>
    %cst_102 = arith.constant 9.99999974E-6 : f32
    %374 = vector.broadcast %cst_102 : f32 to vector<8x1xf32>
    %375 = arith.addf %371, %374 : vector<8x1xf32>
    %376 = math.rsqrt %375 : vector<8x1xf32>
    %377 = vector.broadcast %376 : vector<8x1xf32> to vector<8x32xf32>
    %378 = arith.mulf %373, %377 : vector<8x32xf32>
    %379 = vector.broadcast %359 : vector<1x32xf32> to vector<8x32xf32>
    %380 = arith.mulf %378, %379 : vector<8x32xf32>
    %381 = vector.broadcast %360 : vector<1x32xf32> to vector<8x32xf32>
    %382 = arith.addf %380, %381 : vector<8x32xf32>
    %c0_103 = arith.constant 0 : index
    %c0_104 = arith.constant 0 : index
    %383 = vector.load %arg13[%c0_103, %c0_104] : memref<8x64xf32, #tpu.memory_space<vmem>>, vector<8x32xf32>
    tpu.vector_store %arg13[%c0_103, %c0_104], %382 {strides = array<i32>} : memref<8x64xf32, #tpu.memory_space<vmem>>, vector<8x32xf32>,
    %384 = vector.extract_strided_slice %0 {offsets = [0, 32], sizes = [8, 32], strides = [1, 1]} : vector<8x64xf32> to vector<8x32xf32>
    %385 = vector.extract_strided_slice %1 {offsets = [0, 32], sizes = [16, 32], strides = [1, 1]} : vector<16x64xf32> to vector<16x32xf32>
    %386 = vector.extract_strided_slice %2 {offsets = [0, 32], sizes = [8, 32], strides = [1, 1]} : vector<8x64xf32> to vector<8x32xf32>
    %387 = arith.addf %384, %386 : vector<8x32xf32>
    %388 = vector.extract_strided_slice %3 {offsets = [0, 32], sizes = [16, 32], strides = [1, 1]} : vector<16x64xf32> to vector<16x32xf32>
    %389 = arith.addf %385, %388 : vector<16x32xf32>
    %390 = vector.extract_strided_slice %7 {offsets = [0, 0], sizes = [32, 64], strides = [1, 1]} : vector<32x128xbf16> to vector<32x64xbf16>
    %391 = arith.truncf %387 : vector<8x32xf32> to vector<8x32xbf16>
    %cst_105 = arith.constant dense<0.000000e+00> : vector<8x64xf32>
    %392 = tpu.matmul %391, %390, %cst_105 {dimension_numbers = #tpu.dot_dimension_numbers<[1], [0], [0], [1], [0, 0, 1, 1], [], []>} : vector<8x32xbf16>, vector<32x64xbf16>, vector<8x64xf32> -> vector<8x64xf32>
    %393 = vector.extract_strided_slice %11 {offsets = [0, 0], sizes = [1, 64], strides = [1, 1]} : vector<1x128xf32> to vector<1x64xf32>
    %394 = vector.broadcast %393 : vector<1x64xf32> to vector<8x64xf32>
    %395 = arith.addf %392, %394 : vector<8x64xf32>
    %396 = vector.extract_strided_slice %7 {offsets = [0, 64], sizes = [32, 32], strides = [1, 1]} : vector<32x128xbf16> to vector<32x32xbf16>
    %397 = arith.truncf %384 : vector<8x32xf32> to vector<8x32xbf16>
    %cst_106 = arith.constant dense<0.000000e+00> : vector<8x32xf32>
    %398 = tpu.matmul %397, %396, %cst_106 {dimension_numbers = #tpu.dot_dimension_numbers<[1], [0], [0], [1], [0, 0, 1, 1], [], []>} : vector<8x32xbf16>, vector<32x32xbf16>, vector<8x32xf32> -> vector<8x32xf32>
    %399 = vector.extract_strided_slice %11 {offsets = [0, 64], sizes = [1, 32], strides = [1, 1]} : vector<1x128xf32> to vector<1x32xf32>
    %400 = vector.broadcast %399 : vector<1x32xf32> to vector<8x32xf32>
    %401 = arith.addf %398, %400 : vector<8x32xf32>
    %402 = vector.extract_strided_slice %395 {offsets = [0, 0], sizes = [8, 32], strides = [1, 1]} : vector<8x64xf32> to vector<8x32xf32>
    %403 = vector.extract_strided_slice %395 {offsets = [0, 32], sizes = [8, 32], strides = [1, 1]} : vector<8x64xf32> to vector<8x32xf32>
    %404 = vector.extract_strided_slice %4 {offsets = [1, 0, 0], sizes = [1, 8, 8], strides = [1, 1, 1]} : vector<2x8x8xf32> to vector<1x8x8xf32>
    %405 = vector.shape_cast %404 : vector<1x8x8xf32> to vector<8x8xf32>
    %cst_107 = arith.constant 0.000000e+00 : f32
    %406 = vector.broadcast %cst_107 : f32 to vector<8x32xf32>
    %407 = vector.extract_strided_slice %402 {offsets = [0, 0], sizes = [8, 8], strides = [1, 1]} : vector<8x32xf32> to vector<8x8xf32>
    %408 = arith.truncf %407 : vector<8x8xf32> to vector<8x8xbf16>
    %409 = vector.extract_strided_slice %403 {offsets = [0, 0], sizes = [8, 8], strides = [1, 1]} : vector<8x32xf32> to vector<8x8xf32>
    %410 = arith.truncf %409 : vector<8x8xf32> to vector<8x8xbf16>
    %cst_108 = arith.constant dense<0.000000e+00> : vector<8x8xf32>
    %411 = tpu.matmul %408, %410, %cst_108 {dimension_numbers = #tpu.dot_dimension_numbers<[1], [1], [0], [0], [0, 0, 1, 0], [], []>} : vector<8x8xbf16>, vector<8x8xbf16>, vector<8x8xf32> -> vector<8x8xf32>
    %cst_109 = arith.constant 0.353553385 : f32
    %412 = vector.broadcast %cst_109 : f32 to vector<8x8xf32>
    %413 = arith.mulf %411, %412 : vector<8x8xf32>
    %414 = arith.addf %413, %405 : vector<8x8xf32>
    %cst_110 = arith.constant dense<0xFF800000> : vector<8xf32>
    %415 = vector.multi_reduction <maximumf>, %414, %cst_110 [1] : vector<8x8xf32> to vector<8xf32>
    %416 = vector.shape_cast %415 : vector<8xf32> to vector<8x1xf32>
    %417 = vector.broadcast %416 : vector<8x1xf32> to vector<8x8xf32>
    %418 = arith.subf %414, %417 : vector<8x8xf32>
    %419 = math.exp %418 : vector<8x8xf32>
    %cst_111 = arith.constant dense<0.000000e+00> : vector<8xf32>
    %420 = vector.multi_reduction <add>, %419, %cst_111 [1] : vector<8x8xf32> to vector<8xf32>
    %421 = vector.shape_cast %420 : vector<8xf32> to vector<8x1xf32>
    %422 = tpu.reciprocal %421 {approx = true} : vector<8x1xf32> -> vector<8x1xf32>
    %423 = vector.broadcast %422 : vector<8x1xf32> to vector<8x8xf32>
    %424 = arith.mulf %419, %423 : vector<8x8xf32>
    %425 = arith.truncf %424 : vector<8x8xf32> to vector<8x8xbf16>
    %426 = vector.broadcast %26 : vector<1x32xf32> to vector<8x32xf32>
    %427 = arith.mulf %401, %426 : vector<8x32xf32>
    %428 = arith.truncf %427 : vector<8x32xf32> to vector<8x32xbf16>
    %cst_112 = arith.constant dense<0.000000e+00> : vector<8x32xf32>
    %429 = tpu.matmul %425, %428, %cst_112 {dimension_numbers = #tpu.dot_dimension_numbers<[1], [0], [0], [1], [0, 0, 1, 1], [], []>} : vector<8x8xbf16>, vector<8x32xbf16>, vector<8x32xf32> -> vector<8x32xf32>
    %430 = arith.addf %406, %429 : vector<8x32xf32>
    %431 = vector.extract_strided_slice %402 {offsets = [0, 8], sizes = [8, 8], strides = [1, 1]} : vector<8x32xf32> to vector<8x8xf32>
    %432 = arith.truncf %431 : vector<8x8xf32> to vector<8x8xbf16>
    %433 = vector.extract_strided_slice %403 {offsets = [0, 8], sizes = [8, 8], strides = [1, 1]} : vector<8x32xf32> to vector<8x8xf32>
    %434 = arith.truncf %433 : vector<8x8xf32> to vector<8x8xbf16>
    %cst_113 = arith.constant dense<0.000000e+00> : vector<8x8xf32>
    %435 = tpu.matmul %432, %434, %cst_113 {dimension_numbers = #tpu.dot_dimension_numbers<[1], [1], [0], [0], [0, 0, 1, 0], [], []>} : vector<8x8xbf16>, vector<8x8xbf16>, vector<8x8xf32> -> vector<8x8xf32>
    %cst_114 = arith.constant 0.353553385 : f32
    %436 = vector.broadcast %cst_114 : f32 to vector<8x8xf32>
    %437 = arith.mulf %435, %436 : vector<8x8xf32>
    %438 = arith.addf %437, %405 : vector<8x8xf32>
    %cst_115 = arith.constant dense<0xFF800000> : vector<8xf32>
    %439 = vector.multi_reduction <maximumf>, %438, %cst_115 [1] : vector<8x8xf32> to vector<8xf32>
    %440 = vector.shape_cast %439 : vector<8xf32> to vector<8x1xf32>
    %441 = vector.broadcast %440 : vector<8x1xf32> to vector<8x8xf32>
    %442 = arith.subf %438, %441 : vector<8x8xf32>
    %443 = math.exp %442 : vector<8x8xf32>
    %cst_116 = arith.constant dense<0.000000e+00> : vector<8xf32>
    %444 = vector.multi_reduction <add>, %443, %cst_116 [1] : vector<8x8xf32> to vector<8xf32>
    %445 = vector.shape_cast %444 : vector<8xf32> to vector<8x1xf32>
    %446 = tpu.reciprocal %445 {approx = true} : vector<8x1xf32> -> vector<8x1xf32>
    %447 = vector.broadcast %446 : vector<8x1xf32> to vector<8x8xf32>
    %448 = arith.mulf %443, %447 : vector<8x8xf32>
    %449 = arith.truncf %448 : vector<8x8xf32> to vector<8x8xbf16>
    %450 = vector.broadcast %33 : vector<1x32xf32> to vector<8x32xf32>
    %451 = arith.mulf %401, %450 : vector<8x32xf32>
    %452 = arith.truncf %451 : vector<8x32xf32> to vector<8x32xbf16>
    %cst_117 = arith.constant dense<0.000000e+00> : vector<8x32xf32>
    %453 = tpu.matmul %449, %452, %cst_117 {dimension_numbers = #tpu.dot_dimension_numbers<[1], [0], [0], [1], [0, 0, 1, 1], [], []>} : vector<8x8xbf16>, vector<8x32xbf16>, vector<8x32xf32> -> vector<8x32xf32>
    %454 = arith.addf %430, %453 : vector<8x32xf32>
    %455 = vector.extract_strided_slice %402 {offsets = [0, 16], sizes = [8, 8], strides = [1, 1]} : vector<8x32xf32> to vector<8x8xf32>
    %456 = arith.truncf %455 : vector<8x8xf32> to vector<8x8xbf16>
    %457 = vector.extract_strided_slice %403 {offsets = [0, 16], sizes = [8, 8], strides = [1, 1]} : vector<8x32xf32> to vector<8x8xf32>
    %458 = arith.truncf %457 : vector<8x8xf32> to vector<8x8xbf16>
    %cst_118 = arith.constant dense<0.000000e+00> : vector<8x8xf32>
    %459 = tpu.matmul %456, %458, %cst_118 {dimension_numbers = #tpu.dot_dimension_numbers<[1], [1], [0], [0], [0, 0, 1, 0], [], []>} : vector<8x8xbf16>, vector<8x8xbf16>, vector<8x8xf32> -> vector<8x8xf32>
    %cst_119 = arith.constant 0.353553385 : f32
    %460 = vector.broadcast %cst_119 : f32 to vector<8x8xf32>
    %461 = arith.mulf %459, %460 : vector<8x8xf32>
    %462 = arith.addf %461, %405 : vector<8x8xf32>
    %cst_120 = arith.constant dense<0xFF800000> : vector<8xf32>
    %463 = vector.multi_reduction <maximumf>, %462, %cst_120 [1] : vector<8x8xf32> to vector<8xf32>
    %464 = vector.shape_cast %463 : vector<8xf32> to vector<8x1xf32>
    %465 = vector.broadcast %464 : vector<8x1xf32> to vector<8x8xf32>
    %466 = arith.subf %462, %465 : vector<8x8xf32>
    %467 = math.exp %466 : vector<8x8xf32>
    %cst_121 = arith.constant dense<0.000000e+00> : vector<8xf32>
    %468 = vector.multi_reduction <add>, %467, %cst_121 [1] : vector<8x8xf32> to vector<8xf32>
    %469 = vector.shape_cast %468 : vector<8xf32> to vector<8x1xf32>
    %470 = tpu.reciprocal %469 {approx = true} : vector<8x1xf32> -> vector<8x1xf32>
    %471 = vector.broadcast %470 : vector<8x1xf32> to vector<8x8xf32>
    %472 = arith.mulf %467, %471 : vector<8x8xf32>
    %473 = arith.truncf %472 : vector<8x8xf32> to vector<8x8xbf16>
    %474 = vector.broadcast %40 : vector<1x32xf32> to vector<8x32xf32>
    %475 = arith.mulf %401, %474 : vector<8x32xf32>
    %476 = arith.truncf %475 : vector<8x32xf32> to vector<8x32xbf16>
    %cst_122 = arith.constant dense<0.000000e+00> : vector<8x32xf32>
    %477 = tpu.matmul %473, %476, %cst_122 {dimension_numbers = #tpu.dot_dimension_numbers<[1], [0], [0], [1], [0, 0, 1, 1], [], []>} : vector<8x8xbf16>, vector<8x32xbf16>, vector<8x32xf32> -> vector<8x32xf32>
    %478 = arith.addf %454, %477 : vector<8x32xf32>
    %479 = vector.extract_strided_slice %402 {offsets = [0, 24], sizes = [8, 8], strides = [1, 1]} : vector<8x32xf32> to vector<8x8xf32>
    %480 = arith.truncf %479 : vector<8x8xf32> to vector<8x8xbf16>
    %481 = vector.extract_strided_slice %403 {offsets = [0, 24], sizes = [8, 8], strides = [1, 1]} : vector<8x32xf32> to vector<8x8xf32>
    %482 = arith.truncf %481 : vector<8x8xf32> to vector<8x8xbf16>
    %cst_123 = arith.constant dense<0.000000e+00> : vector<8x8xf32>
    %483 = tpu.matmul %480, %482, %cst_123 {dimension_numbers = #tpu.dot_dimension_numbers<[1], [1], [0], [0], [0, 0, 1, 0], [], []>} : vector<8x8xbf16>, vector<8x8xbf16>, vector<8x8xf32> -> vector<8x8xf32>
    %cst_124 = arith.constant 0.353553385 : f32
    %484 = vector.broadcast %cst_124 : f32 to vector<8x8xf32>
    %485 = arith.mulf %483, %484 : vector<8x8xf32>
    %486 = arith.addf %485, %405 : vector<8x8xf32>
    %cst_125 = arith.constant dense<0xFF800000> : vector<8xf32>
    %487 = vector.multi_reduction <maximumf>, %486, %cst_125 [1] : vector<8x8xf32> to vector<8xf32>
    %488 = vector.shape_cast %487 : vector<8xf32> to vector<8x1xf32>
    %489 = vector.broadcast %488 : vector<8x1xf32> to vector<8x8xf32>
    %490 = arith.subf %486, %489 : vector<8x8xf32>
    %491 = math.exp %490 : vector<8x8xf32>
    %cst_126 = arith.constant dense<0.000000e+00> : vector<8xf32>
    %492 = vector.multi_reduction <add>, %491, %cst_126 [1] : vector<8x8xf32> to vector<8xf32>
    %493 = vector.shape_cast %492 : vector<8xf32> to vector<8x1xf32>
    %494 = tpu.reciprocal %493 {approx = true} : vector<8x1xf32> -> vector<8x1xf32>
    %495 = vector.broadcast %494 : vector<8x1xf32> to vector<8x8xf32>
    %496 = arith.mulf %491, %495 : vector<8x8xf32>
    %497 = arith.truncf %496 : vector<8x8xf32> to vector<8x8xbf16>
    %498 = vector.broadcast %47 : vector<1x32xf32> to vector<8x32xf32>
    %499 = arith.mulf %401, %498 : vector<8x32xf32>
    %500 = arith.truncf %499 : vector<8x32xf32> to vector<8x32xbf16>
    %cst_127 = arith.constant dense<0.000000e+00> : vector<8x32xf32>
    %501 = tpu.matmul %497, %500, %cst_127 {dimension_numbers = #tpu.dot_dimension_numbers<[1], [0], [0], [1], [0, 0, 1, 1], [], []>} : vector<8x8xbf16>, vector<8x32xbf16>, vector<8x32xf32> -> vector<8x32xf32>
    %502 = arith.addf %478, %501 : vector<8x32xf32>
    %503 = vector.extract_strided_slice %7 {offsets = [0, 96], sizes = [32, 32], strides = [1, 1]} : vector<32x128xbf16> to vector<32x32xbf16>
    %504 = arith.truncf %502 : vector<8x32xf32> to vector<8x32xbf16>
    %cst_128 = arith.constant dense<0.000000e+00> : vector<8x32xf32>
    %505 = tpu.matmul %504, %503, %cst_128 {dimension_numbers = #tpu.dot_dimension_numbers<[1], [0], [0], [1], [0, 0, 1, 1], [], []>} : vector<8x32xbf16>, vector<32x32xbf16>, vector<8x32xf32> -> vector<8x32xf32>
    %506 = vector.extract_strided_slice %11 {offsets = [0, 96], sizes = [1, 32], strides = [1, 1]} : vector<1x128xf32> to vector<1x32xf32>
    %507 = vector.broadcast %506 : vector<1x32xf32> to vector<8x32xf32>
    %508 = arith.addf %505, %507 : vector<8x32xf32>
    %509 = arith.addf %384, %508 : vector<8x32xf32>
    %510 = vector.extract_strided_slice %18 {offsets = [0, 0], sizes = [1, 32], strides = [1, 1]} : vector<6x32xf32> to vector<1x32xf32>
    %511 = vector.extract_strided_slice %18 {offsets = [1, 0], sizes = [1, 32], strides = [1, 1]} : vector<6x32xf32> to vector<1x32xf32>
    %cst_129 = arith.constant dense<0.000000e+00> : vector<8xf32>
    %512 = vector.multi_reduction <add>, %509, %cst_129 [1] : vector<8x32xf32> to vector<8xf32>
    %513 = vector.shape_cast %512 : vector<8xf32> to vector<8x1xf32>
    %cst_130 = arith.constant 3.200000e+01 : f32
    %514 = vector.broadcast %cst_130 : f32 to vector<8x1xf32>
    %515 = arith.divf %513, %514 : vector<8x1xf32>
    %516 = vector.broadcast %515 : vector<8x1xf32> to vector<8x32xf32>
    %517 = arith.subf %509, %516 : vector<8x32xf32>
    %518 = arith.mulf %517, %517 : vector<8x32xf32>
    %cst_131 = arith.constant dense<0.000000e+00> : vector<8xf32>
    %519 = vector.multi_reduction <add>, %518, %cst_131 [1] : vector<8x32xf32> to vector<8xf32>
    %520 = vector.shape_cast %519 : vector<8xf32> to vector<8x1xf32>
    %cst_132 = arith.constant 3.200000e+01 : f32
    %521 = vector.broadcast %cst_132 : f32 to vector<8x1xf32>
    %522 = arith.divf %520, %521 : vector<8x1xf32>
    %523 = vector.broadcast %515 : vector<8x1xf32> to vector<8x32xf32>
    %524 = arith.subf %509, %523 : vector<8x32xf32>
    %cst_133 = arith.constant 9.99999974E-6 : f32
    %525 = vector.broadcast %cst_133 : f32 to vector<8x1xf32>
    %526 = arith.addf %522, %525 : vector<8x1xf32>
    %527 = math.rsqrt %526 : vector<8x1xf32>
    %528 = vector.broadcast %527 : vector<8x1xf32> to vector<8x32xf32>
    %529 = arith.mulf %524, %528 : vector<8x32xf32>
    %530 = vector.broadcast %510 : vector<1x32xf32> to vector<8x32xf32>
    %531 = arith.mulf %529, %530 : vector<8x32xf32>
    %532 = vector.broadcast %511 : vector<1x32xf32> to vector<8x32xf32>
    %533 = arith.addf %531, %532 : vector<8x32xf32>
    %534 = vector.extract_strided_slice %2 {offsets = [0, 32], sizes = [8, 32], strides = [1, 1]} : vector<8x64xf32> to vector<8x32xf32>
    %535 = arith.addf %533, %534 : vector<8x32xf32>
    %536 = vector.extract_strided_slice %9 {offsets = [0, 0], sizes = [32, 32], strides = [1, 1]} : vector<32x128xbf16> to vector<32x32xbf16>
    %537 = arith.truncf %535 : vector<8x32xf32> to vector<8x32xbf16>
    %cst_134 = arith.constant dense<0.000000e+00> : vector<8x32xf32>
    %538 = tpu.matmul %537, %536, %cst_134 {dimension_numbers = #tpu.dot_dimension_numbers<[1], [0], [0], [1], [0, 0, 1, 1], [], []>} : vector<8x32xbf16>, vector<32x32xbf16>, vector<8x32xf32> -> vector<8x32xf32>
    %539 = vector.extract_strided_slice %13 {offsets = [0, 0], sizes = [1, 32], strides = [1, 1]} : vector<1x128xf32> to vector<1x32xf32>
    %540 = vector.broadcast %539 : vector<1x32xf32> to vector<8x32xf32>
    %541 = arith.addf %538, %540 : vector<8x32xf32>
    %542 = vector.extract_strided_slice %9 {offsets = [0, 32], sizes = [32, 32], strides = [1, 1]} : vector<32x128xbf16> to vector<32x32xbf16>
    %543 = arith.truncf %389 : vector<16x32xf32> to vector<16x32xbf16>
    %cst_135 = arith.constant dense<0.000000e+00> : vector<16x32xf32>
    %544 = tpu.matmul %543, %542, %cst_135 {dimension_numbers = #tpu.dot_dimension_numbers<[1], [0], [0], [1], [0, 0, 1, 1], [], []>} : vector<16x32xbf16>, vector<32x32xbf16>, vector<16x32xf32> -> vector<16x32xf32>
    %545 = vector.extract_strided_slice %13 {offsets = [0, 32], sizes = [1, 32], strides = [1, 1]} : vector<1x128xf32> to vector<1x32xf32>
    %546 = vector.broadcast %545 : vector<1x32xf32> to vector<16x32xf32>
    %547 = arith.addf %544, %546 : vector<16x32xf32>
    %548 = vector.extract_strided_slice %9 {offsets = [0, 64], sizes = [32, 32], strides = [1, 1]} : vector<32x128xbf16> to vector<32x32xbf16>
    %549 = arith.truncf %385 : vector<16x32xf32> to vector<16x32xbf16>
    %cst_136 = arith.constant dense<0.000000e+00> : vector<16x32xf32>
    %550 = tpu.matmul %549, %548, %cst_136 {dimension_numbers = #tpu.dot_dimension_numbers<[1], [0], [0], [1], [0, 0, 1, 1], [], []>} : vector<16x32xbf16>, vector<32x32xbf16>, vector<16x32xf32> -> vector<16x32xf32>
    %551 = vector.extract_strided_slice %13 {offsets = [0, 64], sizes = [1, 32], strides = [1, 1]} : vector<1x128xf32> to vector<1x32xf32>
    %552 = vector.broadcast %551 : vector<1x32xf32> to vector<16x32xf32>
    %553 = arith.addf %550, %552 : vector<16x32xf32>
    %554 = vector.extract_strided_slice %5 {offsets = [1, 0, 0], sizes = [1, 8, 16], strides = [1, 1, 1]} : vector<2x8x16xf32> to vector<1x8x16xf32>
    %555 = vector.shape_cast %554 : vector<1x8x16xf32> to vector<8x16xf32>
    %cst_137 = arith.constant 0.000000e+00 : f32
    %556 = vector.broadcast %cst_137 : f32 to vector<8x32xf32>
    %557 = vector.extract_strided_slice %541 {offsets = [0, 0], sizes = [8, 8], strides = [1, 1]} : vector<8x32xf32> to vector<8x8xf32>
    %558 = arith.truncf %557 : vector<8x8xf32> to vector<8x8xbf16>
    %559 = vector.extract_strided_slice %547 {offsets = [0, 0], sizes = [16, 8], strides = [1, 1]} : vector<16x32xf32> to vector<16x8xf32>
    %560 = arith.truncf %559 : vector<16x8xf32> to vector<16x8xbf16>
    %cst_138 = arith.constant dense<0.000000e+00> : vector<8x16xf32>
    %561 = tpu.matmul %558, %560, %cst_138 {dimension_numbers = #tpu.dot_dimension_numbers<[1], [1], [0], [0], [0, 0, 1, 0], [], []>} : vector<8x8xbf16>, vector<16x8xbf16>, vector<8x16xf32> -> vector<8x16xf32>
    %cst_139 = arith.constant 0.353553385 : f32
    %562 = vector.broadcast %cst_139 : f32 to vector<8x16xf32>
    %563 = arith.mulf %561, %562 : vector<8x16xf32>
    %564 = arith.addf %563, %555 : vector<8x16xf32>
    %cst_140 = arith.constant dense<0xFF800000> : vector<8xf32>
    %565 = vector.multi_reduction <maximumf>, %564, %cst_140 [1] : vector<8x16xf32> to vector<8xf32>
    %566 = vector.shape_cast %565 : vector<8xf32> to vector<8x1xf32>
    %567 = vector.broadcast %566 : vector<8x1xf32> to vector<8x16xf32>
    %568 = arith.subf %564, %567 : vector<8x16xf32>
    %569 = math.exp %568 : vector<8x16xf32>
    %cst_141 = arith.constant dense<0.000000e+00> : vector<8xf32>
    %570 = vector.multi_reduction <add>, %569, %cst_141 [1] : vector<8x16xf32> to vector<8xf32>
    %571 = vector.shape_cast %570 : vector<8xf32> to vector<8x1xf32>
    %572 = tpu.reciprocal %571 {approx = true} : vector<8x1xf32> -> vector<8x1xf32>
    %573 = vector.broadcast %572 : vector<8x1xf32> to vector<8x16xf32>
    %574 = arith.mulf %569, %573 : vector<8x16xf32>
    %575 = arith.truncf %574 : vector<8x16xf32> to vector<8x16xbf16>
    %576 = vector.broadcast %26 : vector<1x32xf32> to vector<16x32xf32>
    %577 = arith.mulf %553, %576 : vector<16x32xf32>
    %578 = arith.truncf %577 : vector<16x32xf32> to vector<16x32xbf16>
    %cst_142 = arith.constant dense<0.000000e+00> : vector<8x32xf32>
    %579 = tpu.matmul %575, %578, %cst_142 {dimension_numbers = #tpu.dot_dimension_numbers<[1], [0], [0], [1], [0, 0, 1, 1], [], []>} : vector<8x16xbf16>, vector<16x32xbf16>, vector<8x32xf32> -> vector<8x32xf32>
    %580 = arith.addf %556, %579 : vector<8x32xf32>
    %581 = vector.extract_strided_slice %541 {offsets = [0, 8], sizes = [8, 8], strides = [1, 1]} : vector<8x32xf32> to vector<8x8xf32>
    %582 = arith.truncf %581 : vector<8x8xf32> to vector<8x8xbf16>
    %583 = vector.extract_strided_slice %547 {offsets = [0, 8], sizes = [16, 8], strides = [1, 1]} : vector<16x32xf32> to vector<16x8xf32>
    %584 = arith.truncf %583 : vector<16x8xf32> to vector<16x8xbf16>
    %cst_143 = arith.constant dense<0.000000e+00> : vector<8x16xf32>
    %585 = tpu.matmul %582, %584, %cst_143 {dimension_numbers = #tpu.dot_dimension_numbers<[1], [1], [0], [0], [0, 0, 1, 0], [], []>} : vector<8x8xbf16>, vector<16x8xbf16>, vector<8x16xf32> -> vector<8x16xf32>
    %cst_144 = arith.constant 0.353553385 : f32
    %586 = vector.broadcast %cst_144 : f32 to vector<8x16xf32>
    %587 = arith.mulf %585, %586 : vector<8x16xf32>
    %588 = arith.addf %587, %555 : vector<8x16xf32>
    %cst_145 = arith.constant dense<0xFF800000> : vector<8xf32>
    %589 = vector.multi_reduction <maximumf>, %588, %cst_145 [1] : vector<8x16xf32> to vector<8xf32>
    %590 = vector.shape_cast %589 : vector<8xf32> to vector<8x1xf32>
    %591 = vector.broadcast %590 : vector<8x1xf32> to vector<8x16xf32>
    %592 = arith.subf %588, %591 : vector<8x16xf32>
    %593 = math.exp %592 : vector<8x16xf32>
    %cst_146 = arith.constant dense<0.000000e+00> : vector<8xf32>
    %594 = vector.multi_reduction <add>, %593, %cst_146 [1] : vector<8x16xf32> to vector<8xf32>
    %595 = vector.shape_cast %594 : vector<8xf32> to vector<8x1xf32>
    %596 = tpu.reciprocal %595 {approx = true} : vector<8x1xf32> -> vector<8x1xf32>
    %597 = vector.broadcast %596 : vector<8x1xf32> to vector<8x16xf32>
    %598 = arith.mulf %593, %597 : vector<8x16xf32>
    %599 = arith.truncf %598 : vector<8x16xf32> to vector<8x16xbf16>
    %600 = vector.broadcast %33 : vector<1x32xf32> to vector<16x32xf32>
    %601 = arith.mulf %553, %600 : vector<16x32xf32>
    %602 = arith.truncf %601 : vector<16x32xf32> to vector<16x32xbf16>
    %cst_147 = arith.constant dense<0.000000e+00> : vector<8x32xf32>
    %603 = tpu.matmul %599, %602, %cst_147 {dimension_numbers = #tpu.dot_dimension_numbers<[1], [0], [0], [1], [0, 0, 1, 1], [], []>} : vector<8x16xbf16>, vector<16x32xbf16>, vector<8x32xf32> -> vector<8x32xf32>
    %604 = arith.addf %580, %603 : vector<8x32xf32>
    %605 = vector.extract_strided_slice %541 {offsets = [0, 16], sizes = [8, 8], strides = [1, 1]} : vector<8x32xf32> to vector<8x8xf32>
    %606 = arith.truncf %605 : vector<8x8xf32> to vector<8x8xbf16>
    %607 = vector.extract_strided_slice %547 {offsets = [0, 16], sizes = [16, 8], strides = [1, 1]} : vector<16x32xf32> to vector<16x8xf32>
    %608 = arith.truncf %607 : vector<16x8xf32> to vector<16x8xbf16>
    %cst_148 = arith.constant dense<0.000000e+00> : vector<8x16xf32>
    %609 = tpu.matmul %606, %608, %cst_148 {dimension_numbers = #tpu.dot_dimension_numbers<[1], [1], [0], [0], [0, 0, 1, 0], [], []>} : vector<8x8xbf16>, vector<16x8xbf16>, vector<8x16xf32> -> vector<8x16xf32>
    %cst_149 = arith.constant 0.353553385 : f32
    %610 = vector.broadcast %cst_149 : f32 to vector<8x16xf32>
    %611 = arith.mulf %609, %610 : vector<8x16xf32>
    %612 = arith.addf %611, %555 : vector<8x16xf32>
    %cst_150 = arith.constant dense<0xFF800000> : vector<8xf32>
    %613 = vector.multi_reduction <maximumf>, %612, %cst_150 [1] : vector<8x16xf32> to vector<8xf32>
    %614 = vector.shape_cast %613 : vector<8xf32> to vector<8x1xf32>
    %615 = vector.broadcast %614 : vector<8x1xf32> to vector<8x16xf32>
    %616 = arith.subf %612, %615 : vector<8x16xf32>
    %617 = math.exp %616 : vector<8x16xf32>
    %cst_151 = arith.constant dense<0.000000e+00> : vector<8xf32>
    %618 = vector.multi_reduction <add>, %617, %cst_151 [1] : vector<8x16xf32> to vector<8xf32>
    %619 = vector.shape_cast %618 : vector<8xf32> to vector<8x1xf32>
    %620 = tpu.reciprocal %619 {approx = true} : vector<8x1xf32> -> vector<8x1xf32>
    %621 = vector.broadcast %620 : vector<8x1xf32> to vector<8x16xf32>
    %622 = arith.mulf %617, %621 : vector<8x16xf32>
    %623 = arith.truncf %622 : vector<8x16xf32> to vector<8x16xbf16>
    %624 = vector.broadcast %40 : vector<1x32xf32> to vector<16x32xf32>
    %625 = arith.mulf %553, %624 : vector<16x32xf32>
    %626 = arith.truncf %625 : vector<16x32xf32> to vector<16x32xbf16>
    %cst_152 = arith.constant dense<0.000000e+00> : vector<8x32xf32>
    %627 = tpu.matmul %623, %626, %cst_152 {dimension_numbers = #tpu.dot_dimension_numbers<[1], [0], [0], [1], [0, 0, 1, 1], [], []>} : vector<8x16xbf16>, vector<16x32xbf16>, vector<8x32xf32> -> vector<8x32xf32>
    %628 = arith.addf %604, %627 : vector<8x32xf32>
    %629 = vector.extract_strided_slice %541 {offsets = [0, 24], sizes = [8, 8], strides = [1, 1]} : vector<8x32xf32> to vector<8x8xf32>
    %630 = arith.truncf %629 : vector<8x8xf32> to vector<8x8xbf16>
    %631 = vector.extract_strided_slice %547 {offsets = [0, 24], sizes = [16, 8], strides = [1, 1]} : vector<16x32xf32> to vector<16x8xf32>
    %632 = arith.truncf %631 : vector<16x8xf32> to vector<16x8xbf16>
    %cst_153 = arith.constant dense<0.000000e+00> : vector<8x16xf32>
    %633 = tpu.matmul %630, %632, %cst_153 {dimension_numbers = #tpu.dot_dimension_numbers<[1], [1], [0], [0], [0, 0, 1, 0], [], []>} : vector<8x8xbf16>, vector<16x8xbf16>, vector<8x16xf32> -> vector<8x16xf32>
    %cst_154 = arith.constant 0.353553385 : f32
    %634 = vector.broadcast %cst_154 : f32 to vector<8x16xf32>
    %635 = arith.mulf %633, %634 : vector<8x16xf32>
    %636 = arith.addf %635, %555 : vector<8x16xf32>
    %cst_155 = arith.constant dense<0xFF800000> : vector<8xf32>
    %637 = vector.multi_reduction <maximumf>, %636, %cst_155 [1] : vector<8x16xf32> to vector<8xf32>
    %638 = vector.shape_cast %637 : vector<8xf32> to vector<8x1xf32>
    %639 = vector.broadcast %638 : vector<8x1xf32> to vector<8x16xf32>
    %640 = arith.subf %636, %639 : vector<8x16xf32>
    %641 = math.exp %640 : vector<8x16xf32>
    %cst_156 = arith.constant dense<0.000000e+00> : vector<8xf32>
    %642 = vector.multi_reduction <add>, %641, %cst_156 [1] : vector<8x16xf32> to vector<8xf32>
    %643 = vector.shape_cast %642 : vector<8xf32> to vector<8x1xf32>
    %644 = tpu.reciprocal %643 {approx = true} : vector<8x1xf32> -> vector<8x1xf32>
    %645 = vector.broadcast %644 : vector<8x1xf32> to vector<8x16xf32>
    %646 = arith.mulf %641, %645 : vector<8x16xf32>
    %647 = arith.truncf %646 : vector<8x16xf32> to vector<8x16xbf16>
    %648 = vector.broadcast %47 : vector<1x32xf32> to vector<16x32xf32>
    %649 = arith.mulf %553, %648 : vector<16x32xf32>
    %650 = arith.truncf %649 : vector<16x32xf32> to vector<16x32xbf16>
    %cst_157 = arith.constant dense<0.000000e+00> : vector<8x32xf32>
    %651 = tpu.matmul %647, %650, %cst_157 {dimension_numbers = #tpu.dot_dimension_numbers<[1], [0], [0], [1], [0, 0, 1, 1], [], []>} : vector<8x16xbf16>, vector<16x32xbf16>, vector<8x32xf32> -> vector<8x32xf32>
    %652 = arith.addf %628, %651 : vector<8x32xf32>
    %653 = vector.extract_strided_slice %9 {offsets = [0, 96], sizes = [32, 32], strides = [1, 1]} : vector<32x128xbf16> to vector<32x32xbf16>
    %654 = arith.truncf %652 : vector<8x32xf32> to vector<8x32xbf16>
    %cst_158 = arith.constant dense<0.000000e+00> : vector<8x32xf32>
    %655 = tpu.matmul %654, %653, %cst_158 {dimension_numbers = #tpu.dot_dimension_numbers<[1], [0], [0], [1], [0, 0, 1, 1], [], []>} : vector<8x32xbf16>, vector<32x32xbf16>, vector<8x32xf32> -> vector<8x32xf32>
    %656 = vector.extract_strided_slice %13 {offsets = [0, 96], sizes = [1, 32], strides = [1, 1]} : vector<1x128xf32> to vector<1x32xf32>
    %657 = vector.broadcast %656 : vector<1x32xf32> to vector<8x32xf32>
    %658 = arith.addf %655, %657 : vector<8x32xf32>
    %659 = arith.addf %533, %658 : vector<8x32xf32>
    %660 = vector.extract_strided_slice %18 {offsets = [2, 0], sizes = [1, 32], strides = [1, 1]} : vector<6x32xf32> to vector<1x32xf32>
    %661 = vector.extract_strided_slice %18 {offsets = [3, 0], sizes = [1, 32], strides = [1, 1]} : vector<6x32xf32> to vector<1x32xf32>
    %cst_159 = arith.constant dense<0.000000e+00> : vector<8xf32>
    %662 = vector.multi_reduction <add>, %659, %cst_159 [1] : vector<8x32xf32> to vector<8xf32>
    %663 = vector.shape_cast %662 : vector<8xf32> to vector<8x1xf32>
    %cst_160 = arith.constant 3.200000e+01 : f32
    %664 = vector.broadcast %cst_160 : f32 to vector<8x1xf32>
    %665 = arith.divf %663, %664 : vector<8x1xf32>
    %666 = vector.broadcast %665 : vector<8x1xf32> to vector<8x32xf32>
    %667 = arith.subf %659, %666 : vector<8x32xf32>
    %668 = arith.mulf %667, %667 : vector<8x32xf32>
    %cst_161 = arith.constant dense<0.000000e+00> : vector<8xf32>
    %669 = vector.multi_reduction <add>, %668, %cst_161 [1] : vector<8x32xf32> to vector<8xf32>
    %670 = vector.shape_cast %669 : vector<8xf32> to vector<8x1xf32>
    %cst_162 = arith.constant 3.200000e+01 : f32
    %671 = vector.broadcast %cst_162 : f32 to vector<8x1xf32>
    %672 = arith.divf %670, %671 : vector<8x1xf32>
    %673 = vector.broadcast %665 : vector<8x1xf32> to vector<8x32xf32>
    %674 = arith.subf %659, %673 : vector<8x32xf32>
    %cst_163 = arith.constant 9.99999974E-6 : f32
    %675 = vector.broadcast %cst_163 : f32 to vector<8x1xf32>
    %676 = arith.addf %672, %675 : vector<8x1xf32>
    %677 = math.rsqrt %676 : vector<8x1xf32>
    %678 = vector.broadcast %677 : vector<8x1xf32> to vector<8x32xf32>
    %679 = arith.mulf %674, %678 : vector<8x32xf32>
    %680 = vector.broadcast %660 : vector<1x32xf32> to vector<8x32xf32>
    %681 = arith.mulf %679, %680 : vector<8x32xf32>
    %682 = vector.broadcast %661 : vector<1x32xf32> to vector<8x32xf32>
    %683 = arith.addf %681, %682 : vector<8x32xf32>
    %684 = arith.truncf %683 : vector<8x32xf32> to vector<8x32xbf16>
    %cst_164 = arith.constant dense<0.000000e+00> : vector<8x64xf32>
    %685 = tpu.matmul %684, %14, %cst_164 {dimension_numbers = #tpu.dot_dimension_numbers<[1], [0], [0], [1], [0, 0, 1, 1], [], []>} : vector<8x32xbf16>, vector<32x64xbf16>, vector<8x64xf32> -> vector<8x64xf32>
    %686 = vector.broadcast %16 : vector<1x64xf32> to vector<8x64xf32>
    %687 = arith.addf %685, %686 : vector<8x64xf32>
    %cst_165 = arith.constant 0.000000e+00 : f32
    %688 = vector.broadcast %cst_165 : f32 to vector<8x64xf32>
    %689 = arith.maximumf %687, %688 : vector<8x64xf32>
    %690 = arith.truncf %689 : vector<8x64xf32> to vector<8x64xbf16>
    %cst_166 = arith.constant dense<0.000000e+00> : vector<8x32xf32>
    %691 = tpu.matmul %690, %15, %cst_166 {dimension_numbers = #tpu.dot_dimension_numbers<[1], [0], [0], [1], [0, 0, 1, 1], [], []>} : vector<8x64xbf16>, vector<64x32xbf16>, vector<8x32xf32> -> vector<8x32xf32>
    %692 = vector.broadcast %17 : vector<1x32xf32> to vector<8x32xf32>
    %693 = arith.addf %691, %692 : vector<8x32xf32>
    %694 = arith.addf %683, %693 : vector<8x32xf32>
    %695 = vector.extract_strided_slice %18 {offsets = [4, 0], sizes = [1, 32], strides = [1, 1]} : vector<6x32xf32> to vector<1x32xf32>
    %696 = vector.extract_strided_slice %18 {offsets = [5, 0], sizes = [1, 32], strides = [1, 1]} : vector<6x32xf32> to vector<1x32xf32>
    %cst_167 = arith.constant dense<0.000000e+00> : vector<8xf32>
    %697 = vector.multi_reduction <add>, %694, %cst_167 [1] : vector<8x32xf32> to vector<8xf32>
    %698 = vector.shape_cast %697 : vector<8xf32> to vector<8x1xf32>
    %cst_168 = arith.constant 3.200000e+01 : f32
    %699 = vector.broadcast %cst_168 : f32 to vector<8x1xf32>
    %700 = arith.divf %698, %699 : vector<8x1xf32>
    %701 = vector.broadcast %700 : vector<8x1xf32> to vector<8x32xf32>
    %702 = arith.subf %694, %701 : vector<8x32xf32>
    %703 = arith.mulf %702, %702 : vector<8x32xf32>
    %cst_169 = arith.constant dense<0.000000e+00> : vector<8xf32>
    %704 = vector.multi_reduction <add>, %703, %cst_169 [1] : vector<8x32xf32> to vector<8xf32>
    %705 = vector.shape_cast %704 : vector<8xf32> to vector<8x1xf32>
    %cst_170 = arith.constant 3.200000e+01 : f32
    %706 = vector.broadcast %cst_170 : f32 to vector<8x1xf32>
    %707 = arith.divf %705, %706 : vector<8x1xf32>
    %708 = vector.broadcast %700 : vector<8x1xf32> to vector<8x32xf32>
    %709 = arith.subf %694, %708 : vector<8x32xf32>
    %cst_171 = arith.constant 9.99999974E-6 : f32
    %710 = vector.broadcast %cst_171 : f32 to vector<8x1xf32>
    %711 = arith.addf %707, %710 : vector<8x1xf32>
    %712 = math.rsqrt %711 : vector<8x1xf32>
    %713 = vector.broadcast %712 : vector<8x1xf32> to vector<8x32xf32>
    %714 = arith.mulf %709, %713 : vector<8x32xf32>
    %715 = vector.broadcast %695 : vector<1x32xf32> to vector<8x32xf32>
    %716 = arith.mulf %714, %715 : vector<8x32xf32>
    %717 = vector.broadcast %696 : vector<1x32xf32> to vector<8x32xf32>
    %718 = arith.addf %716, %717 : vector<8x32xf32>
    %c0_172 = arith.constant 0 : index
    %c32 = arith.constant 32 : index
    %719 = vector.load %arg13[%c0_172, %c32] : memref<8x64xf32, #tpu.memory_space<vmem>>, vector<8x32xf32>
    tpu.vector_store %arg13[%c0_172, %c32], %718 {strides = array<i32>} : memref<8x64xf32, #tpu.memory_space<vmem>>, vector<8x32xf32>,
    return
  }
}

</mosaic_0001>

<llo_original>
// kernel: transformer_decoder_layer.1
$region0: #{transformer_decoder_layer.1}
  #allocation0 [shape = 'u32[]', space=smem, size = 0x4, offset = 0x4, fixed_abs, tag = 'smem constant byte address 0x4 - core index']
  #allocation1 [shape = 'u32[144,128]{1,0:T(1,128)}', space=vmem, size = 0x12000, scoped, tag = 'internal scratch']
  %s0 = inlined_call_operand.vmem [shape: f32[8,64], index: 0, kind: input, shape index: {}]
  %s1 = inlined_call_operand.vmem [shape: f32[16,64], index: 1, kind: input, shape index: {}]
  %s2 = inlined_call_operand.vmem [shape: f32[8,64], index: 2, kind: input, shape index: {}]
  %s3 = inlined_call_operand.vmem [shape: f32[16,64], index: 3, kind: input, shape index: {}]
  %s4 = inlined_call_operand.vmem [shape: f32[2,8,8], index: 4, kind: input, shape index: {}]
  %s5 = inlined_call_operand.vmem [shape: f32[2,8,16], index: 5, kind: input, shape index: {}]
  %s6 = inlined_call_operand.vmem [shape: bf16[2,32,128], index: 6, kind: input, shape index: {}]
  %s7 = inlined_call_operand.vmem [shape: f32[2,1,128], index: 7, kind: input, shape index: {}]
  %s8 = inlined_call_operand.vmem [shape: bf16[32,64], index: 8, kind: input, shape index: {}]
  %s9 = inlined_call_operand.vmem [shape: f32[1,64], index: 9, kind: input, shape index: {}]
  %s10 = inlined_call_operand.vmem [shape: bf16[64,32], index: 10, kind: input, shape index: {}]
  %s11 = inlined_call_operand.vmem [shape: f32[1,32], index: 11, kind: input, shape index: {}]
  %s12 = inlined_call_operand.vmem [shape: f32[6,32], index: 12, kind: input, shape index: {}]
  %s13 = inlined_call_operand.vmem [shape: f32[8,64], index: 13, kind: output, shape index: {}]
  %s14 = sld [smem:[#allocation0]]
  $region62: #{transformer_decoder_layer.1} parent=0
    _
  %s16 = ssub.s32 1, %s14
  %s17 = scalar_select 0, %s16, %s14
  // Predicated region
  $region2: #{transformer_decoder_layer.1} parent=0 // pred_check
    _
  $region3: #{transformer_decoder_layer.1} parent=0 // pred_check_branch
    %19 = sbr.rel (0) target = $region5
  $region4: #{transformer_decoder_layer.1} parent=0 // pred_region
    _
  $region5: #{transformer_decoder_layer.1} parent=0 // pred_fallthru
    _
  // Predicated region
  $region6: #{transformer_decoder_layer.1} parent=0 // pred_check
    _
  $region7: #{transformer_decoder_layer.1} parent=0 // pred_check_branch
    %21 = sbr.rel (0) target = $region9
  $region8: #{transformer_decoder_layer.1} parent=0 // pred_region
    _
  $region9: #{transformer_decoder_layer.1} parent=0 // pred_fallthru
    _
  // Predicated region
  $region10: #{transformer_decoder_layer.1} parent=0 // pred_check
    _
  $region11: #{transformer_decoder_layer.1} parent=0 // pred_check_branch
    %23 = sbr.rel (0) target = $region13
  $region12: #{transformer_decoder_layer.1} parent=0 // pred_region
    _
  $region13: #{transformer_decoder_layer.1} parent=0 // pred_fallthru
    _
  // Predicated region
  $region14: #{transformer_decoder_layer.1} parent=0 // pred_check
    _
  $region15: #{transformer_decoder_layer.1} parent=0 // pred_check_branch
    %25 = sbr.rel (0) target = $region17
  $region16: #{transformer_decoder_layer.1} parent=0 // pred_region
    _
  $region17: #{transformer_decoder_layer.1} parent=0 // pred_fallthru
    _
  // Predicated region
  $region18: #{transformer_decoder_layer.1} parent=0 // pred_check
    _
  $region19: #{transformer_decoder_layer.1} parent=0 // pred_check_branch
    %27 = sbr.rel (0) target = $region21
  $region20: #{transformer_decoder_layer.1} parent=0 // pred_region
    _
  $region21: #{transformer_decoder_layer.1} parent=0 // pred_fallthru
    _
  // Predicated region
  $region22: #{transformer_decoder_layer.1} parent=0 // pred_check
    _
  $region23: #{transformer_decoder_layer.1} parent=0 // pred_check_branch
    %29 = sbr.rel (0) target = $region25
  $region24: #{transformer_decoder_layer.1} parent=0 // pred_region
    _
  $region25: #{transformer_decoder_layer.1} parent=0 // pred_fallthru
    _
  // Predicated region
  $region26: #{transformer_decoder_layer.1} parent=0 // pred_check
    _
  $region27: #{transformer_decoder_layer.1} parent=0 // pred_check_branch
    %31 = sbr.rel (0) target = $region29
  $region28: #{transformer_decoder_layer.1} parent=0 // pred_region
    _
  $region29: #{transformer_decoder_layer.1} parent=0 // pred_fallthru
    _
  // Predicated region
  $region30: #{transformer_decoder_layer.1} parent=0 // pred_check
    _
  $region31: #{transformer_decoder_layer.1} parent=0 // pred_check_branch
    %33 = sbr.rel (0) target = $region33
  $region32: #{transformer_decoder_layer.1} parent=0 // pred_region
    _
  $region33: #{transformer_decoder_layer.1} parent=0 // pred_fallthru
    _
  // Predicated region
  $region34: #{transformer_decoder_layer.1} parent=0 // pred_check
    _
  $region35: #{transformer_decoder_layer.1} parent=0 // pred_check_branch
    %35 = sbr.rel (0) target = $region37
  $region36: #{transformer_decoder_layer.1} parent=0 // pred_region
    _
  $region37: #{transformer_decoder_layer.1} parent=0 // pred_fallthru
    _
  // Predicated region
  $region38: #{transformer_decoder_layer.1} parent=0 // pred_check
    _
  $region39: #{transformer_decoder_layer.1} parent=0 // pred_check_branch
    %37 = sbr.rel (0) target = $region41
  $region40: #{transformer_decoder_layer.1} parent=0 // pred_region
    _
  $region41: #{transformer_decoder_layer.1} parent=0 // pred_fallthru
    _
  // Predicated region
  $region42: #{transformer_decoder_layer.1} parent=0 // pred_check
    _
  $region43: #{transformer_decoder_layer.1} parent=0 // pred_check_branch
    %39 = sbr.rel (0) target = $region45
  $region44: #{transformer_decoder_layer.1} parent=0 // pred_region
    _
  $region45: #{transformer_decoder_layer.1} parent=0 // pred_fallthru
    _
  // Predicated region
  $region46: #{transformer_decoder_layer.1} parent=0 // pred_check
    _
  $region47: #{transformer_decoder_layer.1} parent=0 // pred_check_branch
    %41 = sbr.rel (0) target = $region49
  $region48: #{transformer_decoder_layer.1} parent=0 // pred_region
    _
  $region49: #{transformer_decoder_layer.1} parent=0 // pred_fallthru
    _
  // Predicated region
  $region50: #{transformer_decoder_layer.1} parent=0 // pred_check
    _
  $region51: #{transformer_decoder_layer.1} parent=0 // pred_check_branch
    %43 = sbr.rel (0) target = $region53
  $region52: #{transformer_decoder_layer.1} parent=0 // pred_region
    _
  $region53: #{transformer_decoder_layer.1} parent=0 // pred_fallthru
    _
  %v45 = vld [vmem:[%s0] sm:$0xff]
  %v46 = vld [vmem:[%s1] sm:$0xff]
  %v47 = vld [vmem:[%s1 + $0x8] sm:$0xff]
  %v48 = vld [vmem:[%s2] sm:$0xff]
  %v49 = vld [vmem:[%s3] sm:$0xff]
  %v50 = vld [vmem:[%s3 + $0x8] sm:$0xff]
  %v51 = vld [vmem:[%s4] sm:$0xff]
  %v52 = vld [vmem:[%s4 + $0x8] sm:$0xff]
  %v53 = vld [vmem:[%s5] sm:$0xff]
  %v54 = vld [vmem:[%s5 + $0x8] sm:$0xff]
  %v55 = vld [vmem:[%s6] sm:$0xf]
  %v56 = vld [vmem:[%s6 + $0x4] sm:$0xf]
  %v57 = vld [vmem:[%s6 + $0x8] sm:$0xf]
  %v58 = vld [vmem:[%s6 + $0xc] sm:$0xf]
  %s59 = scalar_lea.vmem %s6, 16
  %v60 = vld [vmem:[%s59] sm:$0xf]
  %v61 = vld [vmem:[%s59 + $0x4] sm:$0xf]
  %v62 = vld [vmem:[%s59 + $0x8] sm:$0xf]
  %v63 = vld [vmem:[%s59 + $0xc] sm:$0xf]
  %v64 = vld [vmem:[%s7] sm:$0x1]
  %s65 = scalar_lea.vmem %s7, 1
  %v66 = vld [vmem:[%s65] sm:$0x1]
  %v67 = vld [vmem:[%s8] sm:$0xf]
  %v68 = vld [vmem:[%s8 + $0x4] sm:$0xf]
  %v69 = vld [vmem:[%s8 + $0x8] sm:$0xf]
  %v70 = vld [vmem:[%s8 + $0xc] sm:$0xf]
  %v71 = vld [vmem:[%s10] sm:$0xf]
  %v72 = vld [vmem:[%s10 + $0x4] sm:$0xf]
  %v73 = vld [vmem:[%s10 + $0x8] sm:$0xf]
  %v74 = vld [vmem:[%s10 + $0xc] sm:$0xf]
  %v75 = vld [vmem:[%s10 + $0x10] sm:$0xf]
  %v76 = vld [vmem:[%s10 + $0x14] sm:$0xf]
  %v77 = vld [vmem:[%s10 + $0x18] sm:$0xf]
  %v78 = vld [vmem:[%s10 + $0x1c] sm:$0xf]
  %v79 = vld [vmem:[%s9] sm:$0x1]
  %v80 = vld [vmem:[%s11] sm:$0x1]
  %v81 = vld [vmem:[%s12] sm:$0x3f]
  %v82 = vlaneseq
  %v83 = vand.u32 %v82, 127
  %vm84 = vcmp.ge.s32.totalorder %v83, 0
  %vm85 = vcmp.lt.s32.totalorder %v83, 8
  %vm86 = vmand %vm84, %vm85
  %v87 = vsel %vm86, 1, 0
  %v88 = vcvt.s32.f32 %v87
  %vm89 = vcmp.ge.s32.totalorder %v83, 8
  %vm90 = vcmp.lt.s32.totalorder %v83, 16
  %vm91 = vmand %vm89, %vm90
  %v92 = vsel %vm91, 1, 0
  %v93 = vcvt.s32.f32 %v92
  %vm94 = vcmp.ge.s32.totalorder %v83, 16
  %vm95 = vcmp.lt.s32.totalorder %v83, 24
  %vm96 = vmand %vm94, %vm95
  %v97 = vsel %vm96, 1, 0
  %v98 = vcvt.s32.f32 %v97
  %vm99 = vcmp.ge.s32.totalorder %v83, 24
  %vm100 = vcmp.lt.s32.totalorder %v83, 32
  %vm101 = vmand %vm99, %vm100
  %v102 = vsel %vm101, 1, 0
  %v103 = vcvt.s32.f32 %v102
  %v104 = vadd.f32 %v45, %v48
  %v105 = vadd.f32 %v46, %v49
  %v106 = vadd.f32 %v47, %v50
  %v107 = vpack.c.bf16 %v104, %v104
  %v109 = vlaneseq
  %v110 = vshrl.u32 %v109, 7
  %v111 = vsub.s32 0, %v110
  %v112 = vrot.slane %v64, %v111
  %v118 = vunpack.c.l.b16 %v55
  %v119 = vunpack.c.l.b16 %v56
  %v120 = vunpack.c.l.b16 %v57
  %v121 = vunpack.c.l.b16 %v58
  %v122 = vpack.c.b16 %v119, %v118
  %v123 = vpack.c.b16 %v121, %v120
  %vm126 = vcmask 261120
  %v128 = vsel %vm126, %v107, 0
  %130 = vmatprep.subr.bf16.mxu0 0
  %131 = vmatpush1.bf16.msra.mxu0 0
  %132 = vmatprep.subr.bf16.mxu0 0
  %133 = vmatpush1.bf16.msra.mxu0 0
  %134 = vmatprep.subr.bf16.mxu0 0
  %135 = vmatpush1.bf16.msra.mxu0 0
  %136 = vmatprep.subr.bf16.mxu0 0
  %137 = vmatpush1.bf16.msra.mxu0 0
  %138 = vmatprep.subr.bf16.mxu0 0
  %139 = vmatpush1.bf16.msra.mxu0 0
  %140 = vmatprep.subr.bf16.mxu0 0
  %141 = vmatpush1.bf16.msra.mxu0 0
  %142 = vmatprep.subr.bf16.mxu0 0
  %143 = vmatpush1.bf16.msra.mxu0 %v123
  %144 = vmatprep.subr.bf16.mxu0 0
  %145 = vmatpush1.bf16.msra.mxu0 %v122
  %146 = vmatprep.subr.bf16.mxu0 0
  %147 = vmatpush2.bf16.msra.mxu0 0
  %148 = vmatprep.subr.bf16.mxu0 0
  %149 = vmatpush2.bf16.msra.mxu0 0
  %150 = vmatprep.subr.bf16.mxu0 0
  %151 = vmatpush2.bf16.msra.mxu0 0
  %152 = vmatprep.subr.bf16.mxu0 0
  %153 = vmatpush2.bf16.msra.mxu0 0
  %154 = vmatprep.subr.bf16.mxu0 0
  %155 = vmatpush2.bf16.msra.mxu0 0
  %156 = vmatprep.subr.bf16.mxu0 0
  %157 = vmatpush2.bf16.msra.mxu0 0
  %158 = vmatprep.subr.bf16.mxu0 0
  %159 = vmatpush2.bf16.msra.mxu0 0
  %160 = vmatprep.subr.bf16.mxu0 0
  %161 = vmatpush2.bf16.msra.mxu0 0
  %162 = vmatprep.mubr.bf16.mxu0 0
  %163 = vmatmul.mubr.bf16.gmra.mxu0 %v128
  %v164 = vpop.f32.mrf.mxu0
  %v165 = vadd.f32 %v112, %v164
  %v166 = vpop.f32.mrf.mxu0
  %v167 = vpop.f32.mrf.mxu0
  %v168 = vpop.f32.mrf.mxu0
  %169 = vdwg.mxu0
  %v170 = vpack.c.bf16 %v45, %v45
  %171 = vrot.lane.b32.xlu0 %v122, 64
  %v172 = vpop.permute.xlu0 %171
  %173 = vrot.lane.b32.xlu0 %v123, 64
  %v174 = vpop.permute.xlu0 %173
  %177 = vrot.lane.b32.xlu0 %v112, 64
  %v178 = vpop.permute.xlu0 %177
  %v181 = vsel %vm126, %v170, 0
  %183 = vmatprep.subr.bf16.mxu0 0
  %184 = vmatpush1.bf16.msra.mxu0 0
  %185 = vmatprep.subr.bf16.mxu0 0
  %186 = vmatpush1.bf16.msra.mxu0 0
  %187 = vmatprep.subr.bf16.mxu0 0
  %188 = vmatpush1.bf16.msra.mxu0 0
  %189 = vmatprep.subr.bf16.mxu0 0
  %190 = vmatpush1.bf16.msra.mxu0 0
  %191 = vmatprep.subr.bf16.mxu0 0
  %192 = vmatpush1.bf16.msra.mxu0 0
  %193 = vmatprep.subr.bf16.mxu0 0
  %194 = vmatpush1.bf16.msra.mxu0 0
  %195 = vmatprep.subr.bf16.mxu0 0
  %196 = vmatpush1.bf16.msra.mxu0 %v174
  %197 = vmatprep.subr.bf16.mxu0 0
  %198 = vmatpush1.bf16.msra.mxu0 %v172
  %199 = vmatprep.subr.bf16.mxu0 0
  %200 = vmatpush2.bf16.msra.mxu0 0
  %201 = vmatprep.subr.bf16.mxu0 0
  %202 = vmatpush2.bf16.msra.mxu0 0
  %203 = vmatprep.subr.bf16.mxu0 0
  %204 = vmatpush2.bf16.msra.mxu0 0
  %205 = vmatprep.subr.bf16.mxu0 0
  %206 = vmatpush2.bf16.msra.mxu0 0
  %207 = vmatprep.subr.bf16.mxu0 0
  %208 = vmatpush2.bf16.msra.mxu0 0
  %209 = vmatprep.subr.bf16.mxu0 0
  %210 = vmatpush2.bf16.msra.mxu0 0
  %211 = vmatprep.subr.bf16.mxu0 0
  %212 = vmatpush2.bf16.msra.mxu0 0
  %213 = vmatprep.subr.bf16.mxu0 0
  %214 = vmatpush2.bf16.msra.mxu0 0
  %215 = vmatprep.mubr.bf16.mxu0 0
  %216 = vmatmul.mubr.bf16.gmra.mxu0 %v181
  %v217 = vpop.f32.mrf.mxu0
  %v218 = vadd.f32 %v178, %v217
  %v219 = vpop.f32.mrf.mxu0
  %v220 = vpop.f32.mrf.mxu0
  %v221 = vpop.f32.mrf.mxu0
  %222 = vdwg.mxu0
  %v223 = vpack.c.bf16 %v165, %v165
  %225 = vrot.lane.b32.xlu0 %v223, 96
  %v226 = vpop.permute.xlu0 %225
  %vm227 = vcmask 64512
  %v229 = vsel %vm227, %v223, 0
  %v232 = vsel %vm227, %v226, 0
  %234 = vmatprep.subr.bf16.mxu0 0
  %235 = vmatpush1.bf16.xpose.msra.mxu0 0
  %236 = vmatprep.subr.bf16.mxu0 0
  %237 = vmatpush1.bf16.xpose.msra.mxu0 0
  %238 = vmatprep.subr.bf16.mxu0 0
  %239 = vmatpush1.bf16.xpose.msra.mxu0 0
  %240 = vmatprep.subr.bf16.mxu0 0
  %241 = vmatpush1.bf16.xpose.msra.mxu0 0
  %242 = vmatprep.subr.bf16.mxu0 0
  %243 = vmatpush1.bf16.xpose.msra.mxu0 0
  %244 = vmatprep.subr.bf16.mxu0 0
  %245 = vmatpush1.bf16.xpose.msra.mxu0 0
  %246 = vmatprep.subr.bf16.mxu0 0
  %247 = vmatpush1.bf16.xpose.msra.mxu0 0
  %248 = vmatprep.subr.bf16.mxu0 0
  %249 = vmatpush1.bf16.xpose.msra.mxu0 %v232
  %250 = vmatprep.subr.bf16.mxu0 0
  %251 = vmatpush2.bf16.xpose.msra.mxu0 0
  %252 = vmatprep.subr.bf16.mxu0 0
  %253 = vmatpush2.bf16.xpose.msra.mxu0 0
  %254 = vmatprep.subr.bf16.mxu0 0
  %255 = vmatpush2.bf16.xpose.msra.mxu0 0
  %256 = vmatprep.subr.bf16.mxu0 0
  %257 = vmatpush2.bf16.xpose.msra.mxu0 0
  %258 = vmatprep.subr.bf16.mxu0 0
  %259 = vmatpush2.bf16.xpose.msra.mxu0 0
  %260 = vmatprep.subr.bf16.mxu0 0
  %261 = vmatpush2.bf16.xpose.msra.mxu0 0
  %262 = vmatprep.subr.bf16.mxu0 0
  %263 = vmatpush2.bf16.xpose.msra.mxu0 0
  %264 = vmatprep.subr.bf16.mxu0 0
  %265 = vmatpush2.bf16.xpose.msra.mxu0 0
  %266 = vmatprep.mubr.bf16.mxu0 0
  %267 = vmatmul.mubr.bf16.gmra.mxu0 %v229
  %v268 = vpop.f32.mrf.mxu0
  %v269 = vadd.f32 0.0, %v268
  %v270 = vpop.f32.mrf.mxu0
  %v271 = vpop.f32.mrf.mxu0
  %v272 = vpop.f32.mrf.mxu0
  %273 = vdwg.mxu0
  %v274 = vmul.f32 %v269, 0.35355338
  %v275 = vadd.f32 %v274, %v51
  %v276 = vsel %vm227, %v275, -inf
  %277 = vmax.xlane.f32.xlu0 %v276
  %v278 = vpop.xlane.xlu0 %277
  %v279 = vsub.f32 %v275, %v278
  %v280 = vmul.f32 %v279, 1.442695
  %v281 = vpow.pop %v280
  %v282 = vsel %vm227, %v281, 0.0
  %283 = vadd.xlane.f32.xlu0 %v282
  %v284 = vpop.xlane.xlu0 %283
  %v285 = vrcp.pop %v284
  %v286 = vmul.f32 %v281, %v285
  %v287 = vpack.c.bf16 %v286, %v286
  %v288 = vmul.f32 %v218, %v88
  %v289 = vpack.c.bf16 %v288, %v288
  %290 = vrot.lane.b32.xlu0 %v223, 120
  %v291 = vpop.permute.xlu0 %290
  %292 = vrot.lane.b32.xlu0 %v223, 88
  %v293 = vpop.permute.xlu0 %292
  %v295 = vsel %vm227, %v291, 0
  %v298 = vsel %vm227, %v293, 0
  %300 = vmatprep.subr.bf16.mxu0 0
  %301 = vmatpush1.bf16.xpose.msra.mxu0 0
  %302 = vmatprep.subr.bf16.mxu0 0
  %303 = vmatpush1.bf16.xpose.msra.mxu0 0
  %304 = vmatprep.subr.bf16.mxu0 0
  %305 = vmatpush1.bf16.xpose.msra.mxu0 0
  %306 = vmatprep.subr.bf16.mxu0 0
  %307 = vmatpush1.bf16.xpose.msra.mxu0 0
  %308 = vmatprep.subr.bf16.mxu0 0
  %309 = vmatpush1.bf16.xpose.msra.mxu0 0
  %310 = vmatprep.subr.bf16.mxu0 0
  %311 = vmatpush1.bf16.xpose.msra.mxu0 0
  %312 = vmatprep.subr.bf16.mxu0 0
  %313 = vmatpush1.bf16.xpose.msra.mxu0 0
  %314 = vmatprep.subr.bf16.mxu0 0
  %315 = vmatpush1.bf16.xpose.msra.mxu0 %v298
  %316 = vmatprep.subr.bf16.mxu0 0
  %317 = vmatpush2.bf16.xpose.msra.mxu0 0
  %318 = vmatprep.subr.bf16.mxu0 0
  %319 = vmatpush2.bf16.xpose.msra.mxu0 0
  %320 = vmatprep.subr.bf16.mxu0 0
  %321 = vmatpush2.bf16.xpose.msra.mxu0 0
  %322 = vmatprep.subr.bf16.mxu0 0
  %323 = vmatpush2.bf16.xpose.msra.mxu0 0
  %324 = vmatprep.subr.bf16.mxu0 0
  %325 = vmatpush2.bf16.xpose.msra.mxu0 0
  %326 = vmatprep.subr.bf16.mxu0 0
  %327 = vmatpush2.bf16.xpose.msra.mxu0 0
  %328 = vmatprep.subr.bf16.mxu0 0
  %329 = vmatpush2.bf16.xpose.msra.mxu0 0
  %330 = vmatprep.subr.bf16.mxu0 0
  %331 = vmatpush2.bf16.xpose.msra.mxu0 0
  %332 = vmatprep.mubr.bf16.mxu0 0
  %333 = vmatmul.mubr.bf16.gmra.mxu0 %v295
  %v334 = vpop.f32.mrf.mxu0
  %v335 = vadd.f32 0.0, %v334
  %v336 = vpop.f32.mrf.mxu0
  %v337 = vpop.f32.mrf.mxu0
  %v338 = vpop.f32.mrf.mxu0
  %339 = vdwg.mxu0
  %v340 = vmul.f32 %v335, 0.35355338
  %v341 = vadd.f32 %v340, %v51
  %v342 = vsel %vm227, %v341, -inf
  %343 = vmax.xlane.f32.xlu0 %v342
  %v344 = vpop.xlane.xlu0 %343
  %v345 = vsub.f32 %v341, %v344
  %v346 = vmul.f32 %v345, 1.442695
  %v347 = vpow.pop %v346
  %v348 = vsel %vm227, %v347, 0.0
  %349 = vadd.xlane.f32.xlu0 %v348
  %v350 = vpop.xlane.xlu0 %349
  %v351 = vrcp.pop %v350
  %v352 = vmul.f32 %v347, %v351
  %v353 = vpack.c.bf16 %v352, %v352
  %v354 = vmul.f32 %v218, %v93
  %v355 = vpack.c.bf16 %v354, %v354
  %v357 = vsel %vm227, %v353, 0
  %vm359 = vcmask 1043456
  %v361 = vsel %vm359, %v355, 0
  %363 = vmatprep.subr.bf16.mxu0 0
  %364 = vmatpush1.bf16.msra.mxu0 0
  %365 = vmatprep.subr.bf16.mxu0 0
  %366 = vmatpush1.bf16.msra.mxu0 0
  %367 = vmatprep.subr.bf16.mxu0 0
  %368 = vmatpush1.bf16.msra.mxu0 0
  %369 = vmatprep.subr.bf16.mxu0 0
  %370 = vmatpush1.bf16.msra.mxu0 0
  %371 = vmatprep.subr.bf16.mxu0 0
  %372 = vmatpush1.bf16.msra.mxu0 0
  %373 = vmatprep.subr.bf16.mxu0 0
  %374 = vmatpush1.bf16.msra.mxu0 0
  %375 = vmatprep.subr.bf16.mxu0 0
  %376 = vmatpush1.bf16.msra.mxu0 0
  %377 = vmatprep.subr.bf16.mxu0 0
  %378 = vmatpush1.bf16.msra.mxu0 %v361
  %379 = vmatprep.subr.bf16.mxu0 0
  %380 = vmatpush2.bf16.msra.mxu0 0
  %381 = vmatprep.subr.bf16.mxu0 0
  %382 = vmatpush2.bf16.msra.mxu0 0
  %383 = vmatprep.subr.bf16.mxu0 0
  %384 = vmatpush2.bf16.msra.mxu0 0
  %385 = vmatprep.subr.bf16.mxu0 0
  %386 = vmatpush2.bf16.msra.mxu0 0
  %387 = vmatprep.subr.bf16.mxu0 0
  %388 = vmatpush2.bf16.msra.mxu0 0
  %389 = vmatprep.subr.bf16.mxu0 0
  %390 = vmatpush2.bf16.msra.mxu0 0
  %391 = vmatprep.subr.bf16.mxu0 0
  %392 = vmatpush2.bf16.msra.mxu0 0
  %393 = vmatprep.subr.bf16.mxu0 0
  %394 = vmatpush2.bf16.msra.mxu0 0
  %395 = vmatprep.mubr.bf16.mxu0 0
  %396 = vmatmul.mubr.bf16.gmra.mxu0 %v357
  %v397 = vpop.f32.mrf.mxu0
  %v398 = vadd.f32 0.0, %v397
  %v399 = vpop.f32.mrf.mxu0
  %v400 = vpop.f32.mrf.mxu0
  %v401 = vpop.f32.mrf.mxu0
  %402 = vdwg.mxu0
  %v404 = vsel %vm227, %v287, 0
  %v407 = vsel %vm359, %v289, 0
  %409 = vmatprep.subr.bf16.mxu0 0
  %410 = vmatpush1.bf16.msra.mxu0 0
  %411 = vmatprep.subr.bf16.mxu0 0
  %412 = vmatpush1.bf16.msra.mxu0 0
  %413 = vmatprep.subr.bf16.mxu0 0
  %414 = vmatpush1.bf16.msra.mxu0 0
  %415 = vmatprep.subr.bf16.mxu0 0
  %416 = vmatpush1.bf16.msra.mxu0 0
  %417 = vmatprep.subr.bf16.mxu0 0
  %418 = vmatpush1.bf16.msra.mxu0 0
  %419 = vmatprep.subr.bf16.mxu0 0
  %420 = vmatpush1.bf16.msra.mxu0 0
  %421 = vmatprep.subr.bf16.mxu0 0
  %422 = vmatpush1.bf16.msra.mxu0 0
  %423 = vmatprep.subr.bf16.mxu0 0
  %424 = vmatpush1.bf16.msra.mxu0 %v407
  %425 = vmatprep.subr.bf16.mxu0 0
  %426 = vmatpush2.bf16.msra.mxu0 0
  %427 = vmatprep.subr.bf16.mxu0 0
  %428 = vmatpush2.bf16.msra.mxu0 0
  %429 = vmatprep.subr.bf16.mxu0 0
  %430 = vmatpush2.bf16.msra.mxu0 0
  %431 = vmatprep.subr.bf16.mxu0 0
  %432 = vmatpush2.bf16.msra.mxu0 0
  %433 = vmatprep.subr.bf16.mxu0 0
  %434 = vmatpush2.bf16.msra.mxu0 0
  %435 = vmatprep.subr.bf16.mxu0 0
  %436 = vmatpush2.bf16.msra.mxu0 0
  %437 = vmatprep.subr.bf16.mxu0 0
  %438 = vmatpush2.bf16.msra.mxu0 0
  %439 = vmatprep.subr.bf16.mxu0 0
  %440 = vmatpush2.bf16.msra.mxu0 0
  %441 = vmatprep.mubr.bf16.mxu0 0
  %442 = vmatmul.mubr.bf16.gmra.mxu0 %v404
  %v443 = vpop.f32.mrf.mxu0
  %v444 = vadd.f32 %v398, %v443
  %v445 = vpop.f32.mrf.mxu0
  %v446 = vpop.f32.mrf.mxu0
  %v447 = vpop.f32.mrf.mxu0
  %448 = vdwg.mxu0
  %449 = vrot.lane.b32.xlu0 %v223, 112
  %v450 = vpop.permute.xlu0 %449
  %451 = vrot.lane.b32.xlu0 %v223, 80
  %v452 = vpop.permute.xlu0 %451
  %v454 = vsel %vm227, %v450, 0
  %v457 = vsel %vm227, %v452, 0
  %459 = vmatprep.subr.bf16.mxu0 0
  %460 = vmatpush1.bf16.xpose.msra.mxu0 0
  %461 = vmatprep.subr.bf16.mxu0 0
  %462 = vmatpush1.bf16.xpose.msra.mxu0 0
  %463 = vmatprep.subr.bf16.mxu0 0
  %464 = vmatpush1.bf16.xpose.msra.mxu0 0
  %465 = vmatprep.subr.bf16.mxu0 0
  %466 = vmatpush1.bf16.xpose.msra.mxu0 0
  %467 = vmatprep.subr.bf16.mxu0 0
  %468 = vmatpush1.bf16.xpose.msra.mxu0 0
  %469 = vmatprep.subr.bf16.mxu0 0
  %470 = vmatpush1.bf16.xpose.msra.mxu0 0
  %471 = vmatprep.subr.bf16.mxu0 0
  %472 = vmatpush1.bf16.xpose.msra.mxu0 0
  %473 = vmatprep.subr.bf16.mxu0 0
  %474 = vmatpush1.bf16.xpose.msra.mxu0 %v457
  %475 = vmatprep.subr.bf16.mxu0 0
  %476 = vmatpush2.bf16.xpose.msra.mxu0 0
  %477 = vmatprep.subr.bf16.mxu0 0
  %478 = vmatpush2.bf16.xpose.msra.mxu0 0
  %479 = vmatprep.subr.bf16.mxu0 0
  %480 = vmatpush2.bf16.xpose.msra.mxu0 0
  %481 = vmatprep.subr.bf16.mxu0 0
  %482 = vmatpush2.bf16.xpose.msra.mxu0 0
  %483 = vmatprep.subr.bf16.mxu0 0
  %484 = vmatpush2.bf16.xpose.msra.mxu0 0
  %485 = vmatprep.subr.bf16.mxu0 0
  %486 = vmatpush2.bf16.xpose.msra.mxu0 0
  %487 = vmatprep.subr.bf16.mxu0 0
  %488 = vmatpush2.bf16.xpose.msra.mxu0 0
  %489 = vmatprep.subr.bf16.mxu0 0
  %490 = vmatpush2.bf16.xpose.msra.mxu0 0
  %491 = vmatprep.mubr.bf16.mxu0 0
  %492 = vmatmul.mubr.bf16.gmra.mxu0 %v454
  %v493 = vpop.f32.mrf.mxu0
  %v494 = vadd.f32 0.0, %v493
  %v495 = vpop.f32.mrf.mxu0
  %v496 = vpop.f32.mrf.mxu0
  %v497 = vpop.f32.mrf.mxu0
  %498 = vdwg.mxu0
  %v499 = vmul.f32 %v494, 0.35355338
  %v500 = vadd.f32 %v499, %v51
  %v501 = vsel %vm227, %v500, -inf
  %502 = vmax.xlane.f32.xlu0 %v501
  %v503 = vpop.xlane.xlu0 %502
  %v504 = vsub.f32 %v500, %v503
  %v505 = vmul.f32 %v504, 1.442695
  %v506 = vpow.pop %v505
  %v507 = vsel %vm227, %v506, 0.0
  %508 = vadd.xlane.f32.xlu0 %v507
  %v509 = vpop.xlane.xlu0 %508
  %v510 = vrcp.pop %v509
  %v511 = vmul.f32 %v506, %v510
  %v512 = vpack.c.bf16 %v511, %v511
  %v513 = vmul.f32 %v218, %v98
  %v514 = vpack.c.bf16 %v513, %v513
  %v516 = vsel %vm227, %v512, 0
  %v519 = vsel %vm359, %v514, 0
  %521 = vmatprep.subr.bf16.mxu0 0
  %522 = vmatpush1.bf16.msra.mxu0 0
  %523 = vmatprep.subr.bf16.mxu0 0
  %524 = vmatpush1.bf16.msra.mxu0 0
  %525 = vmatprep.subr.bf16.mxu0 0
  %526 = vmatpush1.bf16.msra.mxu0 0
  %527 = vmatprep.subr.bf16.mxu0 0
  %528 = vmatpush1.bf16.msra.mxu0 0
  %529 = vmatprep.subr.bf16.mxu0 0
  %530 = vmatpush1.bf16.msra.mxu0 0
  %531 = vmatprep.subr.bf16.mxu0 0
  %532 = vmatpush1.bf16.msra.mxu0 0
  %533 = vmatprep.subr.bf16.mxu0 0
  %534 = vmatpush1.bf16.msra.mxu0 0
  %535 = vmatprep.subr.bf16.mxu0 0
  %536 = vmatpush1.bf16.msra.mxu0 %v519
  %537 = vmatprep.subr.bf16.mxu0 0
  %538 = vmatpush2.bf16.msra.mxu0 0
  %539 = vmatprep.subr.bf16.mxu0 0
  %540 = vmatpush2.bf16.msra.mxu0 0
  %541 = vmatprep.subr.bf16.mxu0 0
  %542 = vmatpush2.bf16.msra.mxu0 0
  %543 = vmatprep.subr.bf16.mxu0 0
  %544 = vmatpush2.bf16.msra.mxu0 0
  %545 = vmatprep.subr.bf16.mxu0 0
  %546 = vmatpush2.bf16.msra.mxu0 0
  %547 = vmatprep.subr.bf16.mxu0 0
  %548 = vmatpush2.bf16.msra.mxu0 0
  %549 = vmatprep.subr.bf16.mxu0 0
  %550 = vmatpush2.bf16.msra.mxu0 0
  %551 = vmatprep.subr.bf16.mxu0 0
  %552 = vmatpush2.bf16.msra.mxu0 0
  %553 = vmatprep.mubr.bf16.mxu0 0
  %554 = vmatmul.mubr.bf16.gmra.mxu0 %v516
  %v555 = vpop.f32.mrf.mxu0
  %v556 = vadd.f32 0.0, %v555
  %v557 = vpop.f32.mrf.mxu0
  %v558 = vpop.f32.mrf.mxu0
  %v559 = vpop.f32.mrf.mxu0
  %560 = vdwg.mxu0
  %v561 = vadd.f32 %v444, %v556
  %562 = vrot.lane.b32.xlu0 %v223, 104
  %v563 = vpop.permute.xlu0 %562
  %564 = vrot.lane.b32.xlu0 %v223, 72
  %v565 = vpop.permute.xlu0 %564
  %v567 = vsel %vm227, %v563, 0
  %v570 = vsel %vm227, %v565, 0
  %572 = vmatprep.subr.bf16.mxu0 0
  %573 = vmatpush1.bf16.xpose.msra.mxu0 0
  %574 = vmatprep.subr.bf16.mxu0 0
  %575 = vmatpush1.bf16.xpose.msra.mxu0 0
  %576 = vmatprep.subr.bf16.mxu0 0
  %577 = vmatpush1.bf16.xpose.msra.mxu0 0
  %578 = vmatprep.subr.bf16.mxu0 0
  %579 = vmatpush1.bf16.xpose.msra.mxu0 0
  %580 = vmatprep.subr.bf16.mxu0 0
  %581 = vmatpush1.bf16.xpose.msra.mxu0 0
  %582 = vmatprep.subr.bf16.mxu0 0
  %583 = vmatpush1.bf16.xpose.msra.mxu0 0
  %584 = vmatprep.subr.bf16.mxu0 0
  %585 = vmatpush1.bf16.xpose.msra.mxu0 0
  %586 = vmatprep.subr.bf16.mxu0 0
  %587 = vmatpush1.bf16.xpose.msra.mxu0 %v570
  %588 = vmatprep.subr.bf16.mxu0 0
  %589 = vmatpush2.bf16.xpose.msra.mxu0 0
  %590 = vmatprep.subr.bf16.mxu0 0
  %591 = vmatpush2.bf16.xpose.msra.mxu0 0
  %592 = vmatprep.subr.bf16.mxu0 0
  %593 = vmatpush2.bf16.xpose.msra.mxu0 0
  %594 = vmatprep.subr.bf16.mxu0 0
  %595 = vmatpush2.bf16.xpose.msra.mxu0 0
  %596 = vmatprep.subr.bf16.mxu0 0
  %597 = vmatpush2.bf16.xpose.msra.mxu0 0
  %598 = vmatprep.subr.bf16.mxu0 0
  %599 = vmatpush2.bf16.xpose.msra.mxu0 0
  %600 = vmatprep.subr.bf16.mxu0 0
  %601 = vmatpush2.bf16.xpose.msra.mxu0 0
  %602 = vmatprep.subr.bf16.mxu0 0
  %603 = vmatpush2.bf16.xpose.msra.mxu0 0
  %604 = vmatprep.mubr.bf16.mxu0 0
  %605 = vmatmul.mubr.bf16.gmra.mxu0 %v567
  %v606 = vpop.f32.mrf.mxu0
  %v607 = vadd.f32 0.0, %v606
  %v608 = vpop.f32.mrf.mxu0
  %v609 = vpop.f32.mrf.mxu0
  %v610 = vpop.f32.mrf.mxu0
  %611 = vdwg.mxu0
  %v612 = vmul.f32 %v607, 0.35355338
  %v613 = vadd.f32 %v612, %v51
  %v614 = vsel %vm227, %v613, -inf
  %615 = vmax.xlane.f32.xlu0 %v614
  %v616 = vpop.xlane.xlu0 %615
  %v617 = vsub.f32 %v613, %v616
  %v618 = vmul.f32 %v617, 1.442695
  %v619 = vpow.pop %v618
  %v620 = vsel %vm227, %v619, 0.0
  %621 = vadd.xlane.f32.xlu0 %v620
  %v622 = vpop.xlane.xlu0 %621
  %v623 = vrcp.pop %v622
  %v624 = vmul.f32 %v619, %v623
  %v625 = vpack.c.bf16 %v624, %v624
  %v626 = vmul.f32 %v218, %v103
  %v627 = vpack.c.bf16 %v626, %v626
  %v629 = vsel %vm227, %v625, 0
  %v632 = vsel %vm359, %v627, 0
  %634 = vmatprep.subr.bf16.mxu0 0
  %635 = vmatpush1.bf16.msra.mxu0 0
  %636 = vmatprep.subr.bf16.mxu0 0
  %637 = vmatpush1.bf16.msra.mxu0 0
  %638 = vmatprep.subr.bf16.mxu0 0
  %639 = vmatpush1.bf16.msra.mxu0 0
  %640 = vmatprep.subr.bf16.mxu0 0
  %641 = vmatpush1.bf16.msra.mxu0 0
  %642 = vmatprep.subr.bf16.mxu0 0
  %643 = vmatpush1.bf16.msra.mxu0 0
  %644 = vmatprep.subr.bf16.mxu0 0
  %645 = vmatpush1.bf16.msra.mxu0 0
  %646 = vmatprep.subr.bf16.mxu0 0
  %647 = vmatpush1.bf16.msra.mxu0 0
  %648 = vmatprep.subr.bf16.mxu0 0
  %649 = vmatpush1.bf16.msra.mxu0 %v632
  %650 = vmatprep.subr.bf16.mxu0 0
  %651 = vmatpush2.bf16.msra.mxu0 0
  %652 = vmatprep.subr.bf16.mxu0 0
  %653 = vmatpush2.bf16.msra.mxu0 0
  %654 = vmatprep.subr.bf16.mxu0 0
  %655 = vmatpush2.bf16.msra.mxu0 0
  %656 = vmatprep.subr.bf16.mxu0 0
  %657 = vmatpush2.bf16.msra.mxu0 0
  %658 = vmatprep.subr.bf16.mxu0 0
  %659 = vmatpush2.bf16.msra.mxu0 0
  %660 = vmatprep.subr.bf16.mxu0 0
  %661 = vmatpush2.bf16.msra.mxu0 0
  %662 = vmatprep.subr.bf16.mxu0 0
  %663 = vmatpush2.bf16.msra.mxu0 0
  %664 = vmatprep.subr.bf16.mxu0 0
  %665 = vmatpush2.bf16.msra.mxu0 0
  %666 = vmatprep.mubr.bf16.mxu0 0
  %667 = vmatmul.mubr.bf16.gmra.mxu0 %v629
  %v668 = vpop.f32.mrf.mxu0
  %v669 = vadd.f32 0.0, %v668
  %v670 = vpop.f32.mrf.mxu0
  %v671 = vpop.f32.mrf.mxu0
  %v672 = vpop.f32.mrf.mxu0
  %673 = vdwg.mxu0
  %v674 = vadd.f32 %v561, %v669
  %v675 = vpack.c.bf16 %v674, %v674
  %676 = vrot.lane.b32.xlu0 %v122, 32
  %v677 = vpop.permute.xlu0 %676
  %678 = vrot.lane.b32.xlu0 %v123, 32
  %v679 = vpop.permute.xlu0 %678
  %682 = vrot.lane.b32.xlu0 %v112, 32
  %v683 = vpop.permute.xlu0 %682
  %v686 = vsel %vm126, %v675, 0
  %688 = vmatprep.subr.bf16.mxu0 0
  %689 = vmatpush1.bf16.msra.mxu0 0
  %690 = vmatprep.subr.bf16.mxu0 0
  %691 = vmatpush1.bf16.msra.mxu0 0
  %692 = vmatprep.subr.bf16.mxu0 0
  %693 = vmatpush1.bf16.msra.mxu0 0
  %694 = vmatprep.subr.bf16.mxu0 0
  %695 = vmatpush1.bf16.msra.mxu0 0
  %696 = vmatprep.subr.bf16.mxu0 0
  %697 = vmatpush1.bf16.msra.mxu0 0
  %698 = vmatprep.subr.bf16.mxu0 0
  %699 = vmatpush1.bf16.msra.mxu0 0
  %700 = vmatprep.subr.bf16.mxu0 0
  %701 = vmatpush1.bf16.msra.mxu0 %v679
  %702 = vmatprep.subr.bf16.mxu0 0
  %703 = vmatpush1.bf16.msra.mxu0 %v677
  %704 = vmatprep.subr.bf16.mxu0 0
  %705 = vmatpush2.bf16.msra.mxu0 0
  %706 = vmatprep.subr.bf16.mxu0 0
  %707 = vmatpush2.bf16.msra.mxu0 0
  %708 = vmatprep.subr.bf16.mxu0 0
  %709 = vmatpush2.bf16.msra.mxu0 0
  %710 = vmatprep.subr.bf16.mxu0 0
  %711 = vmatpush2.bf16.msra.mxu0 0
  %712 = vmatprep.subr.bf16.mxu0 0
  %713 = vmatpush2.bf16.msra.mxu0 0
  %714 = vmatprep.subr.bf16.mxu0 0
  %715 = vmatpush2.bf16.msra.mxu0 0
  %716 = vmatprep.subr.bf16.mxu0 0
  %717 = vmatpush2.bf16.msra.mxu0 0
  %718 = vmatprep.subr.bf16.mxu0 0
  %719 = vmatpush2.bf16.msra.mxu0 0
  %720 = vmatprep.mubr.bf16.mxu0 0
  %721 = vmatmul.mubr.bf16.gmra.mxu0 %v686
  %v722 = vpop.f32.mrf.mxu0
  %v723 = vadd.f32 %v683, %v722
  %v724 = vpop.f32.mrf.mxu0
  %v725 = vpop.f32.mrf.mxu0
  %v726 = vpop.f32.mrf.mxu0
  %727 = vdwg.mxu0
  %v728 = vadd.f32 %v45, %v723
  %v729 = vsel %vm126, %v728, 0.0
  %730 = vadd.xlane.f32.xlu0 %v729
  %v731 = vpop.xlane.xlu0 %730
  %v732 = vrcp.pop 32.0
  %v733 = vmul.f32 %v731, %v732
  %v734 = vsub.f32 %v728, %v733
  %v735 = vmul.f32 %v734, %v734
  %v736 = vsel %vm126, %v735, 0.0
  %737 = vadd.xlane.f32.xlu0 %v736
  %v738 = vpop.xlane.xlu0 %737
  %v739 = vmul.f32 %v738, %v732
  %v740 = vadd.f32 %v739, 1e-05
  %v741 = vrsqrt.pop %v740
  %v742 = vmul.f32 %v734, %v741
  %v743 = vlaneseq
  %v744 = vshrl.u32 %v743, 7
  %v745 = vsub.s32 0, %v744
  %v746 = vrot.slane %v81, %v745
  %v747 = vmul.f32 %v742, %v746
  %v748 = vlaneseq
  %v749 = vshrl.u32 %v748, 7
  %v750 = vsub.s32 1, %v749
  %v751 = vrot.slane %v81, %v750
  %v752 = vadd.f32 %v747, %v751
  %v753 = vadd.f32 %v752, %v48
  %v754 = vpack.c.bf16 %v753, %v753
  %v756 = vlaneseq
  %v757 = vshrl.u32 %v756, 7
  %v758 = vsub.s32 0, %v757
  %v759 = vrot.slane %v66, %v758
  %v765 = vunpack.c.l.b16 %v60
  %v766 = vunpack.c.l.b16 %v61
  %v767 = vunpack.c.l.b16 %v62
  %v768 = vunpack.c.l.b16 %v63
  %v769 = vpack.c.b16 %v766, %v765
  %v770 = vpack.c.b16 %v768, %v767
  %v774 = vsel %vm126, %v754, 0
  %776 = vmatprep.subr.bf16.mxu0 0
  %777 = vmatpush1.bf16.msra.mxu0 0
  %778 = vmatprep.subr.bf16.mxu0 0
  %779 = vmatpush1.bf16.msra.mxu0 0
  %780 = vmatprep.subr.bf16.mxu0 0
  %781 = vmatpush1.bf16.msra.mxu0 0
  %782 = vmatprep.subr.bf16.mxu0 0
  %783 = vmatpush1.bf16.msra.mxu0 0
  %784 = vmatprep.subr.bf16.mxu0 0
  %785 = vmatpush1.bf16.msra.mxu0 0
  %786 = vmatprep.subr.bf16.mxu0 0
  %787 = vmatpush1.bf16.msra.mxu0 0
  %788 = vmatprep.subr.bf16.mxu0 0
  %789 = vmatpush1.bf16.msra.mxu0 %v770
  %790 = vmatprep.subr.bf16.mxu0 0
  %791 = vmatpush1.bf16.msra.mxu0 %v769
  %792 = vmatprep.subr.bf16.mxu0 0
  %793 = vmatpush2.bf16.msra.mxu0 0
  %794 = vmatprep.subr.bf16.mxu0 0
  %795 = vmatpush2.bf16.msra.mxu0 0
  %796 = vmatprep.subr.bf16.mxu0 0
  %797 = vmatpush2.bf16.msra.mxu0 0
  %798 = vmatprep.subr.bf16.mxu0 0
  %799 = vmatpush2.bf16.msra.mxu0 0
  %800 = vmatprep.subr.bf16.mxu0 0
  %801 = vmatpush2.bf16.msra.mxu0 0
  %802 = vmatprep.subr.bf16.mxu0 0
  %803 = vmatpush2.bf16.msra.mxu0 0
  %804 = vmatprep.subr.bf16.mxu0 0
  %805 = vmatpush2.bf16.msra.mxu0 0
  %806 = vmatprep.subr.bf16.mxu0 0
  %807 = vmatpush2.bf16.msra.mxu0 0
  %808 = vmatprep.mubr.bf16.mxu0 0
  %809 = vmatmul.mubr.bf16.gmra.mxu0 %v774
  %v810 = vpop.f32.mrf.mxu0
  %v811 = vadd.f32 %v759, %v810
  %v812 = vpop.f32.mrf.mxu0
  %v813 = vpop.f32.mrf.mxu0
  %v814 = vpop.f32.mrf.mxu0
  %815 = vdwg.mxu0
  %v816 = vpack.c.bf16 %v106, %v105
  %817 = vrot.lane.b32.xlu0 %v769, 96
  %v818 = vpop.permute.xlu0 %817
  %819 = vrot.lane.b32.xlu0 %v770, 96
  %v820 = vpop.permute.xlu0 %819
  %823 = vrot.lane.b32.xlu0 %v759, 96
  %v824 = vpop.permute.xlu0 %823
  %v827 = vsel %vm126, %v816, 0
  %829 = vmatprep.subr.bf16.mxu0 0
  %830 = vmatpush1.bf16.msra.mxu0 0
  %831 = vmatprep.subr.bf16.mxu0 0
  %832 = vmatpush1.bf16.msra.mxu0 0
  %833 = vmatprep.subr.bf16.mxu0 0
  %834 = vmatpush1.bf16.msra.mxu0 0
  %835 = vmatprep.subr.bf16.mxu0 0
  %836 = vmatpush1.bf16.msra.mxu0 0
  %837 = vmatprep.subr.bf16.mxu0 0
  %838 = vmatpush1.bf16.msra.mxu0 0
  %839 = vmatprep.subr.bf16.mxu0 0
  %840 = vmatpush1.bf16.msra.mxu0 0
  %841 = vmatprep.subr.bf16.mxu0 0
  %842 = vmatpush1.bf16.msra.mxu0 %v820
  %843 = vmatprep.subr.bf16.mxu0 0
  %844 = vmatpush1.bf16.msra.mxu0 %v818
  %845 = vmatprep.subr.bf16.mxu0 0
  %846 = vmatpush2.bf16.msra.mxu0 0
  %847 = vmatprep.subr.bf16.mxu0 0
  %848 = vmatpush2.bf16.msra.mxu0 0
  %849 = vmatprep.subr.bf16.mxu0 0
  %850 = vmatpush2.bf16.msra.mxu0 0
  %851 = vmatprep.subr.bf16.mxu0 0
  %852 = vmatpush2.bf16.msra.mxu0 0
  %853 = vmatprep.subr.bf16.mxu0 0
  %854 = vmatpush2.bf16.msra.mxu0 0
  %855 = vmatprep.subr.bf16.mxu0 0
  %856 = vmatpush2.bf16.msra.mxu0 0
  %857 = vmatprep.subr.bf16.mxu0 0
  %858 = vmatpush2.bf16.msra.mxu0 0
  %859 = vmatprep.subr.bf16.mxu0 0
  %860 = vmatpush2.bf16.msra.mxu0 0
  %861 = vmatprep.mubr.bf16.mxu0 0
  %862 = vmatmul.mubr.bf16.gmra.mxu0 %v827
  %v863 = vpop.f32.mrf.mxu0
  %v864 = vadd.f32 %v824, %v863
  %v865 = vpop.f32.mrf.mxu0
  %v866 = vpop.f32.mrf.mxu0
  %v867 = vadd.f32 %v824, %v866
  %v868 = vpop.f32.mrf.mxu0
  %869 = vdwg.mxu0
  %v870 = vpack.c.bf16 %v47, %v46
  %871 = vrot.lane.b32.xlu0 %v769, 64
  %v872 = vpop.permute.xlu0 %871
  %873 = vrot.lane.b32.xlu0 %v770, 64
  %v874 = vpop.permute.xlu0 %873
  %877 = vrot.lane.b32.xlu0 %v759, 64
  %v878 = vpop.permute.xlu0 %877
  %v881 = vsel %vm126, %v870, 0
  %883 = vmatprep.subr.bf16.mxu0 0
  %884 = vmatpush1.bf16.msra.mxu0 0
  %885 = vmatprep.subr.bf16.mxu0 0
  %886 = vmatpush1.bf16.msra.mxu0 0
  %887 = vmatprep.subr.bf16.mxu0 0
  %888 = vmatpush1.bf16.msra.mxu0 0
  %889 = vmatprep.subr.bf16.mxu0 0
  %890 = vmatpush1.bf16.msra.mxu0 0
  %891 = vmatprep.subr.bf16.mxu0 0
  %892 = vmatpush1.bf16.msra.mxu0 0
  %893 = vmatprep.subr.bf16.mxu0 0
  %894 = vmatpush1.bf16.msra.mxu0 0
  %895 = vmatprep.subr.bf16.mxu0 0
  %896 = vmatpush1.bf16.msra.mxu0 %v874
  %897 = vmatprep.subr.bf16.mxu0 0
  %898 = vmatpush1.bf16.msra.mxu0 %v872
  %899 = vmatprep.subr.bf16.mxu0 0
  %900 = vmatpush2.bf16.msra.mxu0 0
  %901 = vmatprep.subr.bf16.mxu0 0
  %902 = vmatpush2.bf16.msra.mxu0 0
  %903 = vmatprep.subr.bf16.mxu0 0
  %904 = vmatpush2.bf16.msra.mxu0 0
  %905 = vmatprep.subr.bf16.mxu0 0
  %906 = vmatpush2.bf16.msra.mxu0 0
  %907 = vmatprep.subr.bf16.mxu0 0
  %908 = vmatpush2.bf16.msra.mxu0 0
  %909 = vmatprep.subr.bf16.mxu0 0
  %910 = vmatpush2.bf16.msra.mxu0 0
  %911 = vmatprep.subr.bf16.mxu0 0
  %912 = vmatpush2.bf16.msra.mxu0 0
  %913 = vmatprep.subr.bf16.mxu0 0
  %914 = vmatpush2.bf16.msra.mxu0 0
  %915 = vmatprep.mubr.bf16.mxu0 0
  %916 = vmatmul.mubr.bf16.gmra.mxu0 %v881
  %v917 = vpop.f32.mrf.mxu0
  %v918 = vadd.f32 %v878, %v917
  %v919 = vpop.f32.mrf.mxu0
  %v920 = vpop.f32.mrf.mxu0
  %v921 = vadd.f32 %v878, %v920
  %v922 = vpop.f32.mrf.mxu0
  %923 = vdwg.mxu0
  %v924 = vpack.c.bf16 %v811, %v811
  %v925 = vpack.c.bf16 %v867, %v864
  %v927 = vsel %vm227, %v924, 0
  %v930 = vsel %vm227, %v925, 0
  %932 = vmatprep.subr.bf16.mxu0 0
  %933 = vmatpush1.bf16.xpose.msra.mxu0 0
  %934 = vmatprep.subr.bf16.mxu0 0
  %935 = vmatpush1.bf16.xpose.msra.mxu0 0
  %936 = vmatprep.subr.bf16.mxu0 0
  %937 = vmatpush1.bf16.xpose.msra.mxu0 0
  %938 = vmatprep.subr.bf16.mxu0 0
  %939 = vmatpush1.bf16.xpose.msra.mxu0 0
  %940 = vmatprep.subr.bf16.mxu0 0
  %941 = vmatpush1.bf16.xpose.msra.mxu0 0
  %942 = vmatprep.subr.bf16.mxu0 0
  %943 = vmatpush1.bf16.xpose.msra.mxu0 0
  %944 = vmatprep.subr.bf16.mxu0 0
  %945 = vmatpush1.bf16.xpose.msra.mxu0 0
  %946 = vmatprep.subr.bf16.mxu0 0
  %947 = vmatpush1.bf16.xpose.msra.mxu0 %v930
  %948 = vmatprep.subr.bf16.mxu0 0
  %949 = vmatpush2.bf16.xpose.msra.mxu0 0
  %950 = vmatprep.subr.bf16.mxu0 0
  %951 = vmatpush2.bf16.xpose.msra.mxu0 0
  %952 = vmatprep.subr.bf16.mxu0 0
  %953 = vmatpush2.bf16.xpose.msra.mxu0 0
  %954 = vmatprep.subr.bf16.mxu0 0
  %955 = vmatpush2.bf16.xpose.msra.mxu0 0
  %956 = vmatprep.subr.bf16.mxu0 0
  %957 = vmatpush2.bf16.xpose.msra.mxu0 0
  %958 = vmatprep.subr.bf16.mxu0 0
  %959 = vmatpush2.bf16.xpose.msra.mxu0 0
  %960 = vmatprep.subr.bf16.mxu0 0
  %961 = vmatpush2.bf16.xpose.msra.mxu0 0
  %962 = vmatprep.subr.bf16.mxu0 0
  %963 = vmatpush2.bf16.xpose.msra.mxu0 0
  %964 = vmatprep.mubr.bf16.mxu0 0
  %965 = vmatmul.mubr.bf16.gmra.mxu0 %v927
  %v966 = vpop.f32.mrf.mxu0
  %v967 = vadd.f32 0.0, %v966
  %v968 = vpop.f32.mrf.mxu0
  %v969 = vpop.f32.mrf.mxu0
  %v970 = vpop.f32.mrf.mxu0
  %971 = vdwg.mxu0
  %v972 = vmul.f32 %v967, 0.35355338
  %v973 = vadd.f32 %v972, %v53
  %vm974 = vcmask 130048
  %v975 = vsel %vm974, %v973, -inf
  %976 = vmax.xlane.f32.xlu0 %v975
  %v977 = vpop.xlane.xlu0 %976
  %v978 = vsub.f32 %v973, %v977
  %v979 = vmul.f32 %v978, 1.442695
  %v980 = vpow.pop %v979
  %v981 = vsel %vm974, %v980, 0.0
  %982 = vadd.xlane.f32.xlu0 %v981
  %v983 = vpop.xlane.xlu0 %982
  %v984 = vrcp.pop %v983
  %v985 = vmul.f32 %v980, %v984
  %v986 = vpack.c.bf16 %v985, %v985
  %v987 = vmul.f32 %v918, %v88
  %v988 = vmul.f32 %v921, %v88
  %v989 = vpack.c.bf16 %v988, %v987
  %991 = vrot.lane.b32.xlu0 %v924, 120
  %v992 = vpop.permute.xlu0 %991
  %994 = vrot.lane.b32.xlu0 %v925, 120
  %v995 = vpop.permute.xlu0 %994
  %v997 = vsel %vm227, %v992, 0
  %v1000 = vsel %vm227, %v995, 0
  %1002 = vmatprep.subr.bf16.mxu0 0
  %1003 = vmatpush1.bf16.xpose.msra.mxu0 0
  %1004 = vmatprep.subr.bf16.mxu0 0
  %1005 = vmatpush1.bf16.xpose.msra.mxu0 0
  %1006 = vmatprep.subr.bf16.mxu0 0
  %1007 = vmatpush1.bf16.xpose.msra.mxu0 0
  %1008 = vmatprep.subr.bf16.mxu0 0
  %1009 = vmatpush1.bf16.xpose.msra.mxu0 0
  %1010 = vmatprep.subr.bf16.mxu0 0
  %1011 = vmatpush1.bf16.xpose.msra.mxu0 0
  %1012 = vmatprep.subr.bf16.mxu0 0
  %1013 = vmatpush1.bf16.xpose.msra.mxu0 0
  %1014 = vmatprep.subr.bf16.mxu0 0
  %1015 = vmatpush1.bf16.xpose.msra.mxu0 0
  %1016 = vmatprep.subr.bf16.mxu0 0
  %1017 = vmatpush1.bf16.xpose.msra.mxu0 %v1000
  %1018 = vmatprep.subr.bf16.mxu0 0
  %1019 = vmatpush2.bf16.xpose.msra.mxu0 0
  %1020 = vmatprep.subr.bf16.mxu0 0
  %1021 = vmatpush2.bf16.xpose.msra.mxu0 0
  %1022 = vmatprep.subr.bf16.mxu0 0
  %1023 = vmatpush2.bf16.xpose.msra.mxu0 0
  %1024 = vmatprep.subr.bf16.mxu0 0
  %1025 = vmatpush2.bf16.xpose.msra.mxu0 0
  %1026 = vmatprep.subr.bf16.mxu0 0
  %1027 = vmatpush2.bf16.xpose.msra.mxu0 0
  %1028 = vmatprep.subr.bf16.mxu0 0
  %1029 = vmatpush2.bf16.xpose.msra.mxu0 0
  %1030 = vmatprep.subr.bf16.mxu0 0
  %1031 = vmatpush2.bf16.xpose.msra.mxu0 0
  %1032 = vmatprep.subr.bf16.mxu0 0
  %1033 = vmatpush2.bf16.xpose.msra.mxu0 0
  %1034 = vmatprep.mubr.bf16.mxu0 0
  %1035 = vmatmul.mubr.bf16.gmra.mxu0 %v997
  %v1036 = vpop.f32.mrf.mxu0
  %v1037 = vadd.f32 0.0, %v1036
  %v1038 = vpop.f32.mrf.mxu0
  %v1039 = vpop.f32.mrf.mxu0
  %v1040 = vpop.f32.mrf.mxu0
  %1041 = vdwg.mxu0
  %v1042 = vmul.f32 %v1037, 0.35355338
  %v1043 = vadd.f32 %v1042, %v53
  %v1044 = vsel %vm974, %v1043, -inf
  %1045 = vmax.xlane.f32.xlu0 %v1044
  %v1046 = vpop.xlane.xlu0 %1045
  %v1047 = vsub.f32 %v1043, %v1046
  %v1048 = vmul.f32 %v1047, 1.442695
  %v1049 = vpow.pop %v1048
  %v1050 = vsel %vm974, %v1049, 0.0
  %1051 = vadd.xlane.f32.xlu0 %v1050
  %v1052 = vpop.xlane.xlu0 %1051
  %v1053 = vrcp.pop %v1052
  %v1054 = vmul.f32 %v1049, %v1053
  %v1055 = vpack.c.bf16 %v1054, %v1054
  %v1056 = vmul.f32 %v918, %v93
  %v1057 = vmul.f32 %v921, %v93
  %v1058 = vpack.c.bf16 %v1057, %v1056
  %v1060 = vsel %vm974, %v1055, 0
  %1062 = vmatprep.subr.bf16.mxu0 0
  %1063 = vmatpush1.bf16.msra.mxu0 0
  %1064 = vmatprep.subr.bf16.mxu0 0
  %1065 = vmatpush1.bf16.msra.mxu0 0
  %1066 = vmatprep.subr.bf16.mxu0 0
  %1067 = vmatpush1.bf16.msra.mxu0 0
  %1068 = vmatprep.subr.bf16.mxu0 0
  %1069 = vmatpush1.bf16.msra.mxu0 0
  %1070 = vmatprep.subr.bf16.mxu0 0
  %1071 = vmatpush1.bf16.msra.mxu0 0
  %1072 = vmatprep.subr.bf16.mxu0 0
  %1073 = vmatpush1.bf16.msra.mxu0 0
  %1074 = vmatprep.subr.bf16.mxu0 0
  %1075 = vmatpush1.bf16.msra.mxu0 0
  %1076 = vmatprep.subr.bf16.mxu0 0
  %1077 = vmatpush1.bf16.msra.mxu0 %v1058
  %1078 = vmatprep.subr.bf16.mxu0 0
  %1079 = vmatpush2.bf16.msra.mxu0 0
  %1080 = vmatprep.subr.bf16.mxu0 0
  %1081 = vmatpush2.bf16.msra.mxu0 0
  %1082 = vmatprep.subr.bf16.mxu0 0
  %1083 = vmatpush2.bf16.msra.mxu0 0
  %1084 = vmatprep.subr.bf16.mxu0 0
  %1085 = vmatpush2.bf16.msra.mxu0 0
  %1086 = vmatprep.subr.bf16.mxu0 0
  %1087 = vmatpush2.bf16.msra.mxu0 0
  %1088 = vmatprep.subr.bf16.mxu0 0
  %1089 = vmatpush2.bf16.msra.mxu0 0
  %1090 = vmatprep.subr.bf16.mxu0 0
  %1091 = vmatpush2.bf16.msra.mxu0 0
  %1092 = vmatprep.subr.bf16.mxu0 0
  %1093 = vmatpush2.bf16.msra.mxu0 0
  %1094 = vmatprep.mubr.bf16.mxu0 0
  %1095 = vmatmul.mubr.bf16.gmra.mxu0 %v1060
  %v1096 = vpop.f32.mrf.mxu0
  %v1097 = vadd.f32 0.0, %v1096
  %v1098 = vpop.f32.mrf.mxu0
  %v1099 = vpop.f32.mrf.mxu0
  %v1100 = vpop.f32.mrf.mxu0
  %1101 = vdwg.mxu0
  %v1103 = vsel %vm974, %v986, 0
  %1105 = vmatprep.subr.bf16.mxu0 0
  %1106 = vmatpush1.bf16.msra.mxu0 0
  %1107 = vmatprep.subr.bf16.mxu0 0
  %1108 = vmatpush1.bf16.msra.mxu0 0
  %1109 = vmatprep.subr.bf16.mxu0 0
  %1110 = vmatpush1.bf16.msra.mxu0 0
  %1111 = vmatprep.subr.bf16.mxu0 0
  %1112 = vmatpush1.bf16.msra.mxu0 0
  %1113 = vmatprep.subr.bf16.mxu0 0
  %1114 = vmatpush1.bf16.msra.mxu0 0
  %1115 = vmatprep.subr.bf16.mxu0 0
  %1116 = vmatpush1.bf16.msra.mxu0 0
  %1117 = vmatprep.subr.bf16.mxu0 0
  %1118 = vmatpush1.bf16.msra.mxu0 0
  %1119 = vmatprep.subr.bf16.mxu0 0
  %1120 = vmatpush1.bf16.msra.mxu0 %v989
  %1121 = vmatprep.subr.bf16.mxu0 0
  %1122 = vmatpush2.bf16.msra.mxu0 0
  %1123 = vmatprep.subr.bf16.mxu0 0
  %1124 = vmatpush2.bf16.msra.mxu0 0
  %1125 = vmatprep.subr.bf16.mxu0 0
  %1126 = vmatpush2.bf16.msra.mxu0 0
  %1127 = vmatprep.subr.bf16.mxu0 0
  %1128 = vmatpush2.bf16.msra.mxu0 0
  %1129 = vmatprep.subr.bf16.mxu0 0
  %1130 = vmatpush2.bf16.msra.mxu0 0
  %1131 = vmatprep.subr.bf16.mxu0 0
  %1132 = vmatpush2.bf16.msra.mxu0 0
  %1133 = vmatprep.subr.bf16.mxu0 0
  %1134 = vmatpush2.bf16.msra.mxu0 0
  %1135 = vmatprep.subr.bf16.mxu0 0
  %1136 = vmatpush2.bf16.msra.mxu0 0
  %1137 = vmatprep.mubr.bf16.mxu0 0
  %1138 = vmatmul.mubr.bf16.gmra.mxu0 %v1103
  %v1139 = vpop.f32.mrf.mxu0
  %v1140 = vadd.f32 %v1097, %v1139
  %v1141 = vpop.f32.mrf.mxu0
  %v1142 = vpop.f32.mrf.mxu0
  %v1143 = vpop.f32.mrf.mxu0
  %1144 = vdwg.mxu0
  %1145 = vrot.lane.b32.xlu0 %v924, 112
  %v1146 = vpop.permute.xlu0 %1145
  %1147 = vrot.lane.b32.xlu0 %v925, 112
  %v1148 = vpop.permute.xlu0 %1147
  %v1150 = vsel %vm227, %v1146, 0
  %v1153 = vsel %vm227, %v1148, 0
  %1155 = vmatprep.subr.bf16.mxu0 0
  %1156 = vmatpush1.bf16.xpose.msra.mxu0 0
  %1157 = vmatprep.subr.bf16.mxu0 0
  %1158 = vmatpush1.bf16.xpose.msra.mxu0 0
  %1159 = vmatprep.subr.bf16.mxu0 0
  %1160 = vmatpush1.bf16.xpose.msra.mxu0 0
  %1161 = vmatprep.subr.bf16.mxu0 0
  %1162 = vmatpush1.bf16.xpose.msra.mxu0 0
  %1163 = vmatprep.subr.bf16.mxu0 0
  %1164 = vmatpush1.bf16.xpose.msra.mxu0 0
  %1165 = vmatprep.subr.bf16.mxu0 0
  %1166 = vmatpush1.bf16.xpose.msra.mxu0 0
  %1167 = vmatprep.subr.bf16.mxu0 0
  %1168 = vmatpush1.bf16.xpose.msra.mxu0 0
  %1169 = vmatprep.subr.bf16.mxu0 0
  %1170 = vmatpush1.bf16.xpose.msra.mxu0 %v1153
  %1171 = vmatprep.subr.bf16.mxu0 0
  %1172 = vmatpush2.bf16.xpose.msra.mxu0 0
  %1173 = vmatprep.subr.bf16.mxu0 0
  %1174 = vmatpush2.bf16.xpose.msra.mxu0 0
  %1175 = vmatprep.subr.bf16.mxu0 0
  %1176 = vmatpush2.bf16.xpose.msra.mxu0 0
  %1177 = vmatprep.subr.bf16.mxu0 0
  %1178 = vmatpush2.bf16.xpose.msra.mxu0 0
  %1179 = vmatprep.subr.bf16.mxu0 0
  %1180 = vmatpush2.bf16.xpose.msra.mxu0 0
  %1181 = vmatprep.subr.bf16.mxu0 0
  %1182 = vmatpush2.bf16.xpose.msra.mxu0 0
  %1183 = vmatprep.subr.bf16.mxu0 0
  %1184 = vmatpush2.bf16.xpose.msra.mxu0 0
  %1185 = vmatprep.subr.bf16.mxu0 0
  %1186 = vmatpush2.bf16.xpose.msra.mxu0 0
  %1187 = vmatprep.mubr.bf16.mxu0 0
  %1188 = vmatmul.mubr.bf16.gmra.mxu0 %v1150
  %v1189 = vpop.f32.mrf.mxu0
  %v1190 = vadd.f32 0.0, %v1189
  %v1191 = vpop.f32.mrf.mxu0
  %v1192 = vpop.f32.mrf.mxu0
  %v1193 = vpop.f32.mrf.mxu0
  %1194 = vdwg.mxu0
  %v1195 = vmul.f32 %v1190, 0.35355338
  %v1196 = vadd.f32 %v1195, %v53
  %v1197 = vsel %vm974, %v1196, -inf
  %1198 = vmax.xlane.f32.xlu0 %v1197
  %v1199 = vpop.xlane.xlu0 %1198
  %v1200 = vsub.f32 %v1196, %v1199
  %v1201 = vmul.f32 %v1200, 1.442695
  %v1202 = vpow.pop %v1201
  %v1203 = vsel %vm974, %v1202, 0.0
  %1204 = vadd.xlane.f32.xlu0 %v1203
  %v1205 = vpop.xlane.xlu0 %1204
  %v1206 = vrcp.pop %v1205
  %v1207 = vmul.f32 %v1202, %v1206
  %v1208 = vpack.c.bf16 %v1207, %v1207
  %v1209 = vmul.f32 %v918, %v98
  %v1210 = vmul.f32 %v921, %v98
  %v1211 = vpack.c.bf16 %v1210, %v1209
  %v1213 = vsel %vm974, %v1208, 0
  %1215 = vmatprep.subr.bf16.mxu0 0
  %1216 = vmatpush1.bf16.msra.mxu0 0
  %1217 = vmatprep.subr.bf16.mxu0 0
  %1218 = vmatpush1.bf16.msra.mxu0 0
  %1219 = vmatprep.subr.bf16.mxu0 0
  %1220 = vmatpush1.bf16.msra.mxu0 0
  %1221 = vmatprep.subr.bf16.mxu0 0
  %1222 = vmatpush1.bf16.msra.mxu0 0
  %1223 = vmatprep.subr.bf16.mxu0 0
  %1224 = vmatpush1.bf16.msra.mxu0 0
  %1225 = vmatprep.subr.bf16.mxu0 0
  %1226 = vmatpush1.bf16.msra.mxu0 0
  %1227 = vmatprep.subr.bf16.mxu0 0
  %1228 = vmatpush1.bf16.msra.mxu0 0
  %1229 = vmatprep.subr.bf16.mxu0 0
  %1230 = vmatpush1.bf16.msra.mxu0 %v1211
  %1231 = vmatprep.subr.bf16.mxu0 0
  %1232 = vmatpush2.bf16.msra.mxu0 0
  %1233 = vmatprep.subr.bf16.mxu0 0
  %1234 = vmatpush2.bf16.msra.mxu0 0
  %1235 = vmatprep.subr.bf16.mxu0 0
  %1236 = vmatpush2.bf16.msra.mxu0 0
  %1237 = vmatprep.subr.bf16.mxu0 0
  %1238 = vmatpush2.bf16.msra.mxu0 0
  %1239 = vmatprep.subr.bf16.mxu0 0
  %1240 = vmatpush2.bf16.msra.mxu0 0
  %1241 = vmatprep.subr.bf16.mxu0 0
  %1242 = vmatpush2.bf16.msra.mxu0 0
  %1243 = vmatprep.subr.bf16.mxu0 0
  %1244 = vmatpush2.bf16.msra.mxu0 0
  %1245 = vmatprep.subr.bf16.mxu0 0
  %1246 = vmatpush2.bf16.msra.mxu0 0
  %1247 = vmatprep.mubr.bf16.mxu0 0
  %1248 = vmatmul.mubr.bf16.gmra.mxu0 %v1213
  %v1249 = vpop.f32.mrf.mxu0
  %v1250 = vadd.f32 0.0, %v1249
  %v1251 = vpop.f32.mrf.mxu0
  %v1252 = vpop.f32.mrf.mxu0
  %v1253 = vpop.f32.mrf.mxu0
  %1254 = vdwg.mxu0
  %v1255 = vadd.f32 %v1140, %v1250
  %1256 = vrot.lane.b32.xlu0 %v924, 104
  %v1257 = vpop.permute.xlu0 %1256
  %1258 = vrot.lane.b32.xlu0 %v925, 104
  %v1259 = vpop.permute.xlu0 %1258
  %v1261 = vsel %vm227, %v1257, 0
  %v1264 = vsel %vm227, %v1259, 0
  %1266 = vmatprep.subr.bf16.mxu0 0
  %1267 = vmatpush1.bf16.xpose.msra.mxu0 0
  %1268 = vmatprep.subr.bf16.mxu0 0
  %1269 = vmatpush1.bf16.xpose.msra.mxu0 0
  %1270 = vmatprep.subr.bf16.mxu0 0
  %1271 = vmatpush1.bf16.xpose.msra.mxu0 0
  %1272 = vmatprep.subr.bf16.mxu0 0
  %1273 = vmatpush1.bf16.xpose.msra.mxu0 0
  %1274 = vmatprep.subr.bf16.mxu0 0
  %1275 = vmatpush1.bf16.xpose.msra.mxu0 0
  %1276 = vmatprep.subr.bf16.mxu0 0
  %1277 = vmatpush1.bf16.xpose.msra.mxu0 0
  %1278 = vmatprep.subr.bf16.mxu0 0
  %1279 = vmatpush1.bf16.xpose.msra.mxu0 0
  %1280 = vmatprep.subr.bf16.mxu0 0
  %1281 = vmatpush1.bf16.xpose.msra.mxu0 %v1264
  %1282 = vmatprep.subr.bf16.mxu0 0
  %1283 = vmatpush2.bf16.xpose.msra.mxu0 0
  %1284 = vmatprep.subr.bf16.mxu0 0
  %1285 = vmatpush2.bf16.xpose.msra.mxu0 0
  %1286 = vmatprep.subr.bf16.mxu0 0
  %1287 = vmatpush2.bf16.xpose.msra.mxu0 0
  %1288 = vmatprep.subr.bf16.mxu0 0
  %1289 = vmatpush2.bf16.xpose.msra.mxu0 0
  %1290 = vmatprep.subr.bf16.mxu0 0
  %1291 = vmatpush2.bf16.xpose.msra.mxu0 0
  %1292 = vmatprep.subr.bf16.mxu0 0
  %1293 = vmatpush2.bf16.xpose.msra.mxu0 0
  %1294 = vmatprep.subr.bf16.mxu0 0
  %1295 = vmatpush2.bf16.xpose.msra.mxu0 0
  %1296 = vmatprep.subr.bf16.mxu0 0
  %1297 = vmatpush2.bf16.xpose.msra.mxu0 0
  %1298 = vmatprep.mubr.bf16.mxu0 0
  %1299 = vmatmul.mubr.bf16.gmra.mxu0 %v1261
  %v1300 = vpop.f32.mrf.mxu0
  %v1301 = vadd.f32 0.0, %v1300
  %v1302 = vpop.f32.mrf.mxu0
  %v1303 = vpop.f32.mrf.mxu0
  %v1304 = vpop.f32.mrf.mxu0
  %1305 = vdwg.mxu0
  %v1306 = vmul.f32 %v1301, 0.35355338
  %v1307 = vadd.f32 %v1306, %v53
  %v1308 = vsel %vm974, %v1307, -inf
  %1309 = vmax.xlane.f32.xlu0 %v1308
  %v1310 = vpop.xlane.xlu0 %1309
  %v1311 = vsub.f32 %v1307, %v1310
  %v1312 = vmul.f32 %v1311, 1.442695
  %v1313 = vpow.pop %v1312
  %v1314 = vsel %vm974, %v1313, 0.0
  %1315 = vadd.xlane.f32.xlu0 %v1314
  %v1316 = vpop.xlane.xlu0 %1315
  %v1317 = vrcp.pop %v1316
  %v1318 = vmul.f32 %v1313, %v1317
  %v1319 = vpack.c.bf16 %v1318, %v1318
  %v1320 = vmul.f32 %v918, %v103
  %v1321 = vmul.f32 %v921, %v103
  %v1322 = vpack.c.bf16 %v1321, %v1320
  %v1324 = vsel %vm974, %v1319, 0
  %1326 = vmatprep.subr.bf16.mxu0 0
  %1327 = vmatpush1.bf16.msra.mxu0 0
  %1328 = vmatprep.subr.bf16.mxu0 0
  %1329 = vmatpush1.bf16.msra.mxu0 0
  %1330 = vmatprep.subr.bf16.mxu0 0
  %1331 = vmatpush1.bf16.msra.mxu0 0
  %1332 = vmatprep.subr.bf16.mxu0 0
  %1333 = vmatpush1.bf16.msra.mxu0 0
  %1334 = vmatprep.subr.bf16.mxu0 0
  %1335 = vmatpush1.bf16.msra.mxu0 0
  %1336 = vmatprep.subr.bf16.mxu0 0
  %1337 = vmatpush1.bf16.msra.mxu0 0
  %1338 = vmatprep.subr.bf16.mxu0 0
  %1339 = vmatpush1.bf16.msra.mxu0 0
  %1340 = vmatprep.subr.bf16.mxu0 0
  %1341 = vmatpush1.bf16.msra.mxu0 %v1322
  %1342 = vmatprep.subr.bf16.mxu0 0
  %1343 = vmatpush2.bf16.msra.mxu0 0
  %1344 = vmatprep.subr.bf16.mxu0 0
  %1345 = vmatpush2.bf16.msra.mxu0 0
  %1346 = vmatprep.subr.bf16.mxu0 0
  %1347 = vmatpush2.bf16.msra.mxu0 0
  %1348 = vmatprep.subr.bf16.mxu0 0
  %1349 = vmatpush2.bf16.msra.mxu0 0
  %1350 = vmatprep.subr.bf16.mxu0 0
  %1351 = vmatpush2.bf16.msra.mxu0 0
  %1352 = vmatprep.subr.bf16.mxu0 0
  %1353 = vmatpush2.bf16.msra.mxu0 0
  %1354 = vmatprep.subr.bf16.mxu0 0
  %1355 = vmatpush2.bf16.msra.mxu0 0
  %1356 = vmatprep.subr.bf16.mxu0 0
  %1357 = vmatpush2.bf16.msra.mxu0 0
  %1358 = vmatprep.mubr.bf16.mxu0 0
  %1359 = vmatmul.mubr.bf16.gmra.mxu0 %v1324
  %v1360 = vpop.f32.mrf.mxu0
  %v1361 = vadd.f32 0.0, %v1360
  %v1362 = vpop.f32.mrf.mxu0
  %v1363 = vpop.f32.mrf.mxu0
  %v1364 = vpop.f32.mrf.mxu0
  %1365 = vdwg.mxu0
  %v1366 = vadd.f32 %v1255, %v1361
  %v1367 = vpack.c.bf16 %v1366, %v1366
  %1368 = vrot.lane.b32.xlu0 %v769, 32
  %v1369 = vpop.permute.xlu0 %1368
  %1370 = vrot.lane.b32.xlu0 %v770, 32
  %v1371 = vpop.permute.xlu0 %1370
  %1374 = vrot.lane.b32.xlu0 %v759, 32
  %v1375 = vpop.permute.xlu0 %1374
  %v1378 = vsel %vm126, %v1367, 0
  %1380 = vmatprep.subr.bf16.mxu0 0
  %1381 = vmatpush1.bf16.msra.mxu0 0
  %1382 = vmatprep.subr.bf16.mxu0 0
  %1383 = vmatpush1.bf16.msra.mxu0 0
  %1384 = vmatprep.subr.bf16.mxu0 0
  %1385 = vmatpush1.bf16.msra.mxu0 0
  %1386 = vmatprep.subr.bf16.mxu0 0
  %1387 = vmatpush1.bf16.msra.mxu0 0
  %1388 = vmatprep.subr.bf16.mxu0 0
  %1389 = vmatpush1.bf16.msra.mxu0 0
  %1390 = vmatprep.subr.bf16.mxu0 0
  %1391 = vmatpush1.bf16.msra.mxu0 0
  %1392 = vmatprep.subr.bf16.mxu0 0
  %1393 = vmatpush1.bf16.msra.mxu0 %v1371
  %1394 = vmatprep.subr.bf16.mxu0 0
  %1395 = vmatpush1.bf16.msra.mxu0 %v1369
  %1396 = vmatprep.subr.bf16.mxu0 0
  %1397 = vmatpush2.bf16.msra.mxu0 0
  %1398 = vmatprep.subr.bf16.mxu0 0
  %1399 = vmatpush2.bf16.msra.mxu0 0
  %1400 = vmatprep.subr.bf16.mxu0 0
  %1401 = vmatpush2.bf16.msra.mxu0 0
  %1402 = vmatprep.subr.bf16.mxu0 0
  %1403 = vmatpush2.bf16.msra.mxu0 0
  %1404 = vmatprep.subr.bf16.mxu0 0
  %1405 = vmatpush2.bf16.msra.mxu0 0
  %1406 = vmatprep.subr.bf16.mxu0 0
  %1407 = vmatpush2.bf16.msra.mxu0 0
  %1408 = vmatprep.subr.bf16.mxu0 0
  %1409 = vmatpush2.bf16.msra.mxu0 0
  %1410 = vmatprep.subr.bf16.mxu0 0
  %1411 = vmatpush2.bf16.msra.mxu0 0
  %1412 = vmatprep.mubr.bf16.mxu0 0
  %1413 = vmatmul.mubr.bf16.gmra.mxu0 %v1378
  %v1414 = vpop.f32.mrf.mxu0
  %v1415 = vadd.f32 %v1375, %v1414
  %v1416 = vpop.f32.mrf.mxu0
  %v1417 = vpop.f32.mrf.mxu0
  %v1418 = vpop.f32.mrf.mxu0
  %1419 = vdwg.mxu0
  %v1420 = vadd.f32 %v752, %v1415
  %v1421 = vsel %vm126, %v1420, 0.0
  %1422 = vadd.xlane.f32.xlu0 %v1421
  %v1423 = vpop.xlane.xlu0 %1422
  %v1424 = vmul.f32 %v1423, %v732
  %v1425 = vsub.f32 %v1420, %v1424
  %v1426 = vmul.f32 %v1425, %v1425
  %v1427 = vsel %vm126, %v1426, 0.0
  %1428 = vadd.xlane.f32.xlu0 %v1427
  %v1429 = vpop.xlane.xlu0 %1428
  %v1430 = vmul.f32 %v1429, %v732
  %v1431 = vadd.f32 %v1430, 1e-05
  %v1432 = vrsqrt.pop %v1431
  %v1433 = vmul.f32 %v1425, %v1432
  %v1434 = vlaneseq
  %v1435 = vshrl.u32 %v1434, 7
  %v1436 = vsub.s32 2, %v1435
  %v1437 = vrot.slane %v81, %v1436
  %v1438 = vmul.f32 %v1433, %v1437
  %v1439 = vlaneseq
  %v1440 = vshrl.u32 %v1439, 7
  %v1441 = vsub.s32 3, %v1440
  %v1442 = vrot.slane %v81, %v1441
  %v1443 = vadd.f32 %v1438, %v1442
  %v1444 = vpack.c.bf16 %v1443, %v1443
  %v1446 = vlaneseq
  %v1447 = vshrl.u32 %v1446, 7
  %v1448 = vsub.s32 0, %v1447
  %v1449 = vrot.slane %v79, %v1448
  %v1455 = vunpack.c.l.b16 %v67
  %v1456 = vunpack.c.l.b16 %v68
  %v1457 = vunpack.c.l.b16 %v69
  %v1458 = vunpack.c.l.b16 %v70
  %v1459 = vpack.c.b16 %v1456, %v1455
  %v1460 = vpack.c.b16 %v1458, %v1457
  %v1464 = vsel %vm126, %v1444, 0
  %1466 = vmatprep.subr.bf16.mxu0 0
  %1467 = vmatpush1.bf16.msra.mxu0 0
  %1468 = vmatprep.subr.bf16.mxu0 0
  %1469 = vmatpush1.bf16.msra.mxu0 0
  %1470 = vmatprep.subr.bf16.mxu0 0
  %1471 = vmatpush1.bf16.msra.mxu0 0
  %1472 = vmatprep.subr.bf16.mxu0 0
  %1473 = vmatpush1.bf16.msra.mxu0 0
  %1474 = vmatprep.subr.bf16.mxu0 0
  %1475 = vmatpush1.bf16.msra.mxu0 0
  %1476 = vmatprep.subr.bf16.mxu0 0
  %1477 = vmatpush1.bf16.msra.mxu0 0
  %1478 = vmatprep.subr.bf16.mxu0 0
  %1479 = vmatpush1.bf16.msra.mxu0 %v1460
  %1480 = vmatprep.subr.bf16.mxu0 0
  %1481 = vmatpush1.bf16.msra.mxu0 %v1459
  %1482 = vmatprep.subr.bf16.mxu0 0
  %1483 = vmatpush2.bf16.msra.mxu0 0
  %1484 = vmatprep.subr.bf16.mxu0 0
  %1485 = vmatpush2.bf16.msra.mxu0 0
  %1486 = vmatprep.subr.bf16.mxu0 0
  %1487 = vmatpush2.bf16.msra.mxu0 0
  %1488 = vmatprep.subr.bf16.mxu0 0
  %1489 = vmatpush2.bf16.msra.mxu0 0
  %1490 = vmatprep.subr.bf16.mxu0 0
  %1491 = vmatpush2.bf16.msra.mxu0 0
  %1492 = vmatprep.subr.bf16.mxu0 0
  %1493 = vmatpush2.bf16.msra.mxu0 0
  %1494 = vmatprep.subr.bf16.mxu0 0
  %1495 = vmatpush2.bf16.msra.mxu0 0
  %1496 = vmatprep.subr.bf16.mxu0 0
  %1497 = vmatpush2.bf16.msra.mxu0 0
  %1498 = vmatprep.mubr.bf16.mxu0 0
  %1499 = vmatmul.mubr.bf16.gmra.mxu0 %v1464
  %v1500 = vpop.f32.mrf.mxu0
  %v1501 = vadd.f32 %v1449, %v1500
  %v1502 = vpop.f32.mrf.mxu0
  %v1503 = vpop.f32.mrf.mxu0
  %v1504 = vpop.f32.mrf.mxu0
  %1505 = vdwg.mxu0
  %v1506 = vmax.f32 %v1501, 0.0
  %v1507 = vpack.c.bf16 %v1506, %v1506
  %v1509 = vlaneseq
  %v1510 = vshrl.u32 %v1509, 7
  %v1511 = vsub.s32 0, %v1510
  %v1512 = vrot.slane %v80, %v1511
  %v1522 = vunpack.c.l.b16 %v71
  %v1523 = vunpack.c.l.b16 %v72
  %v1524 = vunpack.c.l.b16 %v73
  %v1525 = vunpack.c.l.b16 %v74
  %v1526 = vunpack.c.l.b16 %v75
  %v1527 = vunpack.c.l.b16 %v76
  %v1528 = vunpack.c.l.b16 %v77
  %v1529 = vunpack.c.l.b16 %v78
  %v1530 = vpack.c.b16 %v1523, %v1522
  %v1531 = vpack.c.b16 %v1525, %v1524
  %v1532 = vpack.c.b16 %v1527, %v1526
  %v1533 = vpack.c.b16 %v1529, %v1528
  %vm1538 = vcmask 523264
  %v1540 = vsel %vm1538, %v1507, 0
  %1542 = vmatprep.subr.bf16.mxu0 0
  %1543 = vmatpush1.bf16.msra.mxu0 0
  %1544 = vmatprep.subr.bf16.mxu0 0
  %1545 = vmatpush1.bf16.msra.mxu0 0
  %1546 = vmatprep.subr.bf16.mxu0 0
  %1547 = vmatpush1.bf16.msra.mxu0 0
  %1548 = vmatprep.subr.bf16.mxu0 0
  %1549 = vmatpush1.bf16.msra.mxu0 0
  %1550 = vmatprep.subr.bf16.mxu0 0
  %1551 = vmatpush1.bf16.msra.mxu0 %v1533
  %1552 = vmatprep.subr.bf16.mxu0 0
  %1553 = vmatpush1.bf16.msra.mxu0 %v1532
  %1554 = vmatprep.subr.bf16.mxu0 0
  %1555 = vmatpush1.bf16.msra.mxu0 %v1531
  %1556 = vmatprep.subr.bf16.mxu0 0
  %1557 = vmatpush1.bf16.msra.mxu0 %v1530
  %1558 = vmatprep.subr.bf16.mxu0 0
  %1559 = vmatpush2.bf16.msra.mxu0 0
  %1560 = vmatprep.subr.bf16.mxu0 0
  %1561 = vmatpush2.bf16.msra.mxu0 0
  %1562 = vmatprep.subr.bf16.mxu0 0
  %1563 = vmatpush2.bf16.msra.mxu0 0
  %1564 = vmatprep.subr.bf16.mxu0 0
  %1565 = vmatpush2.bf16.msra.mxu0 0
  %1566 = vmatprep.subr.bf16.mxu0 0
  %1567 = vmatpush2.bf16.msra.mxu0 0
  %1568 = vmatprep.subr.bf16.mxu0 0
  %1569 = vmatpush2.bf16.msra.mxu0 0
  %1570 = vmatprep.subr.bf16.mxu0 0
  %1571 = vmatpush2.bf16.msra.mxu0 0
  %1572 = vmatprep.subr.bf16.mxu0 0
  %1573 = vmatpush2.bf16.msra.mxu0 0
  %1574 = vmatprep.mubr.bf16.mxu0 0
  %1575 = vmatmul.mubr.bf16.gmra.mxu0 %v1540
  %v1576 = vpop.f32.mrf.mxu0
  %v1577 = vadd.f32 %v1512, %v1576
  %v1578 = vpop.f32.mrf.mxu0
  %v1579 = vpop.f32.mrf.mxu0
  %v1580 = vpop.f32.mrf.mxu0
  %1581 = vdwg.mxu0
  %v1582 = vadd.f32 %v1443, %v1577
  %v1583 = vsel %vm126, %v1582, 0.0
  %1584 = vadd.xlane.f32.xlu0 %v1583
  %v1585 = vpop.xlane.xlu0 %1584
  %v1586 = vmul.f32 %v1585, %v732
  %v1587 = vsub.f32 %v1582, %v1586
  %v1588 = vmul.f32 %v1587, %v1587
  %v1589 = vsel %vm126, %v1588, 0.0
  %1590 = vadd.xlane.f32.xlu0 %v1589
  %v1591 = vpop.xlane.xlu0 %1590
  %v1592 = vmul.f32 %v1591, %v732
  %v1593 = vadd.f32 %v1592, 1e-05
  %v1594 = vrsqrt.pop %v1593
  %v1595 = vmul.f32 %v1587, %v1594
  %v1596 = vlaneseq
  %v1597 = vshrl.u32 %v1596, 7
  %v1598 = vsub.s32 4, %v1597
  %v1599 = vrot.slane %v81, %v1598
  %v1600 = vmul.f32 %v1595, %v1599
  %v1601 = vlaneseq
  %v1602 = vshrl.u32 %v1601, 7
  %v1603 = vsub.s32 5, %v1602
  %v1604 = vrot.slane %v81, %v1603
  %v1605 = vadd.f32 %v1600, %v1604
  %1606 = vst.msk [vmem:[%s13] sm:$0xff] %vm126, %v1605
  %1608 = vrot.lane.b32.xlu0 %v107, 96
  %v1609 = vpop.permute.xlu0 %1608
  %v1611 = vsel %vm126, %v1609, 0
  %1613 = vmatprep.subr.bf16.mxu0 0
  %1614 = vmatpush1.bf16.msra.mxu0 0
  %1615 = vmatprep.subr.bf16.mxu0 0
  %1616 = vmatpush1.bf16.msra.mxu0 0
  %1617 = vmatprep.subr.bf16.mxu0 0
  %1618 = vmatpush1.bf16.msra.mxu0 0
  %1619 = vmatprep.subr.bf16.mxu0 0
  %1620 = vmatpush1.bf16.msra.mxu0 0
  %1621 = vmatprep.subr.bf16.mxu0 0
  %1622 = vmatpush1.bf16.msra.mxu0 0
  %1623 = vmatprep.subr.bf16.mxu0 0
  %1624 = vmatpush1.bf16.msra.mxu0 0
  %1625 = vmatprep.subr.bf16.mxu0 0
  %1626 = vmatpush1.bf16.msra.mxu0 %v123
  %1627 = vmatprep.subr.bf16.mxu0 0
  %1628 = vmatpush1.bf16.msra.mxu0 %v122
  %1629 = vmatprep.subr.bf16.mxu0 0
  %1630 = vmatpush2.bf16.msra.mxu0 0
  %1631 = vmatprep.subr.bf16.mxu0 0
  %1632 = vmatpush2.bf16.msra.mxu0 0
  %1633 = vmatprep.subr.bf16.mxu0 0
  %1634 = vmatpush2.bf16.msra.mxu0 0
  %1635 = vmatprep.subr.bf16.mxu0 0
  %1636 = vmatpush2.bf16.msra.mxu0 0
  %1637 = vmatprep.subr.bf16.mxu0 0
  %1638 = vmatpush2.bf16.msra.mxu0 0
  %1639 = vmatprep.subr.bf16.mxu0 0
  %1640 = vmatpush2.bf16.msra.mxu0 0
  %1641 = vmatprep.subr.bf16.mxu0 0
  %1642 = vmatpush2.bf16.msra.mxu0 0
  %1643 = vmatprep.subr.bf16.mxu0 0
  %1644 = vmatpush2.bf16.msra.mxu0 0
  %1645 = vmatprep.mubr.bf16.mxu0 0
  %1646 = vmatmul.mubr.bf16.gmra.mxu0 %v1611
  %v1647 = vpop.f32.mrf.mxu0
  %v1648 = vadd.f32 %v112, %v1647
  %v1649 = vpop.f32.mrf.mxu0
  %v1650 = vpop.f32.mrf.mxu0
  %v1651 = vpop.f32.mrf.mxu0
  %1652 = vdwg.mxu0
  %1654 = vrot.lane.b32.xlu0 %v170, 96
  %v1655 = vpop.permute.xlu0 %1654
  %v1657 = vsel %vm126, %v1655, 0
  %1659 = vmatprep.subr.bf16.mxu0 0
  %1660 = vmatpush1.bf16.msra.mxu0 0
  %1661 = vmatprep.subr.bf16.mxu0 0
  %1662 = vmatpush1.bf16.msra.mxu0 0
  %1663 = vmatprep.subr.bf16.mxu0 0
  %1664 = vmatpush1.bf16.msra.mxu0 0
  %1665 = vmatprep.subr.bf16.mxu0 0
  %1666 = vmatpush1.bf16.msra.mxu0 0
  %1667 = vmatprep.subr.bf16.mxu0 0
  %1668 = vmatpush1.bf16.msra.mxu0 0
  %1669 = vmatprep.subr.bf16.mxu0 0
  %1670 = vmatpush1.bf16.msra.mxu0 0
  %1671 = vmatprep.subr.bf16.mxu0 0
  %1672 = vmatpush1.bf16.msra.mxu0 %v174
  %1673 = vmatprep.subr.bf16.mxu0 0
  %1674 = vmatpush1.bf16.msra.mxu0 %v172
  %1675 = vmatprep.subr.bf16.mxu0 0
  %1676 = vmatpush2.bf16.msra.mxu0 0
  %1677 = vmatprep.subr.bf16.mxu0 0
  %1678 = vmatpush2.bf16.msra.mxu0 0
  %1679 = vmatprep.subr.bf16.mxu0 0
  %1680 = vmatpush2.bf16.msra.mxu0 0
  %1681 = vmatprep.subr.bf16.mxu0 0
  %1682 = vmatpush2.bf16.msra.mxu0 0
  %1683 = vmatprep.subr.bf16.mxu0 0
  %1684 = vmatpush2.bf16.msra.mxu0 0
  %1685 = vmatprep.subr.bf16.mxu0 0
  %1686 = vmatpush2.bf16.msra.mxu0 0
  %1687 = vmatprep.subr.bf16.mxu0 0
  %1688 = vmatpush2.bf16.msra.mxu0 0
  %1689 = vmatprep.subr.bf16.mxu0 0
  %1690 = vmatpush2.bf16.msra.mxu0 0
  %1691 = vmatprep.mubr.bf16.mxu0 0
  %1692 = vmatmul.mubr.bf16.gmra.mxu0 %v1657
  %v1693 = vpop.f32.mrf.mxu0
  %v1694 = vadd.f32 %v178, %v1693
  %v1695 = vpop.f32.mrf.mxu0
  %v1696 = vpop.f32.mrf.mxu0
  %v1697 = vpop.f32.mrf.mxu0
  %1698 = vdwg.mxu0
  %v1699 = vpack.c.bf16 %v1648, %v1648
  %1701 = vrot.lane.b32.xlu0 %v1699, 96
  %v1702 = vpop.permute.xlu0 %1701
  %v1704 = vsel %vm227, %v1699, 0
  %v1707 = vsel %vm227, %v1702, 0
  %1709 = vmatprep.subr.bf16.mxu0 0
  %1710 = vmatpush1.bf16.xpose.msra.mxu0 0
  %1711 = vmatprep.subr.bf16.mxu0 0
  %1712 = vmatpush1.bf16.xpose.msra.mxu0 0
  %1713 = vmatprep.subr.bf16.mxu0 0
  %1714 = vmatpush1.bf16.xpose.msra.mxu0 0
  %1715 = vmatprep.subr.bf16.mxu0 0
  %1716 = vmatpush1.bf16.xpose.msra.mxu0 0
  %1717 = vmatprep.subr.bf16.mxu0 0
  %1718 = vmatpush1.bf16.xpose.msra.mxu0 0
  %1719 = vmatprep.subr.bf16.mxu0 0
  %1720 = vmatpush1.bf16.xpose.msra.mxu0 0
  %1721 = vmatprep.subr.bf16.mxu0 0
  %1722 = vmatpush1.bf16.xpose.msra.mxu0 0
  %1723 = vmatprep.subr.bf16.mxu0 0
  %1724 = vmatpush1.bf16.xpose.msra.mxu0 %v1707
  %1725 = vmatprep.subr.bf16.mxu0 0
  %1726 = vmatpush2.bf16.xpose.msra.mxu0 0
  %1727 = vmatprep.subr.bf16.mxu0 0
  %1728 = vmatpush2.bf16.xpose.msra.mxu0 0
  %1729 = vmatprep.subr.bf16.mxu0 0
  %1730 = vmatpush2.bf16.xpose.msra.mxu0 0
  %1731 = vmatprep.subr.bf16.mxu0 0
  %1732 = vmatpush2.bf16.xpose.msra.mxu0 0
  %1733 = vmatprep.subr.bf16.mxu0 0
  %1734 = vmatpush2.bf16.xpose.msra.mxu0 0
  %1735 = vmatprep.subr.bf16.mxu0 0
  %1736 = vmatpush2.bf16.xpose.msra.mxu0 0
  %1737 = vmatprep.subr.bf16.mxu0 0
  %1738 = vmatpush2.bf16.xpose.msra.mxu0 0
  %1739 = vmatprep.subr.bf16.mxu0 0
  %1740 = vmatpush2.bf16.xpose.msra.mxu0 0
  %1741 = vmatprep.mubr.bf16.mxu0 0
  %1742 = vmatmul.mubr.bf16.gmra.mxu0 %v1704
  %v1743 = vpop.f32.mrf.mxu0
  %v1744 = vadd.f32 0.0, %v1743
  %v1745 = vpop.f32.mrf.mxu0
  %v1746 = vpop.f32.mrf.mxu0
  %v1747 = vpop.f32.mrf.mxu0
  %1748 = vdwg.mxu0
  %v1749 = vmul.f32 %v1744, 0.35355338
  %v1750 = vadd.f32 %v1749, %v52
  %v1751 = vsel %vm227, %v1750, -inf
  %1752 = vmax.xlane.f32.xlu0 %v1751
  %v1753 = vpop.xlane.xlu0 %1752
  %v1754 = vsub.f32 %v1750, %v1753
  %v1755 = vmul.f32 %v1754, 1.442695
  %v1756 = vpow.pop %v1755
  %v1757 = vsel %vm227, %v1756, 0.0
  %1758 = vadd.xlane.f32.xlu0 %v1757
  %v1759 = vpop.xlane.xlu0 %1758
  %v1760 = vrcp.pop %v1759
  %v1761 = vmul.f32 %v1756, %v1760
  %v1762 = vpack.c.bf16 %v1761, %v1761
  %v1763 = vmul.f32 %v1694, %v88
  %v1764 = vpack.c.bf16 %v1763, %v1763
  %1765 = vrot.lane.b32.xlu0 %v1699, 120
  %v1766 = vpop.permute.xlu0 %1765
  %1767 = vrot.lane.b32.xlu0 %v1699, 88
  %v1768 = vpop.permute.xlu0 %1767
  %v1770 = vsel %vm227, %v1766, 0
  %v1773 = vsel %vm227, %v1768, 0
  %1775 = vmatprep.subr.bf16.mxu0 0
  %1776 = vmatpush1.bf16.xpose.msra.mxu0 0
  %1777 = vmatprep.subr.bf16.mxu0 0
  %1778 = vmatpush1.bf16.xpose.msra.mxu0 0
  %1779 = vmatprep.subr.bf16.mxu0 0
  %1780 = vmatpush1.bf16.xpose.msra.mxu0 0
  %1781 = vmatprep.subr.bf16.mxu0 0
  %1782 = vmatpush1.bf16.xpose.msra.mxu0 0
  %1783 = vmatprep.subr.bf16.mxu0 0
  %1784 = vmatpush1.bf16.xpose.msra.mxu0 0
  %1785 = vmatprep.subr.bf16.mxu0 0
  %1786 = vmatpush1.bf16.xpose.msra.mxu0 0
  %1787 = vmatprep.subr.bf16.mxu0 0
  %1788 = vmatpush1.bf16.xpose.msra.mxu0 0
  %1789 = vmatprep.subr.bf16.mxu0 0
  %1790 = vmatpush1.bf16.xpose.msra.mxu0 %v1773
  %1791 = vmatprep.subr.bf16.mxu0 0
  %1792 = vmatpush2.bf16.xpose.msra.mxu0 0
  %1793 = vmatprep.subr.bf16.mxu0 0
  %1794 = vmatpush2.bf16.xpose.msra.mxu0 0
  %1795 = vmatprep.subr.bf16.mxu0 0
  %1796 = vmatpush2.bf16.xpose.msra.mxu0 0
  %1797 = vmatprep.subr.bf16.mxu0 0
  %1798 = vmatpush2.bf16.xpose.msra.mxu0 0
  %1799 = vmatprep.subr.bf16.mxu0 0
  %1800 = vmatpush2.bf16.xpose.msra.mxu0 0
  %1801 = vmatprep.subr.bf16.mxu0 0
  %1802 = vmatpush2.bf16.xpose.msra.mxu0 0
  %1803 = vmatprep.subr.bf16.mxu0 0
  %1804 = vmatpush2.bf16.xpose.msra.mxu0 0
  %1805 = vmatprep.subr.bf16.mxu0 0
  %1806 = vmatpush2.bf16.xpose.msra.mxu0 0
  %1807 = vmatprep.mubr.bf16.mxu0 0
  %1808 = vmatmul.mubr.bf16.gmra.mxu0 %v1770
  %v1809 = vpop.f32.mrf.mxu0
  %v1810 = vadd.f32 0.0, %v1809
  %v1811 = vpop.f32.mrf.mxu0
  %v1812 = vpop.f32.mrf.mxu0
  %v1813 = vpop.f32.mrf.mxu0
  %1814 = vdwg.mxu0
  %v1815 = vmul.f32 %v1810, 0.35355338
  %v1816 = vadd.f32 %v1815, %v52
  %v1817 = vsel %vm227, %v1816, -inf
  %1818 = vmax.xlane.f32.xlu0 %v1817
  %v1819 = vpop.xlane.xlu0 %1818
  %v1820 = vsub.f32 %v1816, %v1819
  %v1821 = vmul.f32 %v1820, 1.442695
  %v1822 = vpow.pop %v1821
  %v1823 = vsel %vm227, %v1822, 0.0
  %1824 = vadd.xlane.f32.xlu0 %v1823
  %v1825 = vpop.xlane.xlu0 %1824
  %v1826 = vrcp.pop %v1825
  %v1827 = vmul.f32 %v1822, %v1826
  %v1828 = vpack.c.bf16 %v1827, %v1827
  %v1829 = vmul.f32 %v1694, %v93
  %v1830 = vpack.c.bf16 %v1829, %v1829
  %v1832 = vsel %vm227, %v1828, 0
  %v1835 = vsel %vm359, %v1830, 0
  %1837 = vmatprep.subr.bf16.mxu0 0
  %1838 = vmatpush1.bf16.msra.mxu0 0
  %1839 = vmatprep.subr.bf16.mxu0 0
  %1840 = vmatpush1.bf16.msra.mxu0 0
  %1841 = vmatprep.subr.bf16.mxu0 0
  %1842 = vmatpush1.bf16.msra.mxu0 0
  %1843 = vmatprep.subr.bf16.mxu0 0
  %1844 = vmatpush1.bf16.msra.mxu0 0
  %1845 = vmatprep.subr.bf16.mxu0 0
  %1846 = vmatpush1.bf16.msra.mxu0 0
  %1847 = vmatprep.subr.bf16.mxu0 0
  %1848 = vmatpush1.bf16.msra.mxu0 0
  %1849 = vmatprep.subr.bf16.mxu0 0
  %1850 = vmatpush1.bf16.msra.mxu0 0
  %1851 = vmatprep.subr.bf16.mxu0 0
  %1852 = vmatpush1.bf16.msra.mxu0 %v1835
  %1853 = vmatprep.subr.bf16.mxu0 0
  %1854 = vmatpush2.bf16.msra.mxu0 0
  %1855 = vmatprep.subr.bf16.mxu0 0
  %1856 = vmatpush2.bf16.msra.mxu0 0
  %1857 = vmatprep.subr.bf16.mxu0 0
  %1858 = vmatpush2.bf16.msra.mxu0 0
  %1859 = vmatprep.subr.bf16.mxu0 0
  %1860 = vmatpush2.bf16.msra.mxu0 0
  %1861 = vmatprep.subr.bf16.mxu0 0
  %1862 = vmatpush2.bf16.msra.mxu0 0
  %1863 = vmatprep.subr.bf16.mxu0 0
  %1864 = vmatpush2.bf16.msra.mxu0 0
  %1865 = vmatprep.subr.bf16.mxu0 0
  %1866 = vmatpush2.bf16.msra.mxu0 0
  %1867 = vmatprep.subr.bf16.mxu0 0
  %1868 = vmatpush2.bf16.msra.mxu0 0
  %1869 = vmatprep.mubr.bf16.mxu0 0
  %1870 = vmatmul.mubr.bf16.gmra.mxu0 %v1832
  %v1871 = vpop.f32.mrf.mxu0
  %v1872 = vadd.f32 0.0, %v1871
  %v1873 = vpop.f32.mrf.mxu0
  %v1874 = vpop.f32.mrf.mxu0
  %v1875 = vpop.f32.mrf.mxu0
  %1876 = vdwg.mxu0
  %v1878 = vsel %vm227, %v1762, 0
  %v1881 = vsel %vm359, %v1764, 0
  %1883 = vmatprep.subr.bf16.mxu0 0
  %1884 = vmatpush1.bf16.msra.mxu0 0
  %1885 = vmatprep.subr.bf16.mxu0 0
  %1886 = vmatpush1.bf16.msra.mxu0 0
  %1887 = vmatprep.subr.bf16.mxu0 0
  %1888 = vmatpush1.bf16.msra.mxu0 0
  %1889 = vmatprep.subr.bf16.mxu0 0
  %1890 = vmatpush1.bf16.msra.mxu0 0
  %1891 = vmatprep.subr.bf16.mxu0 0
  %1892 = vmatpush1.bf16.msra.mxu0 0
  %1893 = vmatprep.subr.bf16.mxu0 0
  %1894 = vmatpush1.bf16.msra.mxu0 0
  %1895 = vmatprep.subr.bf16.mxu0 0
  %1896 = vmatpush1.bf16.msra.mxu0 0
  %1897 = vmatprep.subr.bf16.mxu0 0
  %1898 = vmatpush1.bf16.msra.mxu0 %v1881
  %1899 = vmatprep.subr.bf16.mxu0 0
  %1900 = vmatpush2.bf16.msra.mxu0 0
  %1901 = vmatprep.subr.bf16.mxu0 0
  %1902 = vmatpush2.bf16.msra.mxu0 0
  %1903 = vmatprep.subr.bf16.mxu0 0
  %1904 = vmatpush2.bf16.msra.mxu0 0
  %1905 = vmatprep.subr.bf16.mxu0 0
  %1906 = vmatpush2.bf16.msra.mxu0 0
  %1907 = vmatprep.subr.bf16.mxu0 0
  %1908 = vmatpush2.bf16.msra.mxu0 0
  %1909 = vmatprep.subr.bf16.mxu0 0
  %1910 = vmatpush2.bf16.msra.mxu0 0
  %1911 = vmatprep.subr.bf16.mxu0 0
  %1912 = vmatpush2.bf16.msra.mxu0 0
  %1913 = vmatprep.subr.bf16.mxu0 0
  %1914 = vmatpush2.bf16.msra.mxu0 0
  %1915 = vmatprep.mubr.bf16.mxu0 0
  %1916 = vmatmul.mubr.bf16.gmra.mxu0 %v1878
  %v1917 = vpop.f32.mrf.mxu0
  %v1918 = vadd.f32 %v1872, %v1917
  %v1919 = vpop.f32.mrf.mxu0
  %v1920 = vpop.f32.mrf.mxu0
  %v1921 = vpop.f32.mrf.mxu0
  %1922 = vdwg.mxu0
  %1923 = vrot.lane.b32.xlu0 %v1699, 112
  %v1924 = vpop.permute.xlu0 %1923
  %1925 = vrot.lane.b32.xlu0 %v1699, 80
  %v1926 = vpop.permute.xlu0 %1925
  %v1928 = vsel %vm227, %v1924, 0
  %v1931 = vsel %vm227, %v1926, 0
  %1933 = vmatprep.subr.bf16.mxu0 0
  %1934 = vmatpush1.bf16.xpose.msra.mxu0 0
  %1935 = vmatprep.subr.bf16.mxu0 0
  %1936 = vmatpush1.bf16.xpose.msra.mxu0 0
  %1937 = vmatprep.subr.bf16.mxu0 0
  %1938 = vmatpush1.bf16.xpose.msra.mxu0 0
  %1939 = vmatprep.subr.bf16.mxu0 0
  %1940 = vmatpush1.bf16.xpose.msra.mxu0 0
  %1941 = vmatprep.subr.bf16.mxu0 0
  %1942 = vmatpush1.bf16.xpose.msra.mxu0 0
  %1943 = vmatprep.subr.bf16.mxu0 0
  %1944 = vmatpush1.bf16.xpose.msra.mxu0 0
  %1945 = vmatprep.subr.bf16.mxu0 0
  %1946 = vmatpush1.bf16.xpose.msra.mxu0 0
  %1947 = vmatprep.subr.bf16.mxu0 0
  %1948 = vmatpush1.bf16.xpose.msra.mxu0 %v1931
  %1949 = vmatprep.subr.bf16.mxu0 0
  %1950 = vmatpush2.bf16.xpose.msra.mxu0 0
  %1951 = vmatprep.subr.bf16.mxu0 0
  %1952 = vmatpush2.bf16.xpose.msra.mxu0 0
  %1953 = vmatprep.subr.bf16.mxu0 0
  %1954 = vmatpush2.bf16.xpose.msra.mxu0 0
  %1955 = vmatprep.subr.bf16.mxu0 0
  %1956 = vmatpush2.bf16.xpose.msra.mxu0 0
  %1957 = vmatprep.subr.bf16.mxu0 0
  %1958 = vmatpush2.bf16.xpose.msra.mxu0 0
  %1959 = vmatprep.subr.bf16.mxu0 0
  %1960 = vmatpush2.bf16.xpose.msra.mxu0 0
  %1961 = vmatprep.subr.bf16.mxu0 0
  %1962 = vmatpush2.bf16.xpose.msra.mxu0 0
  %1963 = vmatprep.subr.bf16.mxu0 0
  %1964 = vmatpush2.bf16.xpose.msra.mxu0 0
  %1965 = vmatprep.mubr.bf16.mxu0 0
  %1966 = vmatmul.mubr.bf16.gmra.mxu0 %v1928
  %v1967 = vpop.f32.mrf.mxu0
  %v1968 = vadd.f32 0.0, %v1967
  %v1969 = vpop.f32.mrf.mxu0
  %v1970 = vpop.f32.mrf.mxu0
  %v1971 = vpop.f32.mrf.mxu0
  %1972 = vdwg.mxu0
  %v1973 = vmul.f32 %v1968, 0.35355338
  %v1974 = vadd.f32 %v1973, %v52
  %v1975 = vsel %vm227, %v1974, -inf
  %1976 = vmax.xlane.f32.xlu0 %v1975
  %v1977 = vpop.xlane.xlu0 %1976
  %v1978 = vsub.f32 %v1974, %v1977
  %v1979 = vmul.f32 %v1978, 1.442695
  %v1980 = vpow.pop %v1979
  %v1981 = vsel %vm227, %v1980, 0.0
  %1982 = vadd.xlane.f32.xlu0 %v1981
  %v1983 = vpop.xlane.xlu0 %1982
  %v1984 = vrcp.pop %v1983
  %v1985 = vmul.f32 %v1980, %v1984
  %v1986 = vpack.c.bf16 %v1985, %v1985
  %v1987 = vmul.f32 %v1694, %v98
  %v1988 = vpack.c.bf16 %v1987, %v1987
  %v1990 = vsel %vm227, %v1986, 0
  %v1993 = vsel %vm359, %v1988, 0
  %1995 = vmatprep.subr.bf16.mxu0 0
  %1996 = vmatpush1.bf16.msra.mxu0 0
  %1997 = vmatprep.subr.bf16.mxu0 0
  %1998 = vmatpush1.bf16.msra.mxu0 0
  %1999 = vmatprep.subr.bf16.mxu0 0
  %2000 = vmatpush1.bf16.msra.mxu0 0
  %2001 = vmatprep.subr.bf16.mxu0 0
  %2002 = vmatpush1.bf16.msra.mxu0 0
  %2003 = vmatprep.subr.bf16.mxu0 0
  %2004 = vmatpush1.bf16.msra.mxu0 0
  %2005 = vmatprep.subr.bf16.mxu0 0
  %2006 = vmatpush1.bf16.msra.mxu0 0
  %2007 = vmatprep.subr.bf16.mxu0 0
  %2008 = vmatpush1.bf16.msra.mxu0 0
  %2009 = vmatprep.subr.bf16.mxu0 0
  %2010 = vmatpush1.bf16.msra.mxu0 %v1993
  %2011 = vmatprep.subr.bf16.mxu0 0
  %2012 = vmatpush2.bf16.msra.mxu0 0
  %2013 = vmatprep.subr.bf16.mxu0 0
  %2014 = vmatpush2.bf16.msra.mxu0 0
  %2015 = vmatprep.subr.bf16.mxu0 0
  %2016 = vmatpush2.bf16.msra.mxu0 0
  %2017 = vmatprep.subr.bf16.mxu0 0
  %2018 = vmatpush2.bf16.msra.mxu0 0
  %2019 = vmatprep.subr.bf16.mxu0 0
  %2020 = vmatpush2.bf16.msra.mxu0 0
  %2021 = vmatprep.subr.bf16.mxu0 0
  %2022 = vmatpush2.bf16.msra.mxu0 0
  %2023 = vmatprep.subr.bf16.mxu0 0
  %2024 = vmatpush2.bf16.msra.mxu0 0
  %2025 = vmatprep.subr.bf16.mxu0 0
  %2026 = vmatpush2.bf16.msra.mxu0 0
  %2027 = vmatprep.mubr.bf16.mxu0 0
  %2028 = vmatmul.mubr.bf16.gmra.mxu0 %v1990
  %v2029 = vpop.f32.mrf.mxu0
  %v2030 = vadd.f32 0.0, %v2029
  %v2031 = vpop.f32.mrf.mxu0
  %v2032 = vpop.f32.mrf.mxu0
  %v2033 = vpop.f32.mrf.mxu0
  %2034 = vdwg.mxu0
  %v2035 = vadd.f32 %v1918, %v2030
  %2036 = vrot.lane.b32.xlu0 %v1699, 104
  %v2037 = vpop.permute.xlu0 %2036
  %2038 = vrot.lane.b32.xlu0 %v1699, 72
  %v2039 = vpop.permute.xlu0 %2038
  %v2041 = vsel %vm227, %v2037, 0
  %v2044 = vsel %vm227, %v2039, 0
  %2046 = vmatprep.subr.bf16.mxu0 0
  %2047 = vmatpush1.bf16.xpose.msra.mxu0 0
  %2048 = vmatprep.subr.bf16.mxu0 0
  %2049 = vmatpush1.bf16.xpose.msra.mxu0 0
  %2050 = vmatprep.subr.bf16.mxu0 0
  %2051 = vmatpush1.bf16.xpose.msra.mxu0 0
  %2052 = vmatprep.subr.bf16.mxu0 0
  %2053 = vmatpush1.bf16.xpose.msra.mxu0 0
  %2054 = vmatprep.subr.bf16.mxu0 0
  %2055 = vmatpush1.bf16.xpose.msra.mxu0 0
  %2056 = vmatprep.subr.bf16.mxu0 0
  %2057 = vmatpush1.bf16.xpose.msra.mxu0 0
  %2058 = vmatprep.subr.bf16.mxu0 0
  %2059 = vmatpush1.bf16.xpose.msra.mxu0 0
  %2060 = vmatprep.subr.bf16.mxu0 0
  %2061 = vmatpush1.bf16.xpose.msra.mxu0 %v2044
  %2062 = vmatprep.subr.bf16.mxu0 0
  %2063 = vmatpush2.bf16.xpose.msra.mxu0 0
  %2064 = vmatprep.subr.bf16.mxu0 0
  %2065 = vmatpush2.bf16.xpose.msra.mxu0 0
  %2066 = vmatprep.subr.bf16.mxu0 0
  %2067 = vmatpush2.bf16.xpose.msra.mxu0 0
  %2068 = vmatprep.subr.bf16.mxu0 0
  %2069 = vmatpush2.bf16.xpose.msra.mxu0 0
  %2070 = vmatprep.subr.bf16.mxu0 0
  %2071 = vmatpush2.bf16.xpose.msra.mxu0 0
  %2072 = vmatprep.subr.bf16.mxu0 0
  %2073 = vmatpush2.bf16.xpose.msra.mxu0 0
  %2074 = vmatprep.subr.bf16.mxu0 0
  %2075 = vmatpush2.bf16.xpose.msra.mxu0 0
  %2076 = vmatprep.subr.bf16.mxu0 0
  %2077 = vmatpush2.bf16.xpose.msra.mxu0 0
  %2078 = vmatprep.mubr.bf16.mxu0 0
  %2079 = vmatmul.mubr.bf16.gmra.mxu0 %v2041
  %v2080 = vpop.f32.mrf.mxu0
  %v2081 = vadd.f32 0.0, %v2080
  %v2082 = vpop.f32.mrf.mxu0
  %v2083 = vpop.f32.mrf.mxu0
  %v2084 = vpop.f32.mrf.mxu0
  %2085 = vdwg.mxu0
  %v2086 = vmul.f32 %v2081, 0.35355338
  %v2087 = vadd.f32 %v2086, %v52
  %v2088 = vsel %vm227, %v2087, -inf
  %2089 = vmax.xlane.f32.xlu0 %v2088
  %v2090 = vpop.xlane.xlu0 %2089
  %v2091 = vsub.f32 %v2087, %v2090
  %v2092 = vmul.f32 %v2091, 1.442695
  %v2093 = vpow.pop %v2092
  %v2094 = vsel %vm227, %v2093, 0.0
  %2095 = vadd.xlane.f32.xlu0 %v2094
  %v2096 = vpop.xlane.xlu0 %2095
  %v2097 = vrcp.pop %v2096
  %v2098 = vmul.f32 %v2093, %v2097
  %v2099 = vpack.c.bf16 %v2098, %v2098
  %v2100 = vmul.f32 %v1694, %v103
  %v2101 = vpack.c.bf16 %v2100, %v2100
  %v2103 = vsel %vm227, %v2099, 0
  %v2106 = vsel %vm359, %v2101, 0
  %2108 = vmatprep.subr.bf16.mxu0 0
  %2109 = vmatpush1.bf16.msra.mxu0 0
  %2110 = vmatprep.subr.bf16.mxu0 0
  %2111 = vmatpush1.bf16.msra.mxu0 0
  %2112 = vmatprep.subr.bf16.mxu0 0
  %2113 = vmatpush1.bf16.msra.mxu0 0
  %2114 = vmatprep.subr.bf16.mxu0 0
  %2115 = vmatpush1.bf16.msra.mxu0 0
  %2116 = vmatprep.subr.bf16.mxu0 0
  %2117 = vmatpush1.bf16.msra.mxu0 0
  %2118 = vmatprep.subr.bf16.mxu0 0
  %2119 = vmatpush1.bf16.msra.mxu0 0
  %2120 = vmatprep.subr.bf16.mxu0 0
  %2121 = vmatpush1.bf16.msra.mxu0 0
  %2122 = vmatprep.subr.bf16.mxu0 0
  %2123 = vmatpush1.bf16.msra.mxu0 %v2106
  %2124 = vmatprep.subr.bf16.mxu0 0
  %2125 = vmatpush2.bf16.msra.mxu0 0
  %2126 = vmatprep.subr.bf16.mxu0 0
  %2127 = vmatpush2.bf16.msra.mxu0 0
  %2128 = vmatprep.subr.bf16.mxu0 0
  %2129 = vmatpush2.bf16.msra.mxu0 0
  %2130 = vmatprep.subr.bf16.mxu0 0
  %2131 = vmatpush2.bf16.msra.mxu0 0
  %2132 = vmatprep.subr.bf16.mxu0 0
  %2133 = vmatpush2.bf16.msra.mxu0 0
  %2134 = vmatprep.subr.bf16.mxu0 0
  %2135 = vmatpush2.bf16.msra.mxu0 0
  %2136 = vmatprep.subr.bf16.mxu0 0
  %2137 = vmatpush2.bf16.msra.mxu0 0
  %2138 = vmatprep.subr.bf16.mxu0 0
  %2139 = vmatpush2.bf16.msra.mxu0 0
  %2140 = vmatprep.mubr.bf16.mxu0 0
  %2141 = vmatmul.mubr.bf16.gmra.mxu0 %v2103
  %v2142 = vpop.f32.mrf.mxu0
  %v2143 = vadd.f32 0.0, %v2142
  %v2144 = vpop.f32.mrf.mxu0
  %v2145 = vpop.f32.mrf.mxu0
  %v2146 = vpop.f32.mrf.mxu0
  %2147 = vdwg.mxu0
  %v2148 = vadd.f32 %v2035, %v2143
  %v2149 = vpack.c.bf16 %v2148, %v2148
  %v2151 = vsel %vm126, %v2149, 0
  %2153 = vmatprep.subr.bf16.mxu0 0
  %2154 = vmatpush1.bf16.msra.mxu0 0
  %2155 = vmatprep.subr.bf16.mxu0 0
  %2156 = vmatpush1.bf16.msra.mxu0 0
  %2157 = vmatprep.subr.bf16.mxu0 0
  %2158 = vmatpush1.bf16.msra.mxu0 0
  %2159 = vmatprep.subr.bf16.mxu0 0
  %2160 = vmatpush1.bf16.msra.mxu0 0
  %2161 = vmatprep.subr.bf16.mxu0 0
  %2162 = vmatpush1.bf16.msra.mxu0 0
  %2163 = vmatprep.subr.bf16.mxu0 0
  %2164 = vmatpush1.bf16.msra.mxu0 0
  %2165 = vmatprep.subr.bf16.mxu0 0
  %2166 = vmatpush1.bf16.msra.mxu0 %v679
  %2167 = vmatprep.subr.bf16.mxu0 0
  %2168 = vmatpush1.bf16.msra.mxu0 %v677
  %2169 = vmatprep.subr.bf16.mxu0 0
  %2170 = vmatpush2.bf16.msra.mxu0 0
  %2171 = vmatprep.subr.bf16.mxu0 0
  %2172 = vmatpush2.bf16.msra.mxu0 0
  %2173 = vmatprep.subr.bf16.mxu0 0
  %2174 = vmatpush2.bf16.msra.mxu0 0
  %2175 = vmatprep.subr.bf16.mxu0 0
  %2176 = vmatpush2.bf16.msra.mxu0 0
  %2177 = vmatprep.subr.bf16.mxu0 0
  %2178 = vmatpush2.bf16.msra.mxu0 0
  %2179 = vmatprep.subr.bf16.mxu0 0
  %2180 = vmatpush2.bf16.msra.mxu0 0
  %2181 = vmatprep.subr.bf16.mxu0 0
  %2182 = vmatpush2.bf16.msra.mxu0 0
  %2183 = vmatprep.subr.bf16.mxu0 0
  %2184 = vmatpush2.bf16.msra.mxu0 0
  %2185 = vmatprep.mubr.bf16.mxu0 0
  %2186 = vmatmul.mubr.bf16.gmra.mxu0 %v2151
  %v2187 = vpop.f32.mrf.mxu0
  %v2188 = vadd.f32 %v683, %v2187
  %v2189 = vpop.f32.mrf.mxu0
  %v2190 = vpop.f32.mrf.mxu0
  %v2191 = vpop.f32.mrf.mxu0
  %2192 = vdwg.mxu0
  %2194 = vrot.lane.b32.xlu0 %v2188, 32
  %v2195 = vpop.permute.xlu0 %2194
  %v2197 = vadd.f32 %v45, %v2195
  %2199 = vrot.lane.b32.xlu0 %v2197, 96
  %v2200 = vpop.permute.xlu0 %2199
  %v2202 = vsel %vm126, %v2200, 0.0
  %2203 = vadd.xlane.f32.xlu0 %v2202
  %v2204 = vpop.xlane.xlu0 %2203
  %v2205 = vmul.f32 %v2204, %v732
  %v2206 = vsub.f32 %v2197, %v2205
  %v2207 = vmul.f32 %v2206, %v2206
  %2209 = vrot.lane.b32.xlu0 %v2207, 96
  %v2210 = vpop.permute.xlu0 %2209
  %v2212 = vsel %vm126, %v2210, 0.0
  %2213 = vadd.xlane.f32.xlu0 %v2212
  %v2214 = vpop.xlane.xlu0 %2213
  %v2215 = vmul.f32 %v2214, %v732
  %v2216 = vadd.f32 %v2215, 1e-05
  %v2217 = vrsqrt.pop %v2216
  %v2218 = vmul.f32 %v2206, %v2217
  %2220 = vrot.lane.b32.xlu0 %v746, 32
  %v2221 = vpop.permute.xlu0 %2220
  %v2223 = vmul.f32 %v2218, %v2221
  %2225 = vrot.lane.b32.xlu0 %v751, 32
  %v2226 = vpop.permute.xlu0 %2225
  %v2228 = vadd.f32 %v2223, %v2226
  %v2229 = vadd.f32 %v2228, %v48
  %v2230 = vpack.c.bf16 %v2229, %v2229
  %2232 = vrot.lane.b32.xlu0 %v2230, 96
  %v2233 = vpop.permute.xlu0 %2232
  %v2235 = vsel %vm126, %v2233, 0
  %2237 = vmatprep.subr.bf16.mxu0 0
  %2238 = vmatpush1.bf16.msra.mxu0 0
  %2239 = vmatprep.subr.bf16.mxu0 0
  %2240 = vmatpush1.bf16.msra.mxu0 0
  %2241 = vmatprep.subr.bf16.mxu0 0
  %2242 = vmatpush1.bf16.msra.mxu0 0
  %2243 = vmatprep.subr.bf16.mxu0 0
  %2244 = vmatpush1.bf16.msra.mxu0 0
  %2245 = vmatprep.subr.bf16.mxu0 0
  %2246 = vmatpush1.bf16.msra.mxu0 0
  %2247 = vmatprep.subr.bf16.mxu0 0
  %2248 = vmatpush1.bf16.msra.mxu0 0
  %2249 = vmatprep.subr.bf16.mxu0 0
  %2250 = vmatpush1.bf16.msra.mxu0 %v770
  %2251 = vmatprep.subr.bf16.mxu0 0
  %2252 = vmatpush1.bf16.msra.mxu0 %v769
  %2253 = vmatprep.subr.bf16.mxu0 0
  %2254 = vmatpush2.bf16.msra.mxu0 0
  %2255 = vmatprep.subr.bf16.mxu0 0
  %2256 = vmatpush2.bf16.msra.mxu0 0
  %2257 = vmatprep.subr.bf16.mxu0 0
  %2258 = vmatpush2.bf16.msra.mxu0 0
  %2259 = vmatprep.subr.bf16.mxu0 0
  %2260 = vmatpush2.bf16.msra.mxu0 0
  %2261 = vmatprep.subr.bf16.mxu0 0
  %2262 = vmatpush2.bf16.msra.mxu0 0
  %2263 = vmatprep.subr.bf16.mxu0 0
  %2264 = vmatpush2.bf16.msra.mxu0 0
  %2265 = vmatprep.subr.bf16.mxu0 0
  %2266 = vmatpush2.bf16.msra.mxu0 0
  %2267 = vmatprep.subr.bf16.mxu0 0
  %2268 = vmatpush2.bf16.msra.mxu0 0
  %2269 = vmatprep.mubr.bf16.mxu0 0
  %2270 = vmatmul.mubr.bf16.gmra.mxu0 %v2235
  %v2271 = vpop.f32.mrf.mxu0
  %v2272 = vadd.f32 %v759, %v2271
  %v2273 = vpop.f32.mrf.mxu0
  %v2274 = vpop.f32.mrf.mxu0
  %v2275 = vpop.f32.mrf.mxu0
  %2276 = vdwg.mxu0
  %2278 = vrot.lane.b32.xlu0 %v816, 96
  %v2279 = vpop.permute.xlu0 %2278
  %v2281 = vsel %vm126, %v2279, 0
  %2283 = vmatprep.subr.bf16.mxu0 0
  %2284 = vmatpush1.bf16.msra.mxu0 0
  %2285 = vmatprep.subr.bf16.mxu0 0
  %2286 = vmatpush1.bf16.msra.mxu0 0
  %2287 = vmatprep.subr.bf16.mxu0 0
  %2288 = vmatpush1.bf16.msra.mxu0 0
  %2289 = vmatprep.subr.bf16.mxu0 0
  %2290 = vmatpush1.bf16.msra.mxu0 0
  %2291 = vmatprep.subr.bf16.mxu0 0
  %2292 = vmatpush1.bf16.msra.mxu0 0
  %2293 = vmatprep.subr.bf16.mxu0 0
  %2294 = vmatpush1.bf16.msra.mxu0 0
  %2295 = vmatprep.subr.bf16.mxu0 0
  %2296 = vmatpush1.bf16.msra.mxu0 %v820
  %2297 = vmatprep.subr.bf16.mxu0 0
  %2298 = vmatpush1.bf16.msra.mxu0 %v818
  %2299 = vmatprep.subr.bf16.mxu0 0
  %2300 = vmatpush2.bf16.msra.mxu0 0
  %2301 = vmatprep.subr.bf16.mxu0 0
  %2302 = vmatpush2.bf16.msra.mxu0 0
  %2303 = vmatprep.subr.bf16.mxu0 0
  %2304 = vmatpush2.bf16.msra.mxu0 0
  %2305 = vmatprep.subr.bf16.mxu0 0
  %2306 = vmatpush2.bf16.msra.mxu0 0
  %2307 = vmatprep.subr.bf16.mxu0 0
  %2308 = vmatpush2.bf16.msra.mxu0 0
  %2309 = vmatprep.subr.bf16.mxu0 0
  %2310 = vmatpush2.bf16.msra.mxu0 0
  %2311 = vmatprep.subr.bf16.mxu0 0
  %2312 = vmatpush2.bf16.msra.mxu0 0
  %2313 = vmatprep.subr.bf16.mxu0 0
  %2314 = vmatpush2.bf16.msra.mxu0 0
  %2315 = vmatprep.mubr.bf16.mxu0 0
  %2316 = vmatmul.mubr.bf16.gmra.mxu0 %v2281
  %v2317 = vpop.f32.mrf.mxu0
  %v2318 = vadd.f32 %v824, %v2317
  %v2319 = vpop.f32.mrf.mxu0
  %v2320 = vpop.f32.mrf.mxu0
  %v2321 = vadd.f32 %v824, %v2320
  %v2322 = vpop.f32.mrf.mxu0
  %2323 = vdwg.mxu0
  %2325 = vrot.lane.b32.xlu0 %v870, 96
  %v2326 = vpop.permute.xlu0 %2325
  %v2328 = vsel %vm126, %v2326, 0
  %2330 = vmatprep.subr.bf16.mxu0 0
  %2331 = vmatpush1.bf16.msra.mxu0 0
  %2332 = vmatprep.subr.bf16.mxu0 0
  %2333 = vmatpush1.bf16.msra.mxu0 0
  %2334 = vmatprep.subr.bf16.mxu0 0
  %2335 = vmatpush1.bf16.msra.mxu0 0
  %2336 = vmatprep.subr.bf16.mxu0 0
  %2337 = vmatpush1.bf16.msra.mxu0 0
  %2338 = vmatprep.subr.bf16.mxu0 0
  %2339 = vmatpush1.bf16.msra.mxu0 0
  %2340 = vmatprep.subr.bf16.mxu0 0
  %2341 = vmatpush1.bf16.msra.mxu0 0
  %2342 = vmatprep.subr.bf16.mxu0 0
  %2343 = vmatpush1.bf16.msra.mxu0 %v874
  %2344 = vmatprep.subr.bf16.mxu0 0
  %2345 = vmatpush1.bf16.msra.mxu0 %v872
  %2346 = vmatprep.subr.bf16.mxu0 0
  %2347 = vmatpush2.bf16.msra.mxu0 0
  %2348 = vmatprep.subr.bf16.mxu0 0
  %2349 = vmatpush2.bf16.msra.mxu0 0
  %2350 = vmatprep.subr.bf16.mxu0 0
  %2351 = vmatpush2.bf16.msra.mxu0 0
  %2352 = vmatprep.subr.bf16.mxu0 0
  %2353 = vmatpush2.bf16.msra.mxu0 0
  %2354 = vmatprep.subr.bf16.mxu0 0
  %2355 = vmatpush2.bf16.msra.mxu0 0
  %2356 = vmatprep.subr.bf16.mxu0 0
  %2357 = vmatpush2.bf16.msra.mxu0 0
  %2358 = vmatprep.subr.bf16.mxu0 0
  %2359 = vmatpush2.bf16.msra.mxu0 0
  %2360 = vmatprep.subr.bf16.mxu0 0
  %2361 = vmatpush2.bf16.msra.mxu0 0
  %2362 = vmatprep.mubr.bf16.mxu0 0
  %2363 = vmatmul.mubr.bf16.gmra.mxu0 %v2328
  %v2364 = vpop.f32.mrf.mxu0
  %v2365 = vadd.f32 %v878, %v2364
  %v2366 = vpop.f32.mrf.mxu0
  %v2367 = vpop.f32.mrf.mxu0
  %v2368 = vadd.f32 %v878, %v2367
  %v2369 = vpop.f32.mrf.mxu0
  %2370 = vdwg.mxu0
  %v2371 = vpack.c.bf16 %v2272, %v2272
  %v2372 = vpack.c.bf16 %v2321, %v2318
  %v2374 = vsel %vm227, %v2371, 0
  %v2377 = vsel %vm227, %v2372, 0
  %2379 = vmatprep.subr.bf16.mxu0 0
  %2380 = vmatpush1.bf16.xpose.msra.mxu0 0
  %2381 = vmatprep.subr.bf16.mxu0 0
  %2382 = vmatpush1.bf16.xpose.msra.mxu0 0
  %2383 = vmatprep.subr.bf16.mxu0 0
  %2384 = vmatpush1.bf16.xpose.msra.mxu0 0
  %2385 = vmatprep.subr.bf16.mxu0 0
  %2386 = vmatpush1.bf16.xpose.msra.mxu0 0
  %2387 = vmatprep.subr.bf16.mxu0 0
  %2388 = vmatpush1.bf16.xpose.msra.mxu0 0
  %2389 = vmatprep.subr.bf16.mxu0 0
  %2390 = vmatpush1.bf16.xpose.msra.mxu0 0
  %2391 = vmatprep.subr.bf16.mxu0 0
  %2392 = vmatpush1.bf16.xpose.msra.mxu0 0
  %2393 = vmatprep.subr.bf16.mxu0 0
  %2394 = vmatpush1.bf16.xpose.msra.mxu0 %v2377
  %2395 = vmatprep.subr.bf16.mxu0 0
  %2396 = vmatpush2.bf16.xpose.msra.mxu0 0
  %2397 = vmatprep.subr.bf16.mxu0 0
  %2398 = vmatpush2.bf16.xpose.msra.mxu0 0
  %2399 = vmatprep.subr.bf16.mxu0 0
  %2400 = vmatpush2.bf16.xpose.msra.mxu0 0
  %2401 = vmatprep.subr.bf16.mxu0 0
  %2402 = vmatpush2.bf16.xpose.msra.mxu0 0
  %2403 = vmatprep.subr.bf16.mxu0 0
  %2404 = vmatpush2.bf16.xpose.msra.mxu0 0
  %2405 = vmatprep.subr.bf16.mxu0 0
  %2406 = vmatpush2.bf16.xpose.msra.mxu0 0
  %2407 = vmatprep.subr.bf16.mxu0 0
  %2408 = vmatpush2.bf16.xpose.msra.mxu0 0
  %2409 = vmatprep.subr.bf16.mxu0 0
  %2410 = vmatpush2.bf16.xpose.msra.mxu0 0
  %2411 = vmatprep.mubr.bf16.mxu0 0
  %2412 = vmatmul.mubr.bf16.gmra.mxu0 %v2374
  %v2413 = vpop.f32.mrf.mxu0
  %v2414 = vadd.f32 0.0, %v2413
  %v2415 = vpop.f32.mrf.mxu0
  %v2416 = vpop.f32.mrf.mxu0
  %v2417 = vpop.f32.mrf.mxu0
  %2418 = vdwg.mxu0
  %v2419 = vmul.f32 %v2414, 0.35355338
  %v2420 = vadd.f32 %v2419, %v54
  %v2421 = vsel %vm974, %v2420, -inf
  %2422 = vmax.xlane.f32.xlu0 %v2421
  %v2423 = vpop.xlane.xlu0 %2422
  %v2424 = vsub.f32 %v2420, %v2423
  %v2425 = vmul.f32 %v2424, 1.442695
  %v2426 = vpow.pop %v2425
  %v2427 = vsel %vm974, %v2426, 0.0
  %2428 = vadd.xlane.f32.xlu0 %v2427
  %v2429 = vpop.xlane.xlu0 %2428
  %v2430 = vrcp.pop %v2429
  %v2431 = vmul.f32 %v2426, %v2430
  %v2432 = vpack.c.bf16 %v2431, %v2431
  %v2433 = vmul.f32 %v2365, %v88
  %v2434 = vmul.f32 %v2368, %v88
  %v2435 = vpack.c.bf16 %v2434, %v2433
  %2437 = vrot.lane.b32.xlu0 %v2371, 120
  %v2438 = vpop.permute.xlu0 %2437
  %2440 = vrot.lane.b32.xlu0 %v2372, 120
  %v2441 = vpop.permute.xlu0 %2440
  %v2443 = vsel %vm227, %v2438, 0
  %v2446 = vsel %vm227, %v2441, 0
  %2448 = vmatprep.subr.bf16.mxu0 0
  %2449 = vmatpush1.bf16.xpose.msra.mxu0 0
  %2450 = vmatprep.subr.bf16.mxu0 0
  %2451 = vmatpush1.bf16.xpose.msra.mxu0 0
  %2452 = vmatprep.subr.bf16.mxu0 0
  %2453 = vmatpush1.bf16.xpose.msra.mxu0 0
  %2454 = vmatprep.subr.bf16.mxu0 0
  %2455 = vmatpush1.bf16.xpose.msra.mxu0 0
  %2456 = vmatprep.subr.bf16.mxu0 0
  %2457 = vmatpush1.bf16.xpose.msra.mxu0 0
  %2458 = vmatprep.subr.bf16.mxu0 0
  %2459 = vmatpush1.bf16.xpose.msra.mxu0 0
  %2460 = vmatprep.subr.bf16.mxu0 0
  %2461 = vmatpush1.bf16.xpose.msra.mxu0 0
  %2462 = vmatprep.subr.bf16.mxu0 0
  %2463 = vmatpush1.bf16.xpose.msra.mxu0 %v2446
  %2464 = vmatprep.subr.bf16.mxu0 0
  %2465 = vmatpush2.bf16.xpose.msra.mxu0 0
  %2466 = vmatprep.subr.bf16.mxu0 0
  %2467 = vmatpush2.bf16.xpose.msra.mxu0 0
  %2468 = vmatprep.subr.bf16.mxu0 0
  %2469 = vmatpush2.bf16.xpose.msra.mxu0 0
  %2470 = vmatprep.subr.bf16.mxu0 0
  %2471 = vmatpush2.bf16.xpose.msra.mxu0 0
  %2472 = vmatprep.subr.bf16.mxu0 0
  %2473 = vmatpush2.bf16.xpose.msra.mxu0 0
  %2474 = vmatprep.subr.bf16.mxu0 0
  %2475 = vmatpush2.bf16.xpose.msra.mxu0 0
  %2476 = vmatprep.subr.bf16.mxu0 0
  %2477 = vmatpush2.bf16.xpose.msra.mxu0 0
  %2478 = vmatprep.subr.bf16.mxu0 0
  %2479 = vmatpush2.bf16.xpose.msra.mxu0 0
  %2480 = vmatprep.mubr.bf16.mxu0 0
  %2481 = vmatmul.mubr.bf16.gmra.mxu0 %v2443
  %v2482 = vpop.f32.mrf.mxu0
  %v2483 = vadd.f32 0.0, %v2482
  %v2484 = vpop.f32.mrf.mxu0
  %v2485 = vpop.f32.mrf.mxu0
  %v2486 = vpop.f32.mrf.mxu0
  %2487 = vdwg.mxu0
  %v2488 = vmul.f32 %v2483, 0.35355338
  %v2489 = vadd.f32 %v2488, %v54
  %v2490 = vsel %vm974, %v2489, -inf
  %2491 = vmax.xlane.f32.xlu0 %v2490
  %v2492 = vpop.xlane.xlu0 %2491
  %v2493 = vsub.f32 %v2489, %v2492
  %v2494 = vmul.f32 %v2493, 1.442695
  %v2495 = vpow.pop %v2494
  %v2496 = vsel %vm974, %v2495, 0.0
  %2497 = vadd.xlane.f32.xlu0 %v2496
  %v2498 = vpop.xlane.xlu0 %2497
  %v2499 = vrcp.pop %v2498
  %v2500 = vmul.f32 %v2495, %v2499
  %v2501 = vpack.c.bf16 %v2500, %v2500
  %v2502 = vmul.f32 %v2365, %v93
  %v2503 = vmul.f32 %v2368, %v93
  %v2504 = vpack.c.bf16 %v2503, %v2502
  %v2506 = vsel %vm974, %v2501, 0
  %2508 = vmatprep.subr.bf16.mxu0 0
  %2509 = vmatpush1.bf16.msra.mxu0 0
  %2510 = vmatprep.subr.bf16.mxu0 0
  %2511 = vmatpush1.bf16.msra.mxu0 0
  %2512 = vmatprep.subr.bf16.mxu0 0
  %2513 = vmatpush1.bf16.msra.mxu0 0
  %2514 = vmatprep.subr.bf16.mxu0 0
  %2515 = vmatpush1.bf16.msra.mxu0 0
  %2516 = vmatprep.subr.bf16.mxu0 0
  %2517 = vmatpush1.bf16.msra.mxu0 0
  %2518 = vmatprep.subr.bf16.mxu0 0
  %2519 = vmatpush1.bf16.msra.mxu0 0
  %2520 = vmatprep.subr.bf16.mxu0 0
  %2521 = vmatpush1.bf16.msra.mxu0 0
  %2522 = vmatprep.subr.bf16.mxu0 0
  %2523 = vmatpush1.bf16.msra.mxu0 %v2504
  %2524 = vmatprep.subr.bf16.mxu0 0
  %2525 = vmatpush2.bf16.msra.mxu0 0
  %2526 = vmatprep.subr.bf16.mxu0 0
  %2527 = vmatpush2.bf16.msra.mxu0 0
  %2528 = vmatprep.subr.bf16.mxu0 0
  %2529 = vmatpush2.bf16.msra.mxu0 0
  %2530 = vmatprep.subr.bf16.mxu0 0
  %2531 = vmatpush2.bf16.msra.mxu0 0
  %2532 = vmatprep.subr.bf16.mxu0 0
  %2533 = vmatpush2.bf16.msra.mxu0 0
  %2534 = vmatprep.subr.bf16.mxu0 0
  %2535 = vmatpush2.bf16.msra.mxu0 0
  %2536 = vmatprep.subr.bf16.mxu0 0
  %2537 = vmatpush2.bf16.msra.mxu0 0
  %2538 = vmatprep.subr.bf16.mxu0 0
  %2539 = vmatpush2.bf16.msra.mxu0 0
  %2540 = vmatprep.mubr.bf16.mxu0 0
  %2541 = vmatmul.mubr.bf16.gmra.mxu0 %v2506
  %v2542 = vpop.f32.mrf.mxu0
  %v2543 = vadd.f32 0.0, %v2542
  %v2544 = vpop.f32.mrf.mxu0
  %v2545 = vpop.f32.mrf.mxu0
  %v2546 = vpop.f32.mrf.mxu0
  %2547 = vdwg.mxu0
  %v2549 = vsel %vm974, %v2432, 0
  %2551 = vmatprep.subr.bf16.mxu0 0
  %2552 = vmatpush1.bf16.msra.mxu0 0
  %2553 = vmatprep.subr.bf16.mxu0 0
  %2554 = vmatpush1.bf16.msra.mxu0 0
  %2555 = vmatprep.subr.bf16.mxu0 0
  %2556 = vmatpush1.bf16.msra.mxu0 0
  %2557 = vmatprep.subr.bf16.mxu0 0
  %2558 = vmatpush1.bf16.msra.mxu0 0
  %2559 = vmatprep.subr.bf16.mxu0 0
  %2560 = vmatpush1.bf16.msra.mxu0 0
  %2561 = vmatprep.subr.bf16.mxu0 0
  %2562 = vmatpush1.bf16.msra.mxu0 0
  %2563 = vmatprep.subr.bf16.mxu0 0
  %2564 = vmatpush1.bf16.msra.mxu0 0
  %2565 = vmatprep.subr.bf16.mxu0 0
  %2566 = vmatpush1.bf16.msra.mxu0 %v2435
  %2567 = vmatprep.subr.bf16.mxu0 0
  %2568 = vmatpush2.bf16.msra.mxu0 0
  %2569 = vmatprep.subr.bf16.mxu0 0
  %2570 = vmatpush2.bf16.msra.mxu0 0
  %2571 = vmatprep.subr.bf16.mxu0 0
  %2572 = vmatpush2.bf16.msra.mxu0 0
  %2573 = vmatprep.subr.bf16.mxu0 0
  %2574 = vmatpush2.bf16.msra.mxu0 0
  %2575 = vmatprep.subr.bf16.mxu0 0
  %2576 = vmatpush2.bf16.msra.mxu0 0
  %2577 = vmatprep.subr.bf16.mxu0 0
  %2578 = vmatpush2.bf16.msra.mxu0 0
  %2579 = vmatprep.subr.bf16.mxu0 0
  %2580 = vmatpush2.bf16.msra.mxu0 0
  %2581 = vmatprep.subr.bf16.mxu0 0
  %2582 = vmatpush2.bf16.msra.mxu0 0
  %2583 = vmatprep.mubr.bf16.mxu0 0
  %2584 = vmatmul.mubr.bf16.gmra.mxu0 %v2549
  %v2585 = vpop.f32.mrf.mxu0
  %v2586 = vadd.f32 %v2543, %v2585
  %v2587 = vpop.f32.mrf.mxu0
  %v2588 = vpop.f32.mrf.mxu0
  %v2589 = vpop.f32.mrf.mxu0
  %2590 = vdwg.mxu0
  %2591 = vrot.lane.b32.xlu0 %v2371, 112
  %v2592 = vpop.permute.xlu0 %2591
  %2593 = vrot.lane.b32.xlu0 %v2372, 112
  %v2594 = vpop.permute.xlu0 %2593
  %v2596 = vsel %vm227, %v2592, 0
  %v2599 = vsel %vm227, %v2594, 0
  %2601 = vmatprep.subr.bf16.mxu0 0
  %2602 = vmatpush1.bf16.xpose.msra.mxu0 0
  %2603 = vmatprep.subr.bf16.mxu0 0
  %2604 = vmatpush1.bf16.xpose.msra.mxu0 0
  %2605 = vmatprep.subr.bf16.mxu0 0
  %2606 = vmatpush1.bf16.xpose.msra.mxu0 0
  %2607 = vmatprep.subr.bf16.mxu0 0
  %2608 = vmatpush1.bf16.xpose.msra.mxu0 0
  %2609 = vmatprep.subr.bf16.mxu0 0
  %2610 = vmatpush1.bf16.xpose.msra.mxu0 0
  %2611 = vmatprep.subr.bf16.mxu0 0
  %2612 = vmatpush1.bf16.xpose.msra.mxu0 0
  %2613 = vmatprep.subr.bf16.mxu0 0
  %2614 = vmatpush1.bf16.xpose.msra.mxu0 0
  %2615 = vmatprep.subr.bf16.mxu0 0
  %2616 = vmatpush1.bf16.xpose.msra.mxu0 %v2599
  %2617 = vmatprep.subr.bf16.mxu0 0
  %2618 = vmatpush2.bf16.xpose.msra.mxu0 0
  %2619 = vmatprep.subr.bf16.mxu0 0
  %2620 = vmatpush2.bf16.xpose.msra.mxu0 0
  %2621 = vmatprep.subr.bf16.mxu0 0
  %2622 = vmatpush2.bf16.xpose.msra.mxu0 0
  %2623 = vmatprep.subr.bf16.mxu0 0
  %2624 = vmatpush2.bf16.xpose.msra.mxu0 0
  %2625 = vmatprep.subr.bf16.mxu0 0
  %2626 = vmatpush2.bf16.xpose.msra.mxu0 0
  %2627 = vmatprep.subr.bf16.mxu0 0
  %2628 = vmatpush2.bf16.xpose.msra.mxu0 0
  %2629 = vmatprep.subr.bf16.mxu0 0
  %2630 = vmatpush2.bf16.xpose.msra.mxu0 0
  %2631 = vmatprep.subr.bf16.mxu0 0
  %2632 = vmatpush2.bf16.xpose.msra.mxu0 0
  %2633 = vmatprep.mubr.bf16.mxu0 0
  %2634 = vmatmul.mubr.bf16.gmra.mxu0 %v2596
  %v2635 = vpop.f32.mrf.mxu0
  %v2636 = vadd.f32 0.0, %v2635
  %v2637 = vpop.f32.mrf.mxu0
  %v2638 = vpop.f32.mrf.mxu0
  %v2639 = vpop.f32.mrf.mxu0
  %2640 = vdwg.mxu0
  %v2641 = vmul.f32 %v2636, 0.35355338
  %v2642 = vadd.f32 %v2641, %v54
  %v2643 = vsel %vm974, %v2642, -inf
  %2644 = vmax.xlane.f32.xlu0 %v2643
  %v2645 = vpop.xlane.xlu0 %2644
  %v2646 = vsub.f32 %v2642, %v2645
  %v2647 = vmul.f32 %v2646, 1.442695
  %v2648 = vpow.pop %v2647
  %v2649 = vsel %vm974, %v2648, 0.0
  %2650 = vadd.xlane.f32.xlu0 %v2649
  %v2651 = vpop.xlane.xlu0 %2650
  %v2652 = vrcp.pop %v2651
  %v2653 = vmul.f32 %v2648, %v2652
  %v2654 = vpack.c.bf16 %v2653, %v2653
  %v2655 = vmul.f32 %v2365, %v98
  %v2656 = vmul.f32 %v2368, %v98
  %v2657 = vpack.c.bf16 %v2656, %v2655
  %v2659 = vsel %vm974, %v2654, 0
  %2661 = vmatprep.subr.bf16.mxu0 0
  %2662 = vmatpush1.bf16.msra.mxu0 0
  %2663 = vmatprep.subr.bf16.mxu0 0
  %2664 = vmatpush1.bf16.msra.mxu0 0
  %2665 = vmatprep.subr.bf16.mxu0 0
  %2666 = vmatpush1.bf16.msra.mxu0 0
  %2667 = vmatprep.subr.bf16.mxu0 0
  %2668 = vmatpush1.bf16.msra.mxu0 0
  %2669 = vmatprep.subr.bf16.mxu0 0
  %2670 = vmatpush1.bf16.msra.mxu0 0
  %2671 = vmatprep.subr.bf16.mxu0 0
  %2672 = vmatpush1.bf16.msra.mxu0 0
  %2673 = vmatprep.subr.bf16.mxu0 0
  %2674 = vmatpush1.bf16.msra.mxu0 0
  %2675 = vmatprep.subr.bf16.mxu0 0
  %2676 = vmatpush1.bf16.msra.mxu0 %v2657
  %2677 = vmatprep.subr.bf16.mxu0 0
  %2678 = vmatpush2.bf16.msra.mxu0 0
  %2679 = vmatprep.subr.bf16.mxu0 0
  %2680 = vmatpush2.bf16.msra.mxu0 0
  %2681 = vmatprep.subr.bf16.mxu0 0
  %2682 = vmatpush2.bf16.msra.mxu0 0
  %2683 = vmatprep.subr.bf16.mxu0 0
  %2684 = vmatpush2.bf16.msra.mxu0 0
  %2685 = vmatprep.subr.bf16.mxu0 0
  %2686 = vmatpush2.bf16.msra.mxu0 0
  %2687 = vmatprep.subr.bf16.mxu0 0
  %2688 = vmatpush2.bf16.msra.mxu0 0
  %2689 = vmatprep.subr.bf16.mxu0 0
  %2690 = vmatpush2.bf16.msra.mxu0 0
  %2691 = vmatprep.subr.bf16.mxu0 0
  %2692 = vmatpush2.bf16.msra.mxu0 0
  %2693 = vmatprep.mubr.bf16.mxu0 0
  %2694 = vmatmul.mubr.bf16.gmra.mxu0 %v2659
  %v2695 = vpop.f32.mrf.mxu0
  %v2696 = vadd.f32 0.0, %v2695
  %v2697 = vpop.f32.mrf.mxu0
  %v2698 = vpop.f32.mrf.mxu0
  %v2699 = vpop.f32.mrf.mxu0
  %2700 = vdwg.mxu0
  %v2701 = vadd.f32 %v2586, %v2696
  %2702 = vrot.lane.b32.xlu0 %v2371, 104
  %v2703 = vpop.permute.xlu0 %2702
  %2704 = vrot.lane.b32.xlu0 %v2372, 104
  %v2705 = vpop.permute.xlu0 %2704
  %v2707 = vsel %vm227, %v2703, 0
  %v2710 = vsel %vm227, %v2705, 0
  %2712 = vmatprep.subr.bf16.mxu0 0
  %2713 = vmatpush1.bf16.xpose.msra.mxu0 0
  %2714 = vmatprep.subr.bf16.mxu0 0
  %2715 = vmatpush1.bf16.xpose.msra.mxu0 0
  %2716 = vmatprep.subr.bf16.mxu0 0
  %2717 = vmatpush1.bf16.xpose.msra.mxu0 0
  %2718 = vmatprep.subr.bf16.mxu0 0
  %2719 = vmatpush1.bf16.xpose.msra.mxu0 0
  %2720 = vmatprep.subr.bf16.mxu0 0
  %2721 = vmatpush1.bf16.xpose.msra.mxu0 0
  %2722 = vmatprep.subr.bf16.mxu0 0
  %2723 = vmatpush1.bf16.xpose.msra.mxu0 0
  %2724 = vmatprep.subr.bf16.mxu0 0
  %2725 = vmatpush1.bf16.xpose.msra.mxu0 0
  %2726 = vmatprep.subr.bf16.mxu0 0
  %2727 = vmatpush1.bf16.xpose.msra.mxu0 %v2710
  %2728 = vmatprep.subr.bf16.mxu0 0
  %2729 = vmatpush2.bf16.xpose.msra.mxu0 0
  %2730 = vmatprep.subr.bf16.mxu0 0
  %2731 = vmatpush2.bf16.xpose.msra.mxu0 0
  %2732 = vmatprep.subr.bf16.mxu0 0
  %2733 = vmatpush2.bf16.xpose.msra.mxu0 0
  %2734 = vmatprep.subr.bf16.mxu0 0
  %2735 = vmatpush2.bf16.xpose.msra.mxu0 0
  %2736 = vmatprep.subr.bf16.mxu0 0
  %2737 = vmatpush2.bf16.xpose.msra.mxu0 0
  %2738 = vmatprep.subr.bf16.mxu0 0
  %2739 = vmatpush2.bf16.xpose.msra.mxu0 0
  %2740 = vmatprep.subr.bf16.mxu0 0
  %2741 = vmatpush2.bf16.xpose.msra.mxu0 0
  %2742 = vmatprep.subr.bf16.mxu0 0
  %2743 = vmatpush2.bf16.xpose.msra.mxu0 0
  %2744 = vmatprep.mubr.bf16.mxu0 0
  %2745 = vmatmul.mubr.bf16.gmra.mxu0 %v2707
  %v2746 = vpop.f32.mrf.mxu0
  %v2747 = vadd.f32 0.0, %v2746
  %v2748 = vpop.f32.mrf.mxu0
  %v2749 = vpop.f32.mrf.mxu0
  %v2750 = vpop.f32.mrf.mxu0
  %2751 = vdwg.mxu0
  %v2752 = vmul.f32 %v2747, 0.35355338
  %v2753 = vadd.f32 %v2752, %v54
  %v2754 = vsel %vm974, %v2753, -inf
  %2755 = vmax.xlane.f32.xlu0 %v2754
  %v2756 = vpop.xlane.xlu0 %2755
  %v2757 = vsub.f32 %v2753, %v2756
  %v2758 = vmul.f32 %v2757, 1.442695
  %v2759 = vpow.pop %v2758
  %v2760 = vsel %vm974, %v2759, 0.0
  %2761 = vadd.xlane.f32.xlu0 %v2760
  %v2762 = vpop.xlane.xlu0 %2761
  %v2763 = vrcp.pop %v2762
  %v2764 = vmul.f32 %v2759, %v2763
  %v2765 = vpack.c.bf16 %v2764, %v2764
  %v2766 = vmul.f32 %v2365, %v103
  %v2767 = vmul.f32 %v2368, %v103
  %v2768 = vpack.c.bf16 %v2767, %v2766
  %v2770 = vsel %vm974, %v2765, 0
  %2772 = vmatprep.subr.bf16.mxu0 0
  %2773 = vmatpush1.bf16.msra.mxu0 0
  %2774 = vmatprep.subr.bf16.mxu0 0
  %2775 = vmatpush1.bf16.msra.mxu0 0
  %2776 = vmatprep.subr.bf16.mxu0 0
  %2777 = vmatpush1.bf16.msra.mxu0 0
  %2778 = vmatprep.subr.bf16.mxu0 0
  %2779 = vmatpush1.bf16.msra.mxu0 0
  %2780 = vmatprep.subr.bf16.mxu0 0
  %2781 = vmatpush1.bf16.msra.mxu0 0
  %2782 = vmatprep.subr.bf16.mxu0 0
  %2783 = vmatpush1.bf16.msra.mxu0 0
  %2784 = vmatprep.subr.bf16.mxu0 0
  %2785 = vmatpush1.bf16.msra.mxu0 0
  %2786 = vmatprep.subr.bf16.mxu0 0
  %2787 = vmatpush1.bf16.msra.mxu0 %v2768
  %2788 = vmatprep.subr.bf16.mxu0 0
  %2789 = vmatpush2.bf16.msra.mxu0 0
  %2790 = vmatprep.subr.bf16.mxu0 0
  %2791 = vmatpush2.bf16.msra.mxu0 0
  %2792 = vmatprep.subr.bf16.mxu0 0
  %2793 = vmatpush2.bf16.msra.mxu0 0
  %2794 = vmatprep.subr.bf16.mxu0 0
  %2795 = vmatpush2.bf16.msra.mxu0 0
  %2796 = vmatprep.subr.bf16.mxu0 0
  %2797 = vmatpush2.bf16.msra.mxu0 0
  %2798 = vmatprep.subr.bf16.mxu0 0
  %2799 = vmatpush2.bf16.msra.mxu0 0
  %2800 = vmatprep.subr.bf16.mxu0 0
  %2801 = vmatpush2.bf16.msra.mxu0 0
  %2802 = vmatprep.subr.bf16.mxu0 0
  %2803 = vmatpush2.bf16.msra.mxu0 0
  %2804 = vmatprep.mubr.bf16.mxu0 0
  %2805 = vmatmul.mubr.bf16.gmra.mxu0 %v2770
  %v2806 = vpop.f32.mrf.mxu0
  %v2807 = vadd.f32 0.0, %v2806
  %v2808 = vpop.f32.mrf.mxu0
  %v2809 = vpop.f32.mrf.mxu0
  %v2810 = vpop.f32.mrf.mxu0
  %2811 = vdwg.mxu0
  %v2812 = vadd.f32 %v2701, %v2807
  %v2813 = vpack.c.bf16 %v2812, %v2812
  %v2815 = vsel %vm126, %v2813, 0
  %2817 = vmatprep.subr.bf16.mxu0 0
  %2818 = vmatpush1.bf16.msra.mxu0 0
  %2819 = vmatprep.subr.bf16.mxu0 0
  %2820 = vmatpush1.bf16.msra.mxu0 0
  %2821 = vmatprep.subr.bf16.mxu0 0
  %2822 = vmatpush1.bf16.msra.mxu0 0
  %2823 = vmatprep.subr.bf16.mxu0 0
  %2824 = vmatpush1.bf16.msra.mxu0 0
  %2825 = vmatprep.subr.bf16.mxu0 0
  %2826 = vmatpush1.bf16.msra.mxu0 0
  %2827 = vmatprep.subr.bf16.mxu0 0
  %2828 = vmatpush1.bf16.msra.mxu0 0
  %2829 = vmatprep.subr.bf16.mxu0 0
  %2830 = vmatpush1.bf16.msra.mxu0 %v1371
  %2831 = vmatprep.subr.bf16.mxu0 0
  %2832 = vmatpush1.bf16.msra.mxu0 %v1369
  %2833 = vmatprep.subr.bf16.mxu0 0
  %2834 = vmatpush2.bf16.msra.mxu0 0
  %2835 = vmatprep.subr.bf16.mxu0 0
  %2836 = vmatpush2.bf16.msra.mxu0 0
  %2837 = vmatprep.subr.bf16.mxu0 0
  %2838 = vmatpush2.bf16.msra.mxu0 0
  %2839 = vmatprep.subr.bf16.mxu0 0
  %2840 = vmatpush2.bf16.msra.mxu0 0
  %2841 = vmatprep.subr.bf16.mxu0 0
  %2842 = vmatpush2.bf16.msra.mxu0 0
  %2843 = vmatprep.subr.bf16.mxu0 0
  %2844 = vmatpush2.bf16.msra.mxu0 0
  %2845 = vmatprep.subr.bf16.mxu0 0
  %2846 = vmatpush2.bf16.msra.mxu0 0
  %2847 = vmatprep.subr.bf16.mxu0 0
  %2848 = vmatpush2.bf16.msra.mxu0 0
  %2849 = vmatprep.mubr.bf16.mxu0 0
  %2850 = vmatmul.mubr.bf16.gmra.mxu0 %v2815
  %v2851 = vpop.f32.mrf.mxu0
  %v2852 = vadd.f32 %v1375, %v2851
  %v2853 = vpop.f32.mrf.mxu0
  %v2854 = vpop.f32.mrf.mxu0
  %v2855 = vpop.f32.mrf.mxu0
  %2856 = vdwg.mxu0
  %2858 = vrot.lane.b32.xlu0 %v2852, 32
  %v2859 = vpop.permute.xlu0 %2858
  %v2861 = vadd.f32 %v2228, %v2859
  %2863 = vrot.lane.b32.xlu0 %v2861, 96
  %v2864 = vpop.permute.xlu0 %2863
  %v2866 = vsel %vm126, %v2864, 0.0
  %2867 = vadd.xlane.f32.xlu0 %v2866
  %v2868 = vpop.xlane.xlu0 %2867
  %v2869 = vmul.f32 %v2868, %v732
  %v2870 = vsub.f32 %v2861, %v2869
  %v2871 = vmul.f32 %v2870, %v2870
  %2873 = vrot.lane.b32.xlu0 %v2871, 96
  %v2874 = vpop.permute.xlu0 %2873
  %v2876 = vsel %vm126, %v2874, 0.0
  %2877 = vadd.xlane.f32.xlu0 %v2876
  %v2878 = vpop.xlane.xlu0 %2877
  %v2879 = vmul.f32 %v2878, %v732
  %v2880 = vadd.f32 %v2879, 1e-05
  %v2881 = vrsqrt.pop %v2880
  %v2882 = vmul.f32 %v2870, %v2881
  %2884 = vrot.lane.b32.xlu0 %v1437, 32
  %v2885 = vpop.permute.xlu0 %2884
  %v2887 = vmul.f32 %v2882, %v2885
  %2889 = vrot.lane.b32.xlu0 %v1442, 32
  %v2890 = vpop.permute.xlu0 %2889
  %v2892 = vadd.f32 %v2887, %v2890
  %v2893 = vpack.c.bf16 %v2892, %v2892
  %2895 = vrot.lane.b32.xlu0 %v2893, 96
  %v2896 = vpop.permute.xlu0 %2895
  %v2898 = vsel %vm126, %v2896, 0
  %2900 = vmatprep.subr.bf16.mxu0 0
  %2901 = vmatpush1.bf16.msra.mxu0 0
  %2902 = vmatprep.subr.bf16.mxu0 0
  %2903 = vmatpush1.bf16.msra.mxu0 0
  %2904 = vmatprep.subr.bf16.mxu0 0
  %2905 = vmatpush1.bf16.msra.mxu0 0
  %2906 = vmatprep.subr.bf16.mxu0 0
  %2907 = vmatpush1.bf16.msra.mxu0 0
  %2908 = vmatprep.subr.bf16.mxu0 0
  %2909 = vmatpush1.bf16.msra.mxu0 0
  %2910 = vmatprep.subr.bf16.mxu0 0
  %2911 = vmatpush1.bf16.msra.mxu0 0
  %2912 = vmatprep.subr.bf16.mxu0 0
  %2913 = vmatpush1.bf16.msra.mxu0 %v1460
  %2914 = vmatprep.subr.bf16.mxu0 0
  %2915 = vmatpush1.bf16.msra.mxu0 %v1459
  %2916 = vmatprep.subr.bf16.mxu0 0
  %2917 = vmatpush2.bf16.msra.mxu0 0
  %2918 = vmatprep.subr.bf16.mxu0 0
  %2919 = vmatpush2.bf16.msra.mxu0 0
  %2920 = vmatprep.subr.bf16.mxu0 0
  %2921 = vmatpush2.bf16.msra.mxu0 0
  %2922 = vmatprep.subr.bf16.mxu0 0
  %2923 = vmatpush2.bf16.msra.mxu0 0
  %2924 = vmatprep.subr.bf16.mxu0 0
  %2925 = vmatpush2.bf16.msra.mxu0 0
  %2926 = vmatprep.subr.bf16.mxu0 0
  %2927 = vmatpush2.bf16.msra.mxu0 0
  %2928 = vmatprep.subr.bf16.mxu0 0
  %2929 = vmatpush2.bf16.msra.mxu0 0
  %2930 = vmatprep.subr.bf16.mxu0 0
  %2931 = vmatpush2.bf16.msra.mxu0 0
  %2932 = vmatprep.mubr.bf16.mxu0 0
  %2933 = vmatmul.mubr.bf16.gmra.mxu0 %v2898
  %v2934 = vpop.f32.mrf.mxu0
  %v2935 = vadd.f32 %v1449, %v2934
  %v2936 = vpop.f32.mrf.mxu0
  %v2937 = vpop.f32.mrf.mxu0
  %v2938 = vpop.f32.mrf.mxu0
  %2939 = vdwg.mxu0
  %v2940 = vmax.f32 %v2935, 0.0
  %v2941 = vpack.c.bf16 %v2940, %v2940
  %v2943 = vsel %vm1538, %v2941, 0
  %2945 = vmatprep.subr.bf16.mxu0 0
  %2946 = vmatpush1.bf16.msra.mxu0 0
  %2947 = vmatprep.subr.bf16.mxu0 0
  %2948 = vmatpush1.bf16.msra.mxu0 0
  %2949 = vmatprep.subr.bf16.mxu0 0
  %2950 = vmatpush1.bf16.msra.mxu0 0
  %2951 = vmatprep.subr.bf16.mxu0 0
  %2952 = vmatpush1.bf16.msra.mxu0 0
  %2953 = vmatprep.subr.bf16.mxu0 0
  %2954 = vmatpush1.bf16.msra.mxu0 %v1533
  %2955 = vmatprep.subr.bf16.mxu0 0
  %2956 = vmatpush1.bf16.msra.mxu0 %v1532
  %2957 = vmatprep.subr.bf16.mxu0 0
  %2958 = vmatpush1.bf16.msra.mxu0 %v1531
  %2959 = vmatprep.subr.bf16.mxu0 0
  %2960 = vmatpush1.bf16.msra.mxu0 %v1530
  %2961 = vmatprep.subr.bf16.mxu0 0
  %2962 = vmatpush2.bf16.msra.mxu0 0
  %2963 = vmatprep.subr.bf16.mxu0 0
  %2964 = vmatpush2.bf16.msra.mxu0 0
  %2965 = vmatprep.subr.bf16.mxu0 0
  %2966 = vmatpush2.bf16.msra.mxu0 0
  %2967 = vmatprep.subr.bf16.mxu0 0
  %2968 = vmatpush2.bf16.msra.mxu0 0
  %2969 = vmatprep.subr.bf16.mxu0 0
  %2970 = vmatpush2.bf16.msra.mxu0 0
  %2971 = vmatprep.subr.bf16.mxu0 0
  %2972 = vmatpush2.bf16.msra.mxu0 0
  %2973 = vmatprep.subr.bf16.mxu0 0
  %2974 = vmatpush2.bf16.msra.mxu0 0
  %2975 = vmatprep.subr.bf16.mxu0 0
  %2976 = vmatpush2.bf16.msra.mxu0 0
  %2977 = vmatprep.mubr.bf16.mxu0 0
  %2978 = vmatmul.mubr.bf16.gmra.mxu0 %v2943
  %v2979 = vpop.f32.mrf.mxu0
  %v2980 = vadd.f32 %v1512, %v2979
  %v2981 = vpop.f32.mrf.mxu0
  %v2982 = vpop.f32.mrf.mxu0
  %v2983 = vpop.f32.mrf.mxu0
  %2984 = vdwg.mxu0
  %2986 = vrot.lane.b32.xlu0 %v2980, 32
  %v2987 = vpop.permute.xlu0 %2986
  %v2989 = vadd.f32 %v2892, %v2987
  %2991 = vrot.lane.b32.xlu0 %v2989, 96
  %v2992 = vpop.permute.xlu0 %2991
  %v2994 = vsel %vm126, %v2992, 0.0
  %2995 = vadd.xlane.f32.xlu0 %v2994
  %v2996 = vpop.xlane.xlu0 %2995
  %v2997 = vmul.f32 %v2996, %v732
  %v2998 = vsub.f32 %v2989, %v2997
  %v2999 = vmul.f32 %v2998, %v2998
  %3001 = vrot.lane.b32.xlu0 %v2999, 96
  %v3002 = vpop.permute.xlu0 %3001
  %v3004 = vsel %vm126, %v3002, 0.0
  %3005 = vadd.xlane.f32.xlu0 %v3004
  %v3006 = vpop.xlane.xlu0 %3005
  %v3007 = vmul.f32 %v3006, %v732
  %v3008 = vadd.f32 %v3007, 1e-05
  %v3009 = vrsqrt.pop %v3008
  %v3010 = vmul.f32 %v2998, %v3009
  %3012 = vrot.lane.b32.xlu0 %v1599, 32
  %v3013 = vpop.permute.xlu0 %3012
  %v3015 = vmul.f32 %v3010, %v3013
  %3017 = vrot.lane.b32.xlu0 %v1604, 32
  %v3018 = vpop.permute.xlu0 %3017
  %v3020 = vadd.f32 %v3015, %v3018
  %vm3021 = vcmask 523520
  %3022 = vst.msk [vmem:[%s13] sm:$0xff] %vm3021, %v3020
  // Predicated region
  $region54: #{transformer_decoder_layer.1} parent=0 // pred_check
    _
  $region55: #{transformer_decoder_layer.1} parent=0 // pred_check_branch
    %3024 = sbr.rel (0) target = $region57
  $region56: #{transformer_decoder_layer.1} parent=0 // pred_region
    _
  $region57: #{transformer_decoder_layer.1} parent=0 // pred_fallthru
    _
  // Predicated region
  $region58: #{transformer_decoder_layer.1} parent=0 // pred_check
    _
  $region59: #{transformer_decoder_layer.1} parent=0 // pred_check_branch
    %3026 = sbr.rel (0) target = $region61
  $region60: #{transformer_decoder_layer.1} parent=0 // pred_region
    _
  $region61: #{transformer_decoder_layer.1} parent=0 // pred_fallthru
    _

</llo_original>
